<compile_context>
chip_gen: v5e
topology: v5e:2x2
jax: 0.10.0
libtpu: 0.0.40
codegen_flags: <defaults>
</compile_context>

<pallas_src>
import functools

import jax
import jax.numpy as jnp
from jax.experimental import pallas as pl
from jax.experimental.pallas import tpu as pltpu

_SQRT_2_OVER_PI = 0.7978845608028654
_LN_EPS = 1e-6
_HALO = 3  # kernel_size=7, padding=3


def _gelu_tanh(x):
    return 0.5 * x * (1.0 + jnp.tanh(_SQRT_2_OVER_PI * (x + 0.044715 * (x * x * x))))


def _cx_block_kernel(win_ref, wdw_ref, bdw_ref, w1_ref, b1_ref, w2_ref, b2_ref,
                     o_ref, *, th, w):
    """One (batch, row-tile) step: dwconv7x7 + LN + MLP + residual on a (C, th*W) slab."""
    core = th * w                           # output slab width (multiple of 128)
    lw = win_ref.shape[-1]                  # haloed window width, padded to 128-multiple

    xw = win_ref[0, 0].astype(jnp.float32)  # (C, LW) row-haloed, zero-padded window
    wdw = wdw_ref[...].astype(jnp.float32)  # (C, 49) depthwise taps, row-major (ky, kx)

    # Column-validity masks depend only on dx (row offsets are always valid thanks to
    # the halo rows, which hold zeros outside the image -> exact zero padding).
    col = jax.lax.broadcasted_iota(jnp.int32, (1, core), 1) % w
    col_ok = {dx: (col + dx >= 0) & (col + dx < w) for dx in (-3, -2, -1, 1, 2, 3)}

    # ---- depthwise 7x7 conv: 7 partial accumulators (one per dx) for VALU ILP ----
    # Core output p=(i, j) with tap (ky, kx) reads window index p + ky*W + (kx-3).
    x_core = None
    parts = []
    for kx in range(7):
        dx = kx - 3
        acc = None
        for ky in range(7):
            s = ky * w + dx
            shifted = xw if s == 0 else pltpu.roll(xw, shift=(-s) % lw, axis=1)
            src = shifted[:, :core]                    # lane-aligned static slice
            if ky == 3 and dx == 0:
                x_core = src                           # center tap == residual input
            tap = wdw[:, ky * 7 + kx:ky * 7 + kx + 1]  # (C, 1) per-channel weight
            term = tap * src
            acc = term if acc is None else acc + term
        if dx != 0:
            acc = jnp.where(col_ok[dx], acc, 0.0)      # one mask per dx, not per tap
        parts.append(acc)
    y = (((parts[0] + parts[1]) + (parts[2] + parts[3]))
         + ((parts[4] + parts[5]) + parts[6]) + bdw_ref[...])      # (C, core)

    # ---- LayerNorm2d over channels (single-pass variance; affine folded into w1/b1) ----
    u = jnp.mean(y, axis=0, keepdims=True)                          # (1, core)
    msq = jnp.mean(y * y, axis=0, keepdims=True)
    var = jnp.maximum(msq - u * u, 0.0)
    yn = (y - u) * jax.lax.rsqrt(var + _LN_EPS)

    # ---- pointwise MLP on the MXU (bf16 operands, f32 accumulation) ----
    h = jnp.dot(w1_ref[...], yn.astype(w1_ref.dtype),
                preferred_element_type=jnp.float32) + b1_ref[...]   # (4C, core)
    g = _gelu_tanh(h)
    z = jnp.dot(w2_ref[...], g.astype(w2_ref.dtype),
                preferred_element_type=jnp.float32) + b2_ref[...]   # (C, core)

    # gamma (layer scale) already folded into w2/b2; just add the residual.
    o_ref[0] = (x_core + z).astype(o_ref.dtype)                     # lane-dense store


def cx_block(x, params, *, row_tile=None, mxu_dtype=jnp.bfloat16):
    """x: NCHW (B, C, H, W) -> NCHW (B, C, H, W). Fused CXBlock forward."""
    B, C, H, W = x.shape
    th = H if row_tile is None else row_tile
    assert H % th == 0, "row_tile must divide H"
    core = th * W
    assert core % 128 == 0, "row_tile * W must be a multiple of 128 (lane-dense blocks)"
    R = H // th
    lw_valid = (th + 2 * _HALO) * W
    lw = ((lw_valid + 127) // 128) * 128

    wdw, bdw, ln_w, ln_b, w1, b1, w2, b2, gamma = params
    C4 = w1.shape[0]
    hi = jax.lax.Precision.HIGHEST

    # Fold LayerNorm affine into pwconv1 and layer-scale gamma into pwconv2 (host side).
    w1f = (w1 * ln_w[:, 0][None, :]).astype(mxu_dtype)               # (4C, C)
    b1f = (jnp.matmul(w1, ln_b, precision=hi) + b1).astype(jnp.float32)  # (4C, 1)
    w2f = (gamma * w2).astype(mxu_dtype)                             # (C, 4C)
    b2f = (gamma * b2).astype(jnp.float32)                           # (C, 1)

    # Row-haloed, zero-padded, flattened windows: (B, R, C, LW).  Every Pallas block is
    # then a plain non-overlapping lane-dense block (full auto double-buffered pipeline).
    xp = jnp.pad(x, ((0, 0), (0, 0), (_HALO, _HALO), (0, 0)))
    wins = jnp.stack(
        [xp[:, :, r * th:r * th + th + 2 * _HALO, :].reshape(B, C, lw_valid)
         for r in range(R)], axis=1)
    if lw != lw_valid:
        wins = jnp.pad(wins, ((0, 0), (0, 0), (0, 0), (0, lw - lw_valid)))

    kernel = functools.partial(_cx_block_kernel, th=th, w=W)
    const = lambda b, r: (0, 0)  # weights: constant block index => fetched once, reused

    # VMEM budget from block/temporary sizes, ~2x headroom, clamped to [32, 64] MiB.
    msz = jnp.dtype(mxu_dtype).itemsize
    weight_bytes = (C * 49 + 3 * C + C4) * 4 + 2 * C4 * C * msz
    block_bytes = (C * lw + C * core) * 4
    temp_bytes = (14 * C * core + 3 * C4 * core) * 4
    vmem_limit = int(min(64 * 2**20,
                         max(32 * 2**20,
                             2 * (2 * block_bytes + 2 * weight_bytes + temp_bytes))))

    grid_spec = pltpu.PrefetchScalarGridSpec(
        num_scalar_prefetch=0,
        grid=(B, R),
        in_specs=[
            pl.BlockSpec((1, 1, C, lw), lambda b, r: (b, r, 0, 0)),  # haloed windows
            pl.BlockSpec((C, 49), const),                            # dwconv weight
            pl.BlockSpec((C, 1), const),                             # dwconv bias
            pl.BlockSpec((C4, C), const),                            # folded pwconv1 w
            pl.BlockSpec((C4, 1), const),                            # folded pwconv1 b
            pl.BlockSpec((C, C4), const),                            # folded pwconv2 w
            pl.BlockSpec((C, 1), const),                             # folded pwconv2 b
        ],
        out_specs=pl.BlockSpec((1, C, core), lambda b, r: (b, 0, r)),
    )

    out = pl.pallas_call(
        kernel,
        out_shape=jax.ShapeDtypeStruct((B, C, H * W), x.dtype),
        grid_spec=grid_spec,
        compiler_params=pltpu.CompilerParams(
            dimension_semantics=("parallel", "parallel"),
            vmem_limit_bytes=vmem_limit),
    )(wins, wdw, bdw, w1f, b1f, w2f, b2f)

    return out.reshape(B, C, H, W)


def init_params(key, dim):
    """Deterministic synthetic CXBlock params (kernel-friendly shapes)."""
    C = dim
    ks = jax.random.split(key, 9)
    wdw = jax.random.normal(ks[0], (C, 49), jnp.float32) * 0.1          # dwconv (C, 7*7)
    bdw = jax.random.normal(ks[1], (C, 1), jnp.float32) * 0.1
    ln_w = 1.0 + 0.1 * jax.random.normal(ks[2], (C, 1), jnp.float32)
    ln_b = 0.1 * jax.random.normal(ks[3], (C, 1), jnp.float32)
    w1 = jax.random.normal(ks[4], (4 * C, C), jnp.float32) / jnp.sqrt(C)       # Linear C->4C
    b1 = jax.random.normal(ks[5], (4 * C, 1), jnp.float32) * 0.1
    w2 = jax.random.normal(ks[6], (C, 4 * C), jnp.float32) / jnp.sqrt(4 * C)   # Linear 4C->C
    b2 = jax.random.normal(ks[7], (C, 1), jnp.float32) * 0.1
    # Module inits gamma to 1e-6; use a non-trivial learned-like value so the test
    # actually exercises the MLP branch instead of being dominated by the residual.
    gamma = 0.5 + 0.1 * jax.random.normal(ks[8], (C, 1), jnp.float32)
    return (wdw, bdw, ln_w, ln_b, w1, b1, w2, b2, gamma)


def cx_block_ref(x, params):
    """Pure-JAX reference mirroring the PyTorch CXBlock forward (NCHW semantics)."""
    wdw, bdw, ln_w, ln_b, w1, b1, w2, b2, gamma = params
    B, C, H, W = x.shape
    hi = jax.lax.Precision.HIGHEST

    # Depthwise 7x7 conv, padding 3 (explicit shifted-tap form; exact, no MXU rounding).
    xp = jnp.pad(x, ((0, 0), (0, 0), (3, 3), (3, 3)))
    y = jnp.zeros_like(x)
    for ky in range(7):
        for kx in range(7):
            y = y + wdw[:, ky * 7 + kx][None, :, None, None] * xp[:, :, ky:ky + H, kx:kx + W]
    y = y + bdw[:, 0][None, :, None, None]

    # LayerNorm2d over channels (two-pass).
    u = jnp.mean(y, axis=1, keepdims=True)
    s = jnp.mean((y - u) ** 2, axis=1, keepdims=True)
    yn = (y - u) / jnp.sqrt(s + _LN_EPS)
    yn = ln_w[:, 0][None, :, None, None] * yn + ln_b[:, 0][None, :, None, None]

    # Pointwise MLP + GELU + layer scale + residual.
    h = jnp.einsum("bchw,dc->bdhw", yn, w1, precision=hi) + b1[:, 0][None, :, None, None]
    h = _gelu_tanh(h)
    z = jnp.einsum("bdhw,cd->bchw", h, w2, precision=hi) + b2[:, 0][None, :, None, None]
    z = gamma[:, 0][None, :, None, None] * z
    return x + z


if __name__ == "__main__":
    B, C, H, W = 2, 32, 16, 16          # dim=32 -> hidden 4*dim=128
    TH = 8                              # row tile: grid (B, H/TH) = (2, 2); core = 8*16 = 128

    key = jax.random.PRNGKey(0)
    kx, kp = jax.random.split(key)
    x = jax.random.normal(kx, (B, C, H, W), jnp.float32)
    params = init_params(kp, C)

    ref = jax.block_until_ready(cx_block_ref(x, params))

    # f32-MXU path: tight check of the fused/tiled/folded kernel structure.
    out_f32 = jax.block_until_ready(cx_block(x, params, row_tile=TH, mxu_dtype=jnp.float32))
    assert out_f32.shape == (B, C, H, W)
    assert jnp.allclose(out_f32, ref, atol=2e-3, rtol=2e-3)

    # bf16-MXU path (shipped perf configuration): looser tolerance for bf16 rounding.
    out_bf16 = jax.block_until_ready(cx_block(x, params, row_tile=TH, mxu_dtype=jnp.bfloat16))
    assert out_bf16.shape == (B, C, H, W)
    assert jnp.allclose(out_bf16, ref, atol=2e-2, rtol=2e-2)

    print("KERNEL_OK")
</pallas_src>

<mosaic_0001>
module attributes {stable_mosaic.version = 11 : i64} {
  func.func @_cx_block_kernel(%arg0: i32, %arg1: i32, %arg2: memref<1x1x32x256xf32, #tpu.memory_space<vmem>>, %arg3: memref<32x49xf32, #tpu.memory_space<vmem>>, %arg4: memref<32x1xf32, #tpu.memory_space<vmem>>, %arg5: memref<128x32xf32, #tpu.memory_space<vmem>>, %arg6: memref<128x1xf32, #tpu.memory_space<vmem>>, %arg7: memref<32x128xf32, #tpu.memory_space<vmem>>, %arg8: memref<32x1xf32, #tpu.memory_space<vmem>>, %arg9: memref<1x32x128xf32, #tpu.memory_space<vmem>>) attributes {dimension_semantics = [#tpu.dimension_semantics<parallel>, #tpu.dimension_semantics<parallel>], iteration_bounds = array<i64: 2, 2>, scalar_prefetch = 0 : i64, scratch_operands = 0 : i64, tpu.core_type = #tpu.core_type<tc>, window_params = [{transform_indices = @transform_0, window_bounds = array<i64: 1, 1, 32, 256>}, {pipeline_mode = #tpu.pipeline_mode<synchronous>, transform_indices = @transform_1, window_bounds = array<i64: 32, 49>}, {pipeline_mode = #tpu.pipeline_mode<synchronous>, transform_indices = @transform_2, window_bounds = array<i64: 32, 1>}, {pipeline_mode = #tpu.pipeline_mode<synchronous>, transform_indices = @transform_3, window_bounds = array<i64: 128, 32>}, {pipeline_mode = #tpu.pipeline_mode<synchronous>, transform_indices = @transform_4, window_bounds = array<i64: 128, 1>}, {pipeline_mode = #tpu.pipeline_mode<synchronous>, transform_indices = @transform_5, window_bounds = array<i64: 32, 128>}, {pipeline_mode = #tpu.pipeline_mode<synchronous>, transform_indices = @transform_6, window_bounds = array<i64: 32, 1>}, {transform_indices = @transform_7, window_bounds = array<i64: 1, 32, 128>}]} {
    %c0 = arith.constant 0 : index
    %c0_0 = arith.constant 0 : index
    %c0_1 = arith.constant 0 : index
    %c0_2 = arith.constant 0 : index
    %0 = vector.load %arg2[%c0, %c0_0, %c0_1, %c0_2] : memref<1x1x32x256xf32, #tpu.memory_space<vmem>>, vector<1x1x32x256xf32>
    %1 = vector.shape_cast %0 : vector<1x1x32x256xf32> to vector<32x256xf32>
    %c0_3 = arith.constant 0 : index
    %c0_4 = arith.constant 0 : index
    %2 = vector.load %arg3[%c0_3, %c0_4] : memref<32x49xf32, #tpu.memory_space<vmem>>, vector<32x49xf32>
    %3 = tpu.iota {dimensions = array<i32: 1>} : vector<1x128xi32>
    %c16_i32 = arith.constant 16 : i32
    %c0_i32 = arith.constant 0 : i32
    %4 = arith.cmpi eq, %c16_i32, %c0_i32 : i32
    %c1_i32 = arith.constant 1 : i32
    %5 = arith.select %4, %c1_i32, %c16_i32 : i32
    %6 = vector.broadcast %5 : i32 to vector<1x128xi32>
    %7 = arith.remsi %3, %6 : vector<1x128xi32>
    %c0_i32_5 = arith.constant 0 : i32
    %8 = vector.broadcast %c0_i32_5 : i32 to vector<1x128xi32>
    %9 = arith.cmpi ne, %7, %8 : vector<1x128xi32>
    %c0_i32_6 = arith.constant 0 : i32
    %10 = vector.broadcast %c0_i32_6 : i32 to vector<1x128xi32>
    %11 = arith.cmpi slt, %7, %10 : vector<1x128xi32>
    %c0_i32_7 = arith.constant 0 : i32
    %12 = arith.cmpi slt, %5, %c0_i32_7 : i32
    %13 = vector.broadcast %12 : i1 to vector<1x128xi1>
    %14 = vector.broadcast %13 : vector<1x128xi1> to vector<1x128xi1>
    %15 = arith.xori %11, %14 : vector<1x128xi1>
    %16 = arith.andi %15, %9 : vector<1x128xi1>
    %17 = vector.broadcast %5 : i32 to vector<1x128xi32>
    %18 = arith.addi %7, %17 : vector<1x128xi32>
    %19 = arith.select %16, %18, %7 : vector<1x128xi1>, vector<1x128xi32>
    %c-3_i32 = arith.constant -3 : i32
    %20 = vector.broadcast %c-3_i32 : i32 to vector<1x128xi32>
    %21 = arith.addi %19, %20 : vector<1x128xi32>
    %c0_i32_8 = arith.constant 0 : i32
    %22 = vector.broadcast %c0_i32_8 : i32 to vector<1x128xi32>
    %23 = arith.cmpi sge, %21, %22 : vector<1x128xi32>
    %c-3_i32_9 = arith.constant -3 : i32
    %24 = vector.broadcast %c-3_i32_9 : i32 to vector<1x128xi32>
    %25 = arith.addi %19, %24 : vector<1x128xi32>
    %c16_i32_10 = arith.constant 16 : i32
    %26 = vector.broadcast %c16_i32_10 : i32 to vector<1x128xi32>
    %27 = arith.cmpi slt, %25, %26 : vector<1x128xi32>
    %28 = arith.andi %23, %27 : vector<1x128xi1>
    %c-2_i32 = arith.constant -2 : i32
    %29 = vector.broadcast %c-2_i32 : i32 to vector<1x128xi32>
    %30 = arith.addi %19, %29 : vector<1x128xi32>
    %c0_i32_11 = arith.constant 0 : i32
    %31 = vector.broadcast %c0_i32_11 : i32 to vector<1x128xi32>
    %32 = arith.cmpi sge, %30, %31 : vector<1x128xi32>
    %c-2_i32_12 = arith.constant -2 : i32
    %33 = vector.broadcast %c-2_i32_12 : i32 to vector<1x128xi32>
    %34 = arith.addi %19, %33 : vector<1x128xi32>
    %c16_i32_13 = arith.constant 16 : i32
    %35 = vector.broadcast %c16_i32_13 : i32 to vector<1x128xi32>
    %36 = arith.cmpi slt, %34, %35 : vector<1x128xi32>
    %37 = arith.andi %32, %36 : vector<1x128xi1>
    %c-1_i32 = arith.constant -1 : i32
    %38 = vector.broadcast %c-1_i32 : i32 to vector<1x128xi32>
    %39 = arith.addi %19, %38 : vector<1x128xi32>
    %c0_i32_14 = arith.constant 0 : i32
    %40 = vector.broadcast %c0_i32_14 : i32 to vector<1x128xi32>
    %41 = arith.cmpi sge, %39, %40 : vector<1x128xi32>
    %c-1_i32_15 = arith.constant -1 : i32
    %42 = vector.broadcast %c-1_i32_15 : i32 to vector<1x128xi32>
    %43 = arith.addi %19, %42 : vector<1x128xi32>
    %c16_i32_16 = arith.constant 16 : i32
    %44 = vector.broadcast %c16_i32_16 : i32 to vector<1x128xi32>
    %45 = arith.cmpi slt, %43, %44 : vector<1x128xi32>
    %46 = arith.andi %41, %45 : vector<1x128xi1>
    %c1_i32_17 = arith.constant 1 : i32
    %47 = vector.broadcast %c1_i32_17 : i32 to vector<1x128xi32>
    %48 = arith.addi %19, %47 : vector<1x128xi32>
    %c0_i32_18 = arith.constant 0 : i32
    %49 = vector.broadcast %c0_i32_18 : i32 to vector<1x128xi32>
    %50 = arith.cmpi sge, %48, %49 : vector<1x128xi32>
    %c1_i32_19 = arith.constant 1 : i32
    %51 = vector.broadcast %c1_i32_19 : i32 to vector<1x128xi32>
    %52 = arith.addi %19, %51 : vector<1x128xi32>
    %c16_i32_20 = arith.constant 16 : i32
    %53 = vector.broadcast %c16_i32_20 : i32 to vector<1x128xi32>
    %54 = arith.cmpi slt, %52, %53 : vector<1x128xi32>
    %55 = arith.andi %50, %54 : vector<1x128xi1>
    %c2_i32 = arith.constant 2 : i32
    %56 = vector.broadcast %c2_i32 : i32 to vector<1x128xi32>
    %57 = arith.addi %19, %56 : vector<1x128xi32>
    %c0_i32_21 = arith.constant 0 : i32
    %58 = vector.broadcast %c0_i32_21 : i32 to vector<1x128xi32>
    %59 = arith.cmpi sge, %57, %58 : vector<1x128xi32>
    %c2_i32_22 = arith.constant 2 : i32
    %60 = vector.broadcast %c2_i32_22 : i32 to vector<1x128xi32>
    %61 = arith.addi %19, %60 : vector<1x128xi32>
    %c16_i32_23 = arith.constant 16 : i32
    %62 = vector.broadcast %c16_i32_23 : i32 to vector<1x128xi32>
    %63 = arith.cmpi slt, %61, %62 : vector<1x128xi32>
    %64 = arith.andi %59, %63 : vector<1x128xi1>
    %c3_i32 = arith.constant 3 : i32
    %65 = vector.broadcast %c3_i32 : i32 to vector<1x128xi32>
    %66 = arith.addi %19, %65 : vector<1x128xi32>
    %c0_i32_24 = arith.constant 0 : i32
    %67 = vector.broadcast %c0_i32_24 : i32 to vector<1x128xi32>
    %68 = arith.cmpi sge, %66, %67 : vector<1x128xi32>
    %c3_i32_25 = arith.constant 3 : i32
    %69 = vector.broadcast %c3_i32_25 : i32 to vector<1x128xi32>
    %70 = arith.addi %19, %69 : vector<1x128xi32>
    %c16_i32_26 = arith.constant 16 : i32
    %71 = vector.broadcast %c16_i32_26 : i32 to vector<1x128xi32>
    %72 = arith.cmpi slt, %70, %71 : vector<1x128xi32>
    %73 = arith.andi %68, %72 : vector<1x128xi1>
    %c3_i32_27 = arith.constant 3 : i32
    %74 = tpu.dynamic_rotate %1 by %c3_i32_27 dim 1 : vector<32x256xf32>, i32 -> vector<32x256xf32>
    %75 = vector.extract_strided_slice %74 {offsets = [0, 0], sizes = [32, 128], strides = [1, 1]} : vector<32x256xf32> to vector<32x128xf32>
    %76 = vector.extract_strided_slice %2 {offsets = [0, 0], sizes = [32, 1], strides = [1, 1]} : vector<32x49xf32> to vector<32x1xf32>
    %77 = vector.broadcast %76 : vector<32x1xf32> to vector<32x128xf32>
    %78 = arith.mulf %77, %75 : vector<32x128xf32>
    %c243_i32 = arith.constant 243 : i32
    %79 = tpu.dynamic_rotate %1 by %c243_i32 dim 1 : vector<32x256xf32>, i32 -> vector<32x256xf32>
    %80 = vector.extract_strided_slice %79 {offsets = [0, 0], sizes = [32, 128], strides = [1, 1]} : vector<32x256xf32> to vector<32x128xf32>
    %81 = vector.extract_strided_slice %2 {offsets = [0, 7], sizes = [32, 1], strides = [1, 1]} : vector<32x49xf32> to vector<32x1xf32>
    %82 = vector.broadcast %81 : vector<32x1xf32> to vector<32x128xf32>
    %83 = arith.mulf %82, %80 : vector<32x128xf32>
    %84 = arith.addf %78, %83 : vector<32x128xf32>
    %c227_i32 = arith.constant 227 : i32
    %85 = tpu.dynamic_rotate %1 by %c227_i32 dim 1 : vector<32x256xf32>, i32 -> vector<32x256xf32>
    %86 = vector.extract_strided_slice %85 {offsets = [0, 0], sizes = [32, 128], strides = [1, 1]} : vector<32x256xf32> to vector<32x128xf32>
    %87 = vector.extract_strided_slice %2 {offsets = [0, 14], sizes = [32, 1], strides = [1, 1]} : vector<32x49xf32> to vector<32x1xf32>
    %88 = vector.broadcast %87 : vector<32x1xf32> to vector<32x128xf32>
    %89 = arith.mulf %88, %86 : vector<32x128xf32>
    %90 = arith.addf %84, %89 : vector<32x128xf32>
    %c211_i32 = arith.constant 211 : i32
    %91 = tpu.dynamic_rotate %1 by %c211_i32 dim 1 : vector<32x256xf32>, i32 -> vector<32x256xf32>
    %92 = vector.extract_strided_slice %91 {offsets = [0, 0], sizes = [32, 128], strides = [1, 1]} : vector<32x256xf32> to vector<32x128xf32>
    %93 = vector.extract_strided_slice %2 {offsets = [0, 21], sizes = [32, 1], strides = [1, 1]} : vector<32x49xf32> to vector<32x1xf32>
    %94 = vector.broadcast %93 : vector<32x1xf32> to vector<32x128xf32>
    %95 = arith.mulf %94, %92 : vector<32x128xf32>
    %96 = arith.addf %90, %95 : vector<32x128xf32>
    %c195_i32 = arith.constant 195 : i32
    %97 = tpu.dynamic_rotate %1 by %c195_i32 dim 1 : vector<32x256xf32>, i32 -> vector<32x256xf32>
    %98 = vector.extract_strided_slice %97 {offsets = [0, 0], sizes = [32, 128], strides = [1, 1]} : vector<32x256xf32> to vector<32x128xf32>
    %99 = vector.extract_strided_slice %2 {offsets = [0, 28], sizes = [32, 1], strides = [1, 1]} : vector<32x49xf32> to vector<32x1xf32>
    %100 = vector.broadcast %99 : vector<32x1xf32> to vector<32x128xf32>
    %101 = arith.mulf %100, %98 : vector<32x128xf32>
    %102 = arith.addf %96, %101 : vector<32x128xf32>
    %c179_i32 = arith.constant 179 : i32
    %103 = tpu.dynamic_rotate %1 by %c179_i32 dim 1 : vector<32x256xf32>, i32 -> vector<32x256xf32>
    %104 = vector.extract_strided_slice %103 {offsets = [0, 0], sizes = [32, 128], strides = [1, 1]} : vector<32x256xf32> to vector<32x128xf32>
    %105 = vector.extract_strided_slice %2 {offsets = [0, 35], sizes = [32, 1], strides = [1, 1]} : vector<32x49xf32> to vector<32x1xf32>
    %106 = vector.broadcast %105 : vector<32x1xf32> to vector<32x128xf32>
    %107 = arith.mulf %106, %104 : vector<32x128xf32>
    %108 = arith.addf %102, %107 : vector<32x128xf32>
    %c163_i32 = arith.constant 163 : i32
    %109 = tpu.dynamic_rotate %1 by %c163_i32 dim 1 : vector<32x256xf32>, i32 -> vector<32x256xf32>
    %110 = vector.extract_strided_slice %109 {offsets = [0, 0], sizes = [32, 128], strides = [1, 1]} : vector<32x256xf32> to vector<32x128xf32>
    %111 = vector.extract_strided_slice %2 {offsets = [0, 42], sizes = [32, 1], strides = [1, 1]} : vector<32x49xf32> to vector<32x1xf32>
    %112 = vector.broadcast %111 : vector<32x1xf32> to vector<32x128xf32>
    %113 = arith.mulf %112, %110 : vector<32x128xf32>
    %114 = arith.addf %108, %113 : vector<32x128xf32>
    %cst = arith.constant 0.000000e+00 : f32
    %115 = vector.shape_cast %28 : vector<1x128xi1> to vector<1x128xi1>
    %116 = vector.broadcast %115 : vector<1x128xi1> to vector<32x128xi1>
    %117 = vector.broadcast %cst : f32 to vector<32x128xf32>
    %118 = arith.select %116, %114, %117 : vector<32x128xi1>, vector<32x128xf32>
    %c2_i32_28 = arith.constant 2 : i32
    %119 = tpu.dynamic_rotate %1 by %c2_i32_28 dim 1 : vector<32x256xf32>, i32 -> vector<32x256xf32>
    %120 = vector.extract_strided_slice %119 {offsets = [0, 0], sizes = [32, 128], strides = [1, 1]} : vector<32x256xf32> to vector<32x128xf32>
    %121 = vector.extract_strided_slice %2 {offsets = [0, 1], sizes = [32, 1], strides = [1, 1]} : vector<32x49xf32> to vector<32x1xf32>
    %122 = vector.broadcast %121 : vector<32x1xf32> to vector<32x128xf32>
    %123 = arith.mulf %122, %120 : vector<32x128xf32>
    %c242_i32 = arith.constant 242 : i32
    %124 = tpu.dynamic_rotate %1 by %c242_i32 dim 1 : vector<32x256xf32>, i32 -> vector<32x256xf32>
    %125 = vector.extract_strided_slice %124 {offsets = [0, 0], sizes = [32, 128], strides = [1, 1]} : vector<32x256xf32> to vector<32x128xf32>
    %126 = vector.extract_strided_slice %2 {offsets = [0, 8], sizes = [32, 1], strides = [1, 1]} : vector<32x49xf32> to vector<32x1xf32>
    %127 = vector.broadcast %126 : vector<32x1xf32> to vector<32x128xf32>
    %128 = arith.mulf %127, %125 : vector<32x128xf32>
    %129 = arith.addf %123, %128 : vector<32x128xf32>
    %c226_i32 = arith.constant 226 : i32
    %130 = tpu.dynamic_rotate %1 by %c226_i32 dim 1 : vector<32x256xf32>, i32 -> vector<32x256xf32>
    %131 = vector.extract_strided_slice %130 {offsets = [0, 0], sizes = [32, 128], strides = [1, 1]} : vector<32x256xf32> to vector<32x128xf32>
    %132 = vector.extract_strided_slice %2 {offsets = [0, 15], sizes = [32, 1], strides = [1, 1]} : vector<32x49xf32> to vector<32x1xf32>
    %133 = vector.broadcast %132 : vector<32x1xf32> to vector<32x128xf32>
    %134 = arith.mulf %133, %131 : vector<32x128xf32>
    %135 = arith.addf %129, %134 : vector<32x128xf32>
    %c210_i32 = arith.constant 210 : i32
    %136 = tpu.dynamic_rotate %1 by %c210_i32 dim 1 : vector<32x256xf32>, i32 -> vector<32x256xf32>
    %137 = vector.extract_strided_slice %136 {offsets = [0, 0], sizes = [32, 128], strides = [1, 1]} : vector<32x256xf32> to vector<32x128xf32>
    %138 = vector.extract_strided_slice %2 {offsets = [0, 22], sizes = [32, 1], strides = [1, 1]} : vector<32x49xf32> to vector<32x1xf32>
    %139 = vector.broadcast %138 : vector<32x1xf32> to vector<32x128xf32>
    %140 = arith.mulf %139, %137 : vector<32x128xf32>
    %141 = arith.addf %135, %140 : vector<32x128xf32>
    %c194_i32 = arith.constant 194 : i32
    %142 = tpu.dynamic_rotate %1 by %c194_i32 dim 1 : vector<32x256xf32>, i32 -> vector<32x256xf32>
    %143 = vector.extract_strided_slice %142 {offsets = [0, 0], sizes = [32, 128], strides = [1, 1]} : vector<32x256xf32> to vector<32x128xf32>
    %144 = vector.extract_strided_slice %2 {offsets = [0, 29], sizes = [32, 1], strides = [1, 1]} : vector<32x49xf32> to vector<32x1xf32>
    %145 = vector.broadcast %144 : vector<32x1xf32> to vector<32x128xf32>
    %146 = arith.mulf %145, %143 : vector<32x128xf32>
    %147 = arith.addf %141, %146 : vector<32x128xf32>
    %c178_i32 = arith.constant 178 : i32
    %148 = tpu.dynamic_rotate %1 by %c178_i32 dim 1 : vector<32x256xf32>, i32 -> vector<32x256xf32>
    %149 = vector.extract_strided_slice %148 {offsets = [0, 0], sizes = [32, 128], strides = [1, 1]} : vector<32x256xf32> to vector<32x128xf32>
    %150 = vector.extract_strided_slice %2 {offsets = [0, 36], sizes = [32, 1], strides = [1, 1]} : vector<32x49xf32> to vector<32x1xf32>
    %151 = vector.broadcast %150 : vector<32x1xf32> to vector<32x128xf32>
    %152 = arith.mulf %151, %149 : vector<32x128xf32>
    %153 = arith.addf %147, %152 : vector<32x128xf32>
    %c162_i32 = arith.constant 162 : i32
    %154 = tpu.dynamic_rotate %1 by %c162_i32 dim 1 : vector<32x256xf32>, i32 -> vector<32x256xf32>
    %155 = vector.extract_strided_slice %154 {offsets = [0, 0], sizes = [32, 128], strides = [1, 1]} : vector<32x256xf32> to vector<32x128xf32>
    %156 = vector.extract_strided_slice %2 {offsets = [0, 43], sizes = [32, 1], strides = [1, 1]} : vector<32x49xf32> to vector<32x1xf32>
    %157 = vector.broadcast %156 : vector<32x1xf32> to vector<32x128xf32>
    %158 = arith.mulf %157, %155 : vector<32x128xf32>
    %159 = arith.addf %153, %158 : vector<32x128xf32>
    %cst_29 = arith.constant 0.000000e+00 : f32
    %160 = vector.shape_cast %37 : vector<1x128xi1> to vector<1x128xi1>
    %161 = vector.broadcast %160 : vector<1x128xi1> to vector<32x128xi1>
    %162 = vector.broadcast %cst_29 : f32 to vector<32x128xf32>
    %163 = arith.select %161, %159, %162 : vector<32x128xi1>, vector<32x128xf32>
    %c1_i32_30 = arith.constant 1 : i32
    %164 = tpu.dynamic_rotate %1 by %c1_i32_30 dim 1 : vector<32x256xf32>, i32 -> vector<32x256xf32>
    %165 = vector.extract_strided_slice %164 {offsets = [0, 0], sizes = [32, 128], strides = [1, 1]} : vector<32x256xf32> to vector<32x128xf32>
    %166 = vector.extract_strided_slice %2 {offsets = [0, 2], sizes = [32, 1], strides = [1, 1]} : vector<32x49xf32> to vector<32x1xf32>
    %167 = vector.broadcast %166 : vector<32x1xf32> to vector<32x128xf32>
    %168 = arith.mulf %167, %165 : vector<32x128xf32>
    %c241_i32 = arith.constant 241 : i32
    %169 = tpu.dynamic_rotate %1 by %c241_i32 dim 1 : vector<32x256xf32>, i32 -> vector<32x256xf32>
    %170 = vector.extract_strided_slice %169 {offsets = [0, 0], sizes = [32, 128], strides = [1, 1]} : vector<32x256xf32> to vector<32x128xf32>
    %171 = vector.extract_strided_slice %2 {offsets = [0, 9], sizes = [32, 1], strides = [1, 1]} : vector<32x49xf32> to vector<32x1xf32>
    %172 = vector.broadcast %171 : vector<32x1xf32> to vector<32x128xf32>
    %173 = arith.mulf %172, %170 : vector<32x128xf32>
    %174 = arith.addf %168, %173 : vector<32x128xf32>
    %c225_i32 = arith.constant 225 : i32
    %175 = tpu.dynamic_rotate %1 by %c225_i32 dim 1 : vector<32x256xf32>, i32 -> vector<32x256xf32>
    %176 = vector.extract_strided_slice %175 {offsets = [0, 0], sizes = [32, 128], strides = [1, 1]} : vector<32x256xf32> to vector<32x128xf32>
    %177 = vector.extract_strided_slice %2 {offsets = [0, 16], sizes = [32, 1], strides = [1, 1]} : vector<32x49xf32> to vector<32x1xf32>
    %178 = vector.broadcast %177 : vector<32x1xf32> to vector<32x128xf32>
    %179 = arith.mulf %178, %176 : vector<32x128xf32>
    %180 = arith.addf %174, %179 : vector<32x128xf32>
    %c209_i32 = arith.constant 209 : i32
    %181 = tpu.dynamic_rotate %1 by %c209_i32 dim 1 : vector<32x256xf32>, i32 -> vector<32x256xf32>
    %182 = vector.extract_strided_slice %181 {offsets = [0, 0], sizes = [32, 128], strides = [1, 1]} : vector<32x256xf32> to vector<32x128xf32>
    %183 = vector.extract_strided_slice %2 {offsets = [0, 23], sizes = [32, 1], strides = [1, 1]} : vector<32x49xf32> to vector<32x1xf32>
    %184 = vector.broadcast %183 : vector<32x1xf32> to vector<32x128xf32>
    %185 = arith.mulf %184, %182 : vector<32x128xf32>
    %186 = arith.addf %180, %185 : vector<32x128xf32>
    %c193_i32 = arith.constant 193 : i32
    %187 = tpu.dynamic_rotate %1 by %c193_i32 dim 1 : vector<32x256xf32>, i32 -> vector<32x256xf32>
    %188 = vector.extract_strided_slice %187 {offsets = [0, 0], sizes = [32, 128], strides = [1, 1]} : vector<32x256xf32> to vector<32x128xf32>
    %189 = vector.extract_strided_slice %2 {offsets = [0, 30], sizes = [32, 1], strides = [1, 1]} : vector<32x49xf32> to vector<32x1xf32>
    %190 = vector.broadcast %189 : vector<32x1xf32> to vector<32x128xf32>
    %191 = arith.mulf %190, %188 : vector<32x128xf32>
    %192 = arith.addf %186, %191 : vector<32x128xf32>
    %c177_i32 = arith.constant 177 : i32
    %193 = tpu.dynamic_rotate %1 by %c177_i32 dim 1 : vector<32x256xf32>, i32 -> vector<32x256xf32>
    %194 = vector.extract_strided_slice %193 {offsets = [0, 0], sizes = [32, 128], strides = [1, 1]} : vector<32x256xf32> to vector<32x128xf32>
    %195 = vector.extract_strided_slice %2 {offsets = [0, 37], sizes = [32, 1], strides = [1, 1]} : vector<32x49xf32> to vector<32x1xf32>
    %196 = vector.broadcast %195 : vector<32x1xf32> to vector<32x128xf32>
    %197 = arith.mulf %196, %194 : vector<32x128xf32>
    %198 = arith.addf %192, %197 : vector<32x128xf32>
    %c161_i32 = arith.constant 161 : i32
    %199 = tpu.dynamic_rotate %1 by %c161_i32 dim 1 : vector<32x256xf32>, i32 -> vector<32x256xf32>
    %200 = vector.extract_strided_slice %199 {offsets = [0, 0], sizes = [32, 128], strides = [1, 1]} : vector<32x256xf32> to vector<32x128xf32>
    %201 = vector.extract_strided_slice %2 {offsets = [0, 44], sizes = [32, 1], strides = [1, 1]} : vector<32x49xf32> to vector<32x1xf32>
    %202 = vector.broadcast %201 : vector<32x1xf32> to vector<32x128xf32>
    %203 = arith.mulf %202, %200 : vector<32x128xf32>
    %204 = arith.addf %198, %203 : vector<32x128xf32>
    %cst_31 = arith.constant 0.000000e+00 : f32
    %205 = vector.shape_cast %46 : vector<1x128xi1> to vector<1x128xi1>
    %206 = vector.broadcast %205 : vector<1x128xi1> to vector<32x128xi1>
    %207 = vector.broadcast %cst_31 : f32 to vector<32x128xf32>
    %208 = arith.select %206, %204, %207 : vector<32x128xi1>, vector<32x128xf32>
    %209 = vector.extract_strided_slice %1 {offsets = [0, 0], sizes = [32, 128], strides = [1, 1]} : vector<32x256xf32> to vector<32x128xf32>
    %210 = vector.extract_strided_slice %2 {offsets = [0, 3], sizes = [32, 1], strides = [1, 1]} : vector<32x49xf32> to vector<32x1xf32>
    %211 = vector.broadcast %210 : vector<32x1xf32> to vector<32x128xf32>
    %212 = arith.mulf %211, %209 : vector<32x128xf32>
    %c240_i32 = arith.constant 240 : i32
    %213 = tpu.dynamic_rotate %1 by %c240_i32 dim 1 : vector<32x256xf32>, i32 -> vector<32x256xf32>
    %214 = vector.extract_strided_slice %213 {offsets = [0, 0], sizes = [32, 128], strides = [1, 1]} : vector<32x256xf32> to vector<32x128xf32>
    %215 = vector.extract_strided_slice %2 {offsets = [0, 10], sizes = [32, 1], strides = [1, 1]} : vector<32x49xf32> to vector<32x1xf32>
    %216 = vector.broadcast %215 : vector<32x1xf32> to vector<32x128xf32>
    %217 = arith.mulf %216, %214 : vector<32x128xf32>
    %218 = arith.addf %212, %217 : vector<32x128xf32>
    %c224_i32 = arith.constant 224 : i32
    %219 = tpu.dynamic_rotate %1 by %c224_i32 dim 1 : vector<32x256xf32>, i32 -> vector<32x256xf32>
    %220 = vector.extract_strided_slice %219 {offsets = [0, 0], sizes = [32, 128], strides = [1, 1]} : vector<32x256xf32> to vector<32x128xf32>
    %221 = vector.extract_strided_slice %2 {offsets = [0, 17], sizes = [32, 1], strides = [1, 1]} : vector<32x49xf32> to vector<32x1xf32>
    %222 = vector.broadcast %221 : vector<32x1xf32> to vector<32x128xf32>
    %223 = arith.mulf %222, %220 : vector<32x128xf32>
    %224 = arith.addf %218, %223 : vector<32x128xf32>
    %c208_i32 = arith.constant 208 : i32
    %225 = tpu.dynamic_rotate %1 by %c208_i32 dim 1 : vector<32x256xf32>, i32 -> vector<32x256xf32>
    %226 = vector.extract_strided_slice %225 {offsets = [0, 0], sizes = [32, 128], strides = [1, 1]} : vector<32x256xf32> to vector<32x128xf32>
    %227 = vector.extract_strided_slice %2 {offsets = [0, 24], sizes = [32, 1], strides = [1, 1]} : vector<32x49xf32> to vector<32x1xf32>
    %228 = vector.broadcast %227 : vector<32x1xf32> to vector<32x128xf32>
    %229 = arith.mulf %228, %226 : vector<32x128xf32>
    %230 = arith.addf %224, %229 : vector<32x128xf32>
    %c192_i32 = arith.constant 192 : i32
    %231 = tpu.dynamic_rotate %1 by %c192_i32 dim 1 : vector<32x256xf32>, i32 -> vector<32x256xf32>
    %232 = vector.extract_strided_slice %231 {offsets = [0, 0], sizes = [32, 128], strides = [1, 1]} : vector<32x256xf32> to vector<32x128xf32>
    %233 = vector.extract_strided_slice %2 {offsets = [0, 31], sizes = [32, 1], strides = [1, 1]} : vector<32x49xf32> to vector<32x1xf32>
    %234 = vector.broadcast %233 : vector<32x1xf32> to vector<32x128xf32>
    %235 = arith.mulf %234, %232 : vector<32x128xf32>
    %236 = arith.addf %230, %235 : vector<32x128xf32>
    %c176_i32 = arith.constant 176 : i32
    %237 = tpu.dynamic_rotate %1 by %c176_i32 dim 1 : vector<32x256xf32>, i32 -> vector<32x256xf32>
    %238 = vector.extract_strided_slice %237 {offsets = [0, 0], sizes = [32, 128], strides = [1, 1]} : vector<32x256xf32> to vector<32x128xf32>
    %239 = vector.extract_strided_slice %2 {offsets = [0, 38], sizes = [32, 1], strides = [1, 1]} : vector<32x49xf32> to vector<32x1xf32>
    %240 = vector.broadcast %239 : vector<32x1xf32> to vector<32x128xf32>
    %241 = arith.mulf %240, %238 : vector<32x128xf32>
    %242 = arith.addf %236, %241 : vector<32x128xf32>
    %c160_i32 = arith.constant 160 : i32
    %243 = tpu.dynamic_rotate %1 by %c160_i32 dim 1 : vector<32x256xf32>, i32 -> vector<32x256xf32>
    %244 = vector.extract_strided_slice %243 {offsets = [0, 0], sizes = [32, 128], strides = [1, 1]} : vector<32x256xf32> to vector<32x128xf32>
    %245 = vector.extract_strided_slice %2 {offsets = [0, 45], sizes = [32, 1], strides = [1, 1]} : vector<32x49xf32> to vector<32x1xf32>
    %246 = vector.broadcast %245 : vector<32x1xf32> to vector<32x128xf32>
    %247 = arith.mulf %246, %244 : vector<32x128xf32>
    %248 = arith.addf %242, %247 : vector<32x128xf32>
    %c255_i32 = arith.constant 255 : i32
    %249 = tpu.dynamic_rotate %1 by %c255_i32 dim 1 : vector<32x256xf32>, i32 -> vector<32x256xf32>
    %250 = vector.extract_strided_slice %249 {offsets = [0, 0], sizes = [32, 128], strides = [1, 1]} : vector<32x256xf32> to vector<32x128xf32>
    %251 = vector.extract_strided_slice %2 {offsets = [0, 4], sizes = [32, 1], strides = [1, 1]} : vector<32x49xf32> to vector<32x1xf32>
    %252 = vector.broadcast %251 : vector<32x1xf32> to vector<32x128xf32>
    %253 = arith.mulf %252, %250 : vector<32x128xf32>
    %c239_i32 = arith.constant 239 : i32
    %254 = tpu.dynamic_rotate %1 by %c239_i32 dim 1 : vector<32x256xf32>, i32 -> vector<32x256xf32>
    %255 = vector.extract_strided_slice %254 {offsets = [0, 0], sizes = [32, 128], strides = [1, 1]} : vector<32x256xf32> to vector<32x128xf32>
    %256 = vector.extract_strided_slice %2 {offsets = [0, 11], sizes = [32, 1], strides = [1, 1]} : vector<32x49xf32> to vector<32x1xf32>
    %257 = vector.broadcast %256 : vector<32x1xf32> to vector<32x128xf32>
    %258 = arith.mulf %257, %255 : vector<32x128xf32>
    %259 = arith.addf %253, %258 : vector<32x128xf32>
    %c223_i32 = arith.constant 223 : i32
    %260 = tpu.dynamic_rotate %1 by %c223_i32 dim 1 : vector<32x256xf32>, i32 -> vector<32x256xf32>
    %261 = vector.extract_strided_slice %260 {offsets = [0, 0], sizes = [32, 128], strides = [1, 1]} : vector<32x256xf32> to vector<32x128xf32>
    %262 = vector.extract_strided_slice %2 {offsets = [0, 18], sizes = [32, 1], strides = [1, 1]} : vector<32x49xf32> to vector<32x1xf32>
    %263 = vector.broadcast %262 : vector<32x1xf32> to vector<32x128xf32>
    %264 = arith.mulf %263, %261 : vector<32x128xf32>
    %265 = arith.addf %259, %264 : vector<32x128xf32>
    %c207_i32 = arith.constant 207 : i32
    %266 = tpu.dynamic_rotate %1 by %c207_i32 dim 1 : vector<32x256xf32>, i32 -> vector<32x256xf32>
    %267 = vector.extract_strided_slice %266 {offsets = [0, 0], sizes = [32, 128], strides = [1, 1]} : vector<32x256xf32> to vector<32x128xf32>
    %268 = vector.extract_strided_slice %2 {offsets = [0, 25], sizes = [32, 1], strides = [1, 1]} : vector<32x49xf32> to vector<32x1xf32>
    %269 = vector.broadcast %268 : vector<32x1xf32> to vector<32x128xf32>
    %270 = arith.mulf %269, %267 : vector<32x128xf32>
    %271 = arith.addf %265, %270 : vector<32x128xf32>
    %c191_i32 = arith.constant 191 : i32
    %272 = tpu.dynamic_rotate %1 by %c191_i32 dim 1 : vector<32x256xf32>, i32 -> vector<32x256xf32>
    %273 = vector.extract_strided_slice %272 {offsets = [0, 0], sizes = [32, 128], strides = [1, 1]} : vector<32x256xf32> to vector<32x128xf32>
    %274 = vector.extract_strided_slice %2 {offsets = [0, 32], sizes = [32, 1], strides = [1, 1]} : vector<32x49xf32> to vector<32x1xf32>
    %275 = vector.broadcast %274 : vector<32x1xf32> to vector<32x128xf32>
    %276 = arith.mulf %275, %273 : vector<32x128xf32>
    %277 = arith.addf %271, %276 : vector<32x128xf32>
    %c175_i32 = arith.constant 175 : i32
    %278 = tpu.dynamic_rotate %1 by %c175_i32 dim 1 : vector<32x256xf32>, i32 -> vector<32x256xf32>
    %279 = vector.extract_strided_slice %278 {offsets = [0, 0], sizes = [32, 128], strides = [1, 1]} : vector<32x256xf32> to vector<32x128xf32>
    %280 = vector.extract_strided_slice %2 {offsets = [0, 39], sizes = [32, 1], strides = [1, 1]} : vector<32x49xf32> to vector<32x1xf32>
    %281 = vector.broadcast %280 : vector<32x1xf32> to vector<32x128xf32>
    %282 = arith.mulf %281, %279 : vector<32x128xf32>
    %283 = arith.addf %277, %282 : vector<32x128xf32>
    %c159_i32 = arith.constant 159 : i32
    %284 = tpu.dynamic_rotate %1 by %c159_i32 dim 1 : vector<32x256xf32>, i32 -> vector<32x256xf32>
    %285 = vector.extract_strided_slice %284 {offsets = [0, 0], sizes = [32, 128], strides = [1, 1]} : vector<32x256xf32> to vector<32x128xf32>
    %286 = vector.extract_strided_slice %2 {offsets = [0, 46], sizes = [32, 1], strides = [1, 1]} : vector<32x49xf32> to vector<32x1xf32>
    %287 = vector.broadcast %286 : vector<32x1xf32> to vector<32x128xf32>
    %288 = arith.mulf %287, %285 : vector<32x128xf32>
    %289 = arith.addf %283, %288 : vector<32x128xf32>
    %cst_32 = arith.constant 0.000000e+00 : f32
    %290 = vector.shape_cast %55 : vector<1x128xi1> to vector<1x128xi1>
    %291 = vector.broadcast %290 : vector<1x128xi1> to vector<32x128xi1>
    %292 = vector.broadcast %cst_32 : f32 to vector<32x128xf32>
    %293 = arith.select %291, %289, %292 : vector<32x128xi1>, vector<32x128xf32>
    %c254_i32 = arith.constant 254 : i32
    %294 = tpu.dynamic_rotate %1 by %c254_i32 dim 1 : vector<32x256xf32>, i32 -> vector<32x256xf32>
    %295 = vector.extract_strided_slice %294 {offsets = [0, 0], sizes = [32, 128], strides = [1, 1]} : vector<32x256xf32> to vector<32x128xf32>
    %296 = vector.extract_strided_slice %2 {offsets = [0, 5], sizes = [32, 1], strides = [1, 1]} : vector<32x49xf32> to vector<32x1xf32>
    %297 = vector.broadcast %296 : vector<32x1xf32> to vector<32x128xf32>
    %298 = arith.mulf %297, %295 : vector<32x128xf32>
    %c238_i32 = arith.constant 238 : i32
    %299 = tpu.dynamic_rotate %1 by %c238_i32 dim 1 : vector<32x256xf32>, i32 -> vector<32x256xf32>
    %300 = vector.extract_strided_slice %299 {offsets = [0, 0], sizes = [32, 128], strides = [1, 1]} : vector<32x256xf32> to vector<32x128xf32>
    %301 = vector.extract_strided_slice %2 {offsets = [0, 12], sizes = [32, 1], strides = [1, 1]} : vector<32x49xf32> to vector<32x1xf32>
    %302 = vector.broadcast %301 : vector<32x1xf32> to vector<32x128xf32>
    %303 = arith.mulf %302, %300 : vector<32x128xf32>
    %304 = arith.addf %298, %303 : vector<32x128xf32>
    %c222_i32 = arith.constant 222 : i32
    %305 = tpu.dynamic_rotate %1 by %c222_i32 dim 1 : vector<32x256xf32>, i32 -> vector<32x256xf32>
    %306 = vector.extract_strided_slice %305 {offsets = [0, 0], sizes = [32, 128], strides = [1, 1]} : vector<32x256xf32> to vector<32x128xf32>
    %307 = vector.extract_strided_slice %2 {offsets = [0, 19], sizes = [32, 1], strides = [1, 1]} : vector<32x49xf32> to vector<32x1xf32>
    %308 = vector.broadcast %307 : vector<32x1xf32> to vector<32x128xf32>
    %309 = arith.mulf %308, %306 : vector<32x128xf32>
    %310 = arith.addf %304, %309 : vector<32x128xf32>
    %c206_i32 = arith.constant 206 : i32
    %311 = tpu.dynamic_rotate %1 by %c206_i32 dim 1 : vector<32x256xf32>, i32 -> vector<32x256xf32>
    %312 = vector.extract_strided_slice %311 {offsets = [0, 0], sizes = [32, 128], strides = [1, 1]} : vector<32x256xf32> to vector<32x128xf32>
    %313 = vector.extract_strided_slice %2 {offsets = [0, 26], sizes = [32, 1], strides = [1, 1]} : vector<32x49xf32> to vector<32x1xf32>
    %314 = vector.broadcast %313 : vector<32x1xf32> to vector<32x128xf32>
    %315 = arith.mulf %314, %312 : vector<32x128xf32>
    %316 = arith.addf %310, %315 : vector<32x128xf32>
    %c190_i32 = arith.constant 190 : i32
    %317 = tpu.dynamic_rotate %1 by %c190_i32 dim 1 : vector<32x256xf32>, i32 -> vector<32x256xf32>
    %318 = vector.extract_strided_slice %317 {offsets = [0, 0], sizes = [32, 128], strides = [1, 1]} : vector<32x256xf32> to vector<32x128xf32>
    %319 = vector.extract_strided_slice %2 {offsets = [0, 33], sizes = [32, 1], strides = [1, 1]} : vector<32x49xf32> to vector<32x1xf32>
    %320 = vector.broadcast %319 : vector<32x1xf32> to vector<32x128xf32>
    %321 = arith.mulf %320, %318 : vector<32x128xf32>
    %322 = arith.addf %316, %321 : vector<32x128xf32>
    %c174_i32 = arith.constant 174 : i32
    %323 = tpu.dynamic_rotate %1 by %c174_i32 dim 1 : vector<32x256xf32>, i32 -> vector<32x256xf32>
    %324 = vector.extract_strided_slice %323 {offsets = [0, 0], sizes = [32, 128], strides = [1, 1]} : vector<32x256xf32> to vector<32x128xf32>
    %325 = vector.extract_strided_slice %2 {offsets = [0, 40], sizes = [32, 1], strides = [1, 1]} : vector<32x49xf32> to vector<32x1xf32>
    %326 = vector.broadcast %325 : vector<32x1xf32> to vector<32x128xf32>
    %327 = arith.mulf %326, %324 : vector<32x128xf32>
    %328 = arith.addf %322, %327 : vector<32x128xf32>
    %c158_i32 = arith.constant 158 : i32
    %329 = tpu.dynamic_rotate %1 by %c158_i32 dim 1 : vector<32x256xf32>, i32 -> vector<32x256xf32>
    %330 = vector.extract_strided_slice %329 {offsets = [0, 0], sizes = [32, 128], strides = [1, 1]} : vector<32x256xf32> to vector<32x128xf32>
    %331 = vector.extract_strided_slice %2 {offsets = [0, 47], sizes = [32, 1], strides = [1, 1]} : vector<32x49xf32> to vector<32x1xf32>
    %332 = vector.broadcast %331 : vector<32x1xf32> to vector<32x128xf32>
    %333 = arith.mulf %332, %330 : vector<32x128xf32>
    %334 = arith.addf %328, %333 : vector<32x128xf32>
    %cst_33 = arith.constant 0.000000e+00 : f32
    %335 = vector.shape_cast %64 : vector<1x128xi1> to vector<1x128xi1>
    %336 = vector.broadcast %335 : vector<1x128xi1> to vector<32x128xi1>
    %337 = vector.broadcast %cst_33 : f32 to vector<32x128xf32>
    %338 = arith.select %336, %334, %337 : vector<32x128xi1>, vector<32x128xf32>
    %c253_i32 = arith.constant 253 : i32
    %339 = tpu.dynamic_rotate %1 by %c253_i32 dim 1 : vector<32x256xf32>, i32 -> vector<32x256xf32>
    %340 = vector.extract_strided_slice %339 {offsets = [0, 0], sizes = [32, 128], strides = [1, 1]} : vector<32x256xf32> to vector<32x128xf32>
    %341 = vector.extract_strided_slice %2 {offsets = [0, 6], sizes = [32, 1], strides = [1, 1]} : vector<32x49xf32> to vector<32x1xf32>
    %342 = vector.broadcast %341 : vector<32x1xf32> to vector<32x128xf32>
    %343 = arith.mulf %342, %340 : vector<32x128xf32>
    %c237_i32 = arith.constant 237 : i32
    %344 = tpu.dynamic_rotate %1 by %c237_i32 dim 1 : vector<32x256xf32>, i32 -> vector<32x256xf32>
    %345 = vector.extract_strided_slice %344 {offsets = [0, 0], sizes = [32, 128], strides = [1, 1]} : vector<32x256xf32> to vector<32x128xf32>
    %346 = vector.extract_strided_slice %2 {offsets = [0, 13], sizes = [32, 1], strides = [1, 1]} : vector<32x49xf32> to vector<32x1xf32>
    %347 = vector.broadcast %346 : vector<32x1xf32> to vector<32x128xf32>
    %348 = arith.mulf %347, %345 : vector<32x128xf32>
    %349 = arith.addf %343, %348 : vector<32x128xf32>
    %c221_i32 = arith.constant 221 : i32
    %350 = tpu.dynamic_rotate %1 by %c221_i32 dim 1 : vector<32x256xf32>, i32 -> vector<32x256xf32>
    %351 = vector.extract_strided_slice %350 {offsets = [0, 0], sizes = [32, 128], strides = [1, 1]} : vector<32x256xf32> to vector<32x128xf32>
    %352 = vector.extract_strided_slice %2 {offsets = [0, 20], sizes = [32, 1], strides = [1, 1]} : vector<32x49xf32> to vector<32x1xf32>
    %353 = vector.broadcast %352 : vector<32x1xf32> to vector<32x128xf32>
    %354 = arith.mulf %353, %351 : vector<32x128xf32>
    %355 = arith.addf %349, %354 : vector<32x128xf32>
    %c205_i32 = arith.constant 205 : i32
    %356 = tpu.dynamic_rotate %1 by %c205_i32 dim 1 : vector<32x256xf32>, i32 -> vector<32x256xf32>
    %357 = vector.extract_strided_slice %356 {offsets = [0, 0], sizes = [32, 128], strides = [1, 1]} : vector<32x256xf32> to vector<32x128xf32>
    %358 = vector.extract_strided_slice %2 {offsets = [0, 27], sizes = [32, 1], strides = [1, 1]} : vector<32x49xf32> to vector<32x1xf32>
    %359 = vector.broadcast %358 : vector<32x1xf32> to vector<32x128xf32>
    %360 = arith.mulf %359, %357 : vector<32x128xf32>
    %361 = arith.addf %355, %360 : vector<32x128xf32>
    %c189_i32 = arith.constant 189 : i32
    %362 = tpu.dynamic_rotate %1 by %c189_i32 dim 1 : vector<32x256xf32>, i32 -> vector<32x256xf32>
    %363 = vector.extract_strided_slice %362 {offsets = [0, 0], sizes = [32, 128], strides = [1, 1]} : vector<32x256xf32> to vector<32x128xf32>
    %364 = vector.extract_strided_slice %2 {offsets = [0, 34], sizes = [32, 1], strides = [1, 1]} : vector<32x49xf32> to vector<32x1xf32>
    %365 = vector.broadcast %364 : vector<32x1xf32> to vector<32x128xf32>
    %366 = arith.mulf %365, %363 : vector<32x128xf32>
    %367 = arith.addf %361, %366 : vector<32x128xf32>
    %c173_i32 = arith.constant 173 : i32
    %368 = tpu.dynamic_rotate %1 by %c173_i32 dim 1 : vector<32x256xf32>, i32 -> vector<32x256xf32>
    %369 = vector.extract_strided_slice %368 {offsets = [0, 0], sizes = [32, 128], strides = [1, 1]} : vector<32x256xf32> to vector<32x128xf32>
    %370 = vector.extract_strided_slice %2 {offsets = [0, 41], sizes = [32, 1], strides = [1, 1]} : vector<32x49xf32> to vector<32x1xf32>
    %371 = vector.broadcast %370 : vector<32x1xf32> to vector<32x128xf32>
    %372 = arith.mulf %371, %369 : vector<32x128xf32>
    %373 = arith.addf %367, %372 : vector<32x128xf32>
    %c157_i32 = arith.constant 157 : i32
    %374 = tpu.dynamic_rotate %1 by %c157_i32 dim 1 : vector<32x256xf32>, i32 -> vector<32x256xf32>
    %375 = vector.extract_strided_slice %374 {offsets = [0, 0], sizes = [32, 128], strides = [1, 1]} : vector<32x256xf32> to vector<32x128xf32>
    %376 = vector.extract_strided_slice %2 {offsets = [0, 48], sizes = [32, 1], strides = [1, 1]} : vector<32x49xf32> to vector<32x1xf32>
    %377 = vector.broadcast %376 : vector<32x1xf32> to vector<32x128xf32>
    %378 = arith.mulf %377, %375 : vector<32x128xf32>
    %379 = arith.addf %373, %378 : vector<32x128xf32>
    %cst_34 = arith.constant 0.000000e+00 : f32
    %380 = vector.shape_cast %73 : vector<1x128xi1> to vector<1x128xi1>
    %381 = vector.broadcast %380 : vector<1x128xi1> to vector<32x128xi1>
    %382 = vector.broadcast %cst_34 : f32 to vector<32x128xf32>
    %383 = arith.select %381, %379, %382 : vector<32x128xi1>, vector<32x128xf32>
    %384 = arith.addf %118, %163 : vector<32x128xf32>
    %385 = arith.addf %208, %248 : vector<32x128xf32>
    %386 = arith.addf %384, %385 : vector<32x128xf32>
    %387 = arith.addf %293, %338 : vector<32x128xf32>
    %388 = arith.addf %387, %383 : vector<32x128xf32>
    %389 = arith.addf %386, %388 : vector<32x128xf32>
    %c0_35 = arith.constant 0 : index
    %c0_36 = arith.constant 0 : index
    %390 = vector.load %arg4[%c0_35, %c0_36] : memref<32x1xf32, #tpu.memory_space<vmem>>, vector<32x1xf32>
    %391 = vector.broadcast %390 : vector<32x1xf32> to vector<32x128xf32>
    %392 = arith.addf %389, %391 : vector<32x128xf32>
    %cst_37 = arith.constant dense<0.000000e+00> : vector<128xf32>
    %393 = vector.multi_reduction <add>, %392, %cst_37 [0] : vector<32x128xf32> to vector<128xf32>
    %394 = vector.shape_cast %393 : vector<128xf32> to vector<1x128xf32>
    %cst_38 = arith.constant 3.200000e+01 : f32
    %395 = vector.broadcast %cst_38 : f32 to vector<1x128xf32>
    %396 = arith.divf %394, %395 : vector<1x128xf32>
    %397 = arith.mulf %392, %392 : vector<32x128xf32>
    %cst_39 = arith.constant dense<0.000000e+00> : vector<128xf32>
    %398 = vector.multi_reduction <add>, %397, %cst_39 [0] : vector<32x128xf32> to vector<128xf32>
    %399 = vector.shape_cast %398 : vector<128xf32> to vector<1x128xf32>
    %cst_40 = arith.constant 3.200000e+01 : f32
    %400 = vector.broadcast %cst_40 : f32 to vector<1x128xf32>
    %401 = arith.divf %399, %400 : vector<1x128xf32>
    %402 = arith.mulf %396, %396 : vector<1x128xf32>
    %403 = arith.subf %401, %402 : vector<1x128xf32>
    %cst_41 = arith.constant 0.000000e+00 : f32
    %404 = vector.broadcast %cst_41 : f32 to vector<1x128xf32>
    %405 = arith.maximumf %403, %404 : vector<1x128xf32>
    %406 = vector.broadcast %396 : vector<1x128xf32> to vector<32x128xf32>
    %407 = arith.subf %392, %406 : vector<32x128xf32>
    %cst_42 = arith.constant 9.99999997E-7 : f32
    %408 = vector.broadcast %cst_42 : f32 to vector<1x128xf32>
    %409 = arith.addf %405, %408 : vector<1x128xf32>
    %410 = math.rsqrt %409 : vector<1x128xf32>
    %411 = vector.broadcast %410 : vector<1x128xf32> to vector<32x128xf32>
    %412 = arith.mulf %407, %411 : vector<32x128xf32>
    %c0_43 = arith.constant 0 : index
    %c0_44 = arith.constant 0 : index
    %413 = vector.load %arg5[%c0_43, %c0_44] : memref<128x32xf32, #tpu.memory_space<vmem>>, vector<128x32xf32>
    %cst_45 = arith.constant dense<0.000000e+00> : vector<128x128xf32>
    %414 = tpu.matmul %413, %412, %cst_45 {dimension_numbers = #tpu.dot_dimension_numbers<[1], [0], [0], [1], [0, 0, 1, 1], [], []>} : vector<128x32xf32>, vector<32x128xf32>, vector<128x128xf32> -> vector<128x128xf32>
    %c0_46 = arith.constant 0 : index
    %c0_47 = arith.constant 0 : index
    %415 = vector.load %arg6[%c0_46, %c0_47] : memref<128x1xf32, #tpu.memory_space<vmem>>, vector<128x1xf32>
    %416 = vector.broadcast %415 : vector<128x1xf32> to vector<128x128xf32>
    %417 = arith.addf %414, %416 : vector<128x128xf32>
    %cst_48 = arith.constant 5.000000e-01 : f32
    %418 = vector.broadcast %cst_48 : f32 to vector<128x128xf32>
    %419 = arith.mulf %418, %417 : vector<128x128xf32>
    %420 = arith.mulf %417, %417 : vector<128x128xf32>
    %421 = arith.mulf %420, %417 : vector<128x128xf32>
    %cst_49 = arith.constant 4.471500e-02 : f32
    %422 = vector.broadcast %cst_49 : f32 to vector<128x128xf32>
    %423 = arith.mulf %422, %421 : vector<128x128xf32>
    %424 = arith.addf %417, %423 : vector<128x128xf32>
    %cst_50 = arith.constant 0.797884583 : f32
    %425 = vector.broadcast %cst_50 : f32 to vector<128x128xf32>
    %426 = arith.mulf %425, %424 : vector<128x128xf32>
    %427 = math.tanh %426 : vector<128x128xf32>
    %cst_51 = arith.constant 1.000000e+00 : f32
    %428 = vector.broadcast %cst_51 : f32 to vector<128x128xf32>
    %429 = arith.addf %428, %427 : vector<128x128xf32>
    %430 = arith.mulf %419, %429 : vector<128x128xf32>
    %c0_52 = arith.constant 0 : index
    %c0_53 = arith.constant 0 : index
    %431 = vector.load %arg7[%c0_52, %c0_53] : memref<32x128xf32, #tpu.memory_space<vmem>>, vector<32x128xf32>
    %cst_54 = arith.constant dense<0.000000e+00> : vector<32x128xf32>
    %432 = tpu.matmul %431, %430, %cst_54 {dimension_numbers = #tpu.dot_dimension_numbers<[1], [0], [0], [1], [0, 0, 1, 1], [], []>} : vector<32x128xf32>, vector<128x128xf32>, vector<32x128xf32> -> vector<32x128xf32>
    %c0_55 = arith.constant 0 : index
    %c0_56 = arith.constant 0 : index
    %433 = vector.load %arg8[%c0_55, %c0_56] : memref<32x1xf32, #tpu.memory_space<vmem>>, vector<32x1xf32>
    %434 = vector.broadcast %433 : vector<32x1xf32> to vector<32x128xf32>
    %435 = arith.addf %432, %434 : vector<32x128xf32>
    %436 = arith.addf %226, %435 : vector<32x128xf32>
    %c0_57 = arith.constant 0 : index
    %c0_58 = arith.constant 0 : index
    %c0_59 = arith.constant 0 : index
    %437 = vector.load %arg9[%c0_57, %c0_58, %c0_59] : memref<1x32x128xf32, #tpu.memory_space<vmem>>, vector<1x32x128xf32>
    %438 = vector.shape_cast %437 : vector<1x32x128xf32> to vector<32x128xf32>
    %439 = vector.shape_cast %436 : vector<32x128xf32> to vector<1x32x128xf32>
    tpu.vector_store %arg9[%c0_57, %c0_58, %c0_59], %439 {strides = array<i32>} : memref<1x32x128xf32, #tpu.memory_space<vmem>>, vector<1x32x128xf32>,
    return
  }
  func.func @transform_0(%arg0: i32, %arg1: i32) -> (i32, i32, i32, i32) {
    %c0_i32 = arith.constant 0 : i32
    %c0_i32_0 = arith.constant 0 : i32
    %c0_i32_1 = arith.constant 0 : i32
    return %arg0, %arg1, %c0_i32, %c0_i32_0 : i32, i32, i32, i32
  }
  func.func @transform_1(%arg0: i32, %arg1: i32) -> (i32, i32) {
    %c0_i32 = arith.constant 0 : i32
    %c0_i32_0 = arith.constant 0 : i32
    %c0_i32_1 = arith.constant 0 : i32
    return %c0_i32, %c0_i32_0 : i32, i32
  }
  func.func @transform_2(%arg0: i32, %arg1: i32) -> (i32, i32) {
    %c0_i32 = arith.constant 0 : i32
    %c0_i32_0 = arith.constant 0 : i32
    %c0_i32_1 = arith.constant 0 : i32
    return %c0_i32, %c0_i32_0 : i32, i32
  }
  func.func @transform_3(%arg0: i32, %arg1: i32) -> (i32, i32) {
    %c0_i32 = arith.constant 0 : i32
    %c0_i32_0 = arith.constant 0 : i32
    %c0_i32_1 = arith.constant 0 : i32
    return %c0_i32, %c0_i32_0 : i32, i32
  }
  func.func @transform_4(%arg0: i32, %arg1: i32) -> (i32, i32) {
    %c0_i32 = arith.constant 0 : i32
    %c0_i32_0 = arith.constant 0 : i32
    %c0_i32_1 = arith.constant 0 : i32
    return %c0_i32, %c0_i32_0 : i32, i32
  }
  func.func @transform_5(%arg0: i32, %arg1: i32) -> (i32, i32) {
    %c0_i32 = arith.constant 0 : i32
    %c0_i32_0 = arith.constant 0 : i32
    %c0_i32_1 = arith.constant 0 : i32
    return %c0_i32, %c0_i32_0 : i32, i32
  }
  func.func @transform_6(%arg0: i32, %arg1: i32) -> (i32, i32) {
    %c0_i32 = arith.constant 0 : i32
    %c0_i32_0 = arith.constant 0 : i32
    %c0_i32_1 = arith.constant 0 : i32
    return %c0_i32, %c0_i32_0 : i32, i32
  }
  func.func @transform_7(%arg0: i32, %arg1: i32) -> (i32, i32, i32) {
    %c0_i32 = arith.constant 0 : i32
    %c0_i32_0 = arith.constant 0 : i32
    return %arg0, %c0_i32, %arg1 : i32, i32, i32
  }
}

</mosaic_0001>

<llo_original>
// kernel: tpu_custom_call.1
$region0: #{tpu_custom_call.1}
  #allocation0 [shape = 'u32[]', space=smem, size = 0x4, offset = 0x4, fixed_abs, tag = 'smem constant byte address 0x4 - core index']
  #allocation1 [shape = 'u32[72,128]{1,0:T(1,128)}', space=vmem, size = 0x9000, scoped, tag = 'internal scratch']
  %s0 = inlined_call_operand.vmem [shape: f32[2,2,32,256], index: 0, kind: input, shape index: {}]
  %s1 = inlined_call_operand.vmem [shape: f32[32,49], index: 1, kind: input, shape index: {}]
  %s2 = inlined_call_operand.vmem [shape: f32[32,1], index: 2, kind: input, shape index: {}]
  %s3 = inlined_call_operand.vmem [shape: f32[128,32], index: 3, kind: input, shape index: {}]
  %s4 = inlined_call_operand.vmem [shape: f32[128,1], index: 4, kind: input, shape index: {}]
  %s5 = inlined_call_operand.vmem [shape: f32[32,128], index: 5, kind: input, shape index: {}]
  %s6 = inlined_call_operand.vmem [shape: f32[32,1], index: 6, kind: input, shape index: {}]
  %s7 = inlined_call_operand.hbm [shape: f32[2,32,256], index: 7, kind: output, shape index: {}]
  %s8 = sld [smem:[#allocation0]]
  $region61: #{tpu_custom_call.1} parent=0
    _
  %s10 = ssub.s32 1, %s8
  %s11 = scalar_select 0, %s10, %s8
  $region1: #{tpu_custom_call.1} parent=0
    #allocation2 [shape = 'u8[32768]{0}', space=vmem, size = 0x8000, scoped, tag = 'output window, operand 0']
    #allocation3 [shape = 's32[2]{0}', space=sflag, size = 0x8, scoped, tag = 'scoped memory for tpu_custom_call.1']
    %12 = vsyncpa [#allocation3], 0
    %s13 = scalar_lea.sflag [#allocation3], 1
    %14 = vsyncpa %s13, 0
    loop: start=0, step=1, limit=6
    $region2: #{tpu_custom_call.1} parent=1 // loop_pre_header
      _
    $region3: #{tpu_custom_call.1} parent=1 // loop_header
      %s16 = sphi 0, %s20
      %p17 = scmp.ge.s32.totalorder %s16, 6
      %s23 = sphi 0, %s35
      %s24 = sphi 0, %s31
      %s25 = sphi 0, %s23
      %s26 = sphi 0, %s24
      %s27 = sphi 0, %s25
      %s28 = sphi 0, %s26
      %s40 = sphi 0, %s42
      %s43 = sphi 0, %s40
      %s44 = sphi 0, %s43
      %s60 = sphi 0, %s44
      %s64 = sphi 0, %s64
      %s66 = sphi 0, %s64
      %s67 = sphi 0, %s66
      %s81 = sphi 0, %s67
      %s85 = sphi 0, %s85
      %s87 = sphi 0, %s85
      %s88 = sphi 0, %s87
      %s102 = sphi 0, %s88
      %s106 = sphi 0, %s106
      %s108 = sphi 0, %s106
      %s109 = sphi 0, %s108
      %s123 = sphi 0, %s109
      %s127 = sphi 0, %s127
      %s129 = sphi 0, %s127
      %s130 = sphi 0, %s129
      %s144 = sphi 0, %s130
      %s148 = sphi 0, %s148
      %s150 = sphi 0, %s148
      %s151 = sphi 0, %s150
      %s165 = sphi 0, %s151
      %s169 = sphi 0, %s169
      %s171 = sphi 0, %s169
      %s172 = sphi 0, %s171
      %s186 = sphi 0, %s172
      %s194 = sphi 0, %s196
      %s197 = sphi 0, %s194
      %s198 = sphi 0, %s197
      %s214 = sphi 0, %s198
    $region4: #{tpu_custom_call.1} parent=1 // loop_header_branch
      %19 = sbr.rel (%p17) target = $region8
    $region5: #{tpu_custom_call.1} parent=1 // loop_body
      %s21 = ssub.s32 %s16, 1
      %s22 = ssub.s32 %s16, 2
      %s29 = sadd.s32 1, %s24
      %p30 = scmp.ge.s32.totalorder %s29, 2
      %s31 = scalar_select %p30, 0, %s29
      %s32 = sadd.s32 1, %s23
      %s33 = scalar_select %p30, %s32, %s23
      %p34 = scmp.ge.s32.totalorder %s33, 2
      %s35 = scalar_select %p34, 0, %s33
      %s36 = ssub.s32 %s23, %s35
      %s37 = ssub.s32 %s24, %s31
      %s38 = sor.u32 %s36, %s37
      %p39 = scmp.eq.s32.totalorder %s38, 0
      %s41 = sadd.s32 %s40, 1
      %s42 = scalar_select %p39, %s40, %s41
      %p45 = pneg %p39
      %p46 = scmp.eq.s32.totalorder %s16, 3
      %p47 = por %p45, %p46
      %p48 = scmp.ne.s32.totalorder %s40, %s43
      %p49 = scmp.eq.s32.totalorder %s16, 0
      %p50 = por %p48, %p49
      %p51 = scmp.ne.s32.totalorder %s40, %s43
      %p52 = scmp.eq.s32.totalorder %s21, 3
      %p53 = por %p51, %p52
      %p54 = scmp.ne.s32.totalorder %s43, %s44
      %p55 = scmp.eq.s32.totalorder %s21, 0
      %p56 = por %p54, %p55
      %p57 = scmp.ne.s32.totalorder %s43, %s44
      %p58 = scmp.eq.s32.totalorder %s22, 3
      %p59 = por %p57, %p58
      %p61 = scmp.ne.s32.totalorder %s44, %s60
      %p62 = scmp.eq.s32.totalorder %s22, 0
      %p63 = por %p61, %p62
      %s65 = sadd.s32 %s64, 1
      %p68 = scmp.eq.s32.totalorder %s16, 3
      %p69 = scmp.ne.s32.totalorder %s64, %s66
      %p70 = scmp.eq.s32.totalorder %s16, 0
      %p71 = por %p69, %p70
      %p72 = scmp.ne.s32.totalorder %s64, %s66
      %p73 = scmp.eq.s32.totalorder %s21, 3
      %p74 = por %p72, %p73
      %p75 = scmp.ne.s32.totalorder %s66, %s67
      %p76 = scmp.eq.s32.totalorder %s21, 0
      %p77 = por %p75, %p76
      %p78 = scmp.ne.s32.totalorder %s66, %s67
      %p79 = scmp.eq.s32.totalorder %s22, 3
      %p80 = por %p78, %p79
      %p82 = scmp.ne.s32.totalorder %s67, %s81
      %p83 = scmp.eq.s32.totalorder %s22, 0
      %p84 = por %p82, %p83
      %s86 = sadd.s32 %s85, 1
      %p89 = scmp.eq.s32.totalorder %s16, 3
      %p90 = scmp.ne.s32.totalorder %s85, %s87
      %p91 = scmp.eq.s32.totalorder %s16, 0
      %p92 = por %p90, %p91
      %p93 = scmp.ne.s32.totalorder %s85, %s87
      %p94 = scmp.eq.s32.totalorder %s21, 3
      %p95 = por %p93, %p94
      %p96 = scmp.ne.s32.totalorder %s87, %s88
      %p97 = scmp.eq.s32.totalorder %s21, 0
      %p98 = por %p96, %p97
      %p99 = scmp.ne.s32.totalorder %s87, %s88
      %p100 = scmp.eq.s32.totalorder %s22, 3
      %p101 = por %p99, %p100
      %p103 = scmp.ne.s32.totalorder %s88, %s102
      %p104 = scmp.eq.s32.totalorder %s22, 0
      %p105 = por %p103, %p104
      %s107 = sadd.s32 %s106, 1
      %p110 = scmp.eq.s32.totalorder %s16, 3
      %p111 = scmp.ne.s32.totalorder %s106, %s108
      %p112 = scmp.eq.s32.totalorder %s16, 0
      %p113 = por %p111, %p112
      %p114 = scmp.ne.s32.totalorder %s106, %s108
      %p115 = scmp.eq.s32.totalorder %s21, 3
      %p116 = por %p114, %p115
      %p117 = scmp.ne.s32.totalorder %s108, %s109
      %p118 = scmp.eq.s32.totalorder %s21, 0
      %p119 = por %p117, %p118
      %p120 = scmp.ne.s32.totalorder %s108, %s109
      %p121 = scmp.eq.s32.totalorder %s22, 3
      %p122 = por %p120, %p121
      %p124 = scmp.ne.s32.totalorder %s109, %s123
      %p125 = scmp.eq.s32.totalorder %s22, 0
      %p126 = por %p124, %p125
      %s128 = sadd.s32 %s127, 1
      %p131 = scmp.eq.s32.totalorder %s16, 3
      %p132 = scmp.ne.s32.totalorder %s127, %s129
      %p133 = scmp.eq.s32.totalorder %s16, 0
      %p134 = por %p132, %p133
      %p135 = scmp.ne.s32.totalorder %s127, %s129
      %p136 = scmp.eq.s32.totalorder %s21, 3
      %p137 = por %p135, %p136
      %p138 = scmp.ne.s32.totalorder %s129, %s130
      %p139 = scmp.eq.s32.totalorder %s21, 0
      %p140 = por %p138, %p139
      %p141 = scmp.ne.s32.totalorder %s129, %s130
      %p142 = scmp.eq.s32.totalorder %s22, 3
      %p143 = por %p141, %p142
      %p145 = scmp.ne.s32.totalorder %s130, %s144
      %p146 = scmp.eq.s32.totalorder %s22, 0
      %p147 = por %p145, %p146
      %s149 = sadd.s32 %s148, 1
      %p152 = scmp.eq.s32.totalorder %s16, 3
      %p153 = scmp.ne.s32.totalorder %s148, %s150
      %p154 = scmp.eq.s32.totalorder %s16, 0
      %p155 = por %p153, %p154
      %p156 = scmp.ne.s32.totalorder %s148, %s150
      %p157 = scmp.eq.s32.totalorder %s21, 3
      %p158 = por %p156, %p157
      %p159 = scmp.ne.s32.totalorder %s150, %s151
      %p160 = scmp.eq.s32.totalorder %s21, 0
      %p161 = por %p159, %p160
      %p162 = scmp.ne.s32.totalorder %s150, %s151
      %p163 = scmp.eq.s32.totalorder %s22, 3
      %p164 = por %p162, %p163
      %p166 = scmp.ne.s32.totalorder %s151, %s165
      %p167 = scmp.eq.s32.totalorder %s22, 0
      %p168 = por %p166, %p167
      %s170 = sadd.s32 %s169, 1
      %p173 = scmp.eq.s32.totalorder %s16, 3
      %p174 = scmp.ne.s32.totalorder %s169, %s171
      %p175 = scmp.eq.s32.totalorder %s16, 0
      %p176 = por %p174, %p175
      %p177 = scmp.ne.s32.totalorder %s169, %s171
      %p178 = scmp.eq.s32.totalorder %s21, 3
      %p179 = por %p177, %p178
      %p180 = scmp.ne.s32.totalorder %s171, %s172
      %p181 = scmp.eq.s32.totalorder %s21, 0
      %p182 = por %p180, %p181
      %p183 = scmp.ne.s32.totalorder %s171, %s172
      %p184 = scmp.eq.s32.totalorder %s22, 3
      %p185 = por %p183, %p184
      %p187 = scmp.ne.s32.totalorder %s172, %s186
      %p188 = scmp.eq.s32.totalorder %s22, 0
      %p189 = por %p187, %p188
      %s190 = ssub.s32 %s23, %s35
      %s191 = ssub.s32 %s24, %s31
      %s192 = sor.u32 %s190, %s191
      %p193 = scmp.eq.s32.totalorder %s192, 0
      %s195 = sadd.s32 %s194, 1
      %s196 = scalar_select %p193, %s194, %s195
      %p199 = pneg %p193
      %p200 = scmp.eq.s32.totalorder %s16, 3
      %p201 = por %p199, %p200
      %p202 = scmp.ne.s32.totalorder %s194, %s197
      %p203 = scmp.eq.s32.totalorder %s16, 0
      %p204 = por %p202, %p203
      %p205 = scmp.ne.s32.totalorder %s194, %s197
      %p206 = scmp.eq.s32.totalorder %s21, 3
      %p207 = por %p205, %p206
      %p208 = scmp.ne.s32.totalorder %s197, %s198
      %p209 = scmp.eq.s32.totalorder %s21, 0
      %p210 = por %p208, %p209
      %p211 = scmp.ne.s32.totalorder %s197, %s198
      %p212 = scmp.eq.s32.totalorder %s22, 3
      %p213 = por %p211, %p212
      %p215 = scmp.ne.s32.totalorder %s198, %s214
      %p216 = scmp.eq.s32.totalorder %s22, 0
      %p217 = por %p215, %p216
      %p218 = scmp.le.s32.totalorder 1, %s16
      %p219 = scmp.lt.s32.totalorder %s16, 5
      %p220 = pnand %p218, %p219
      %p221 = pneg %p220
      // Predicated region
      $region9: #{tpu_custom_call.1} parent=5 // pred_check
        _
      $region10: #{tpu_custom_call.1} parent=5 // pred_check_branch
        %223 = sbr.rel (%p220) target = $region12
      $region11: #{tpu_custom_call.1} parent=5 // pred_region
        %s224 = ssub.s32 %s16, 1
        // Predicated region
        $region13: #{tpu_custom_call.1} parent=11 // pred_check
          %p225 = pneg %p77
        $region14: #{tpu_custom_call.1} parent=11 // pred_check_branch
          %227 = sbr.rel (%p225) target = $region16
        $region15: #{tpu_custom_call.1} parent=11 // pred_region
          _
        $region16: #{tpu_custom_call.1} parent=11 // pred_fallthru
          _
        // Predicated region
        $region17: #{tpu_custom_call.1} parent=11 // pred_check
          %p228 = pneg %p98
        $region18: #{tpu_custom_call.1} parent=11 // pred_check_branch
          %230 = sbr.rel (%p228) target = $region20
        $region19: #{tpu_custom_call.1} parent=11 // pred_region
          _
        $region20: #{tpu_custom_call.1} parent=11 // pred_fallthru
          _
        // Predicated region
        $region21: #{tpu_custom_call.1} parent=11 // pred_check
          %p231 = pneg %p119
        $region22: #{tpu_custom_call.1} parent=11 // pred_check_branch
          %233 = sbr.rel (%p231) target = $region24
        $region23: #{tpu_custom_call.1} parent=11 // pred_region
          _
        $region24: #{tpu_custom_call.1} parent=11 // pred_fallthru
          _
        // Predicated region
        $region25: #{tpu_custom_call.1} parent=11 // pred_check
          %p234 = pneg %p140
        $region26: #{tpu_custom_call.1} parent=11 // pred_check_branch
          %236 = sbr.rel (%p234) target = $region28
        $region27: #{tpu_custom_call.1} parent=11 // pred_region
          _
        $region28: #{tpu_custom_call.1} parent=11 // pred_fallthru
          _
        // Predicated region
        $region29: #{tpu_custom_call.1} parent=11 // pred_check
          %p237 = pneg %p161
        $region30: #{tpu_custom_call.1} parent=11 // pred_check_branch
          %239 = sbr.rel (%p237) target = $region32
        $region31: #{tpu_custom_call.1} parent=11 // pred_region
          _
        $region32: #{tpu_custom_call.1} parent=11 // pred_fallthru
          _
        // Predicated region
        $region33: #{tpu_custom_call.1} parent=11 // pred_check
          %p240 = pneg %p182
        $region34: #{tpu_custom_call.1} parent=11 // pred_check_branch
          %242 = sbr.rel (%p240) target = $region36
        $region35: #{tpu_custom_call.1} parent=11 // pred_region
          _
        $region36: #{tpu_custom_call.1} parent=11 // pred_fallthru
          _
      $region12: #{tpu_custom_call.1} parent=5 // pred_fallthru
        _
      %p243 = scmp.lt.s32.totalorder %s16, 4
      // Predicated region
      $region37: #{tpu_custom_call.1} parent=5 // pred_check
        %p244 = pneg %p243
      $region38: #{tpu_custom_call.1} parent=5 // pred_check_branch
        %246 = sbr.rel (%p244) target = $region40
      $region39: #{tpu_custom_call.1} parent=5 // pred_region
        // Predicated region
        $region41: #{tpu_custom_call.1} parent=39 // pred_check
          %p247 = pneg %p50
        $region42: #{tpu_custom_call.1} parent=39 // pred_check_branch
          %249 = sbr.rel (%p247) target = $region44
        $region43: #{tpu_custom_call.1} parent=39 // pred_region
          %p250 = scmp.lt.s32.totalorder %s23, 1
          %s251 = scalar_select %p250, %s23, 1
          %p252 = scmp.lt.s32.totalorder %s24, 1
          %s253 = scalar_select %p252, %s24, 1
          %s254 = smul.addr %s253, 8
          %s255 = smul.addr %s251, 16
          %s256 = sadd.s32 %s254, %s255
          %s257 = smul.addr %s256, 8
          %s258 = scalar_lea.vmem %s0, %s257
        $region44: #{tpu_custom_call.1} parent=39 // pred_fallthru
          _
      $region40: #{tpu_custom_call.1} parent=5 // pred_fallthru
        _
      %p259 = scmp.le.s32.totalorder 1, %s16
      %p260 = scmp.lt.s32.totalorder %s16, 5
      %p261 = pnand %p259, %p260
      %p262 = pneg %p261
      // Predicated region
      $region45: #{tpu_custom_call.1} parent=5 // pred_check
        _
      $region46: #{tpu_custom_call.1} parent=5 // pred_check_branch
        %264 = sbr.rel (%p261) target = $region48
      $region47: #{tpu_custom_call.1} parent=5 // pred_region
        %s265 = ssub.s32 %s16, 1
        %p266 = scmp.lt.s32.totalorder %s25, 1
        %s267 = scalar_select %p266, %s25, 1
        %p268 = scmp.lt.s32.totalorder %s26, 1
        %s269 = scalar_select %p268, %s26, 1
        %s270 = smul.addr %s269, 8
        %s271 = smul.addr %s267, 16
        %s272 = sadd.s32 %s270, %s271
        %s273 = smul.addr %s272, 8
        %s274 = scalar_lea.vmem %s0, %s273
        %p275 = pneg %p56
        %p276 = pneg %p53
        %p277 = pneg %p77
        %p278 = pneg %p74
        %p279 = pneg %p98
        %p280 = pneg %p95
        %p281 = pneg %p119
        %p282 = pneg %p116
        %p283 = pneg %p140
        %p284 = pneg %p137
        %p285 = pneg %p161
        %p286 = pneg %p158
        %p287 = pneg %p182
        %p288 = pneg %p179
        %p289 = pneg %p210
        %p290 = pneg %p207
        %s291 = sand.u32 %s197, 1
        %s292 = scalar_lea.sflag [#allocation3], %s291
        %s293 = sand.u32 %s197, 1
        %s294 = smul.addr %s293, 32
        %s295 = scalar_lea.vmem [#allocation2], %s294
        %p296 = scmp.lt.s32.totalorder %s25, 1
        %s297 = scalar_select %p296, %s25, 1
        %p298 = scmp.lt.s32.totalorder %s26, 1
        %s299 = scalar_select %p298, %s26, 1
        %s300 = smul.addr %s299, 8
        %s301 = smul.addr %s297, 16
        %s302 = sadd.s32 %s300, %s301
        %s303 = smul.addr %s302, 8
        %s304 = scalar_lea.vmem %s0, %s303
        %v305 = vld [vmem:[%s304] sm:$0xff]
        %v306 = vld [vmem:[%s304 + $0x8] sm:$0xff]
        %v307 = vld [vmem:[%s304 + $0x10] sm:$0xff]
        %v308 = vld [vmem:[%s304 + $0x18] sm:$0xff]
        %v309 = vld [vmem:[%s304 + $0x20] sm:$0xff]
        %v310 = vld [vmem:[%s304 + $0x28] sm:$0xff]
        %v311 = vld [vmem:[%s304 + $0x30] sm:$0xff]
        %v312 = vld [vmem:[%s304 + $0x38] sm:$0xff]
        %v313 = vld [vmem:[%s1] sm:$0xff]
        %v314 = vld [vmem:[%s1 + $0x8] sm:$0xff]
        %v315 = vld [vmem:[%s1 + $0x10] sm:$0xff]
        %v316 = vld [vmem:[%s1 + $0x18] sm:$0xff]
        %v317 = vlaneseq
        %v318 = vand.u32 %v317, 127
        %vm319 = vcmp.lt.s32.totalorder %v318, 0
        %v320 = vsub.s32 0, %v318
        %v321 = vsel %vm319, %v320, %v318
        %v322 = vshrl.u32 %v321, 4
        %v323 = vand.u32 %v321, 15
        %v324 = vsub.s32 0, %v323
        %v325 = vsel %vm319, %v324, %v323
        %vm326 = vcmp.ne.s32.totalorder %v325, 0
        %vm327 = vcmp.lt.s32.totalorder %v325, 0
        %vm328 = vmand %vm327, %vm326
        %v329 = vadd.s32 %v325, 16
        %v330 = vsel %vm328, %v329, %v325
        %v331 = vadd.s32 %v330, 4294967293
        %vm332 = vcmp.ge.s32.totalorder %v331, 0
        %vm333 = vcmp.lt.s32.totalorder %v331, 16
        %vm334 = vmand %vm332, %vm333
        %v335 = vadd.s32 %v330, 4294967294
        %vm336 = vcmp.ge.s32.totalorder %v335, 0
        %vm337 = vcmp.lt.s32.totalorder %v335, 16
        %vm338 = vmand %vm336, %vm337
        %v339 = vadd.s32 %v330, 4294967295
        %vm340 = vcmp.ge.s32.totalorder %v339, 0
        %vm341 = vcmp.lt.s32.totalorder %v339, 16
        %vm342 = vmand %vm340, %vm341
        %v343 = vadd.s32 %v330, 1
        %vm344 = vcmp.ge.s32.totalorder %v343, 0
        %vm345 = vcmp.lt.s32.totalorder %v343, 16
        %vm346 = vmand %vm344, %vm345
        %v347 = vadd.s32 %v330, 2
        %vm348 = vcmp.ge.s32.totalorder %v347, 0
        %vm349 = vcmp.lt.s32.totalorder %v347, 16
        %vm350 = vmand %vm348, %vm349
        %v351 = vadd.s32 %v330, 3
        %vm352 = vcmp.ge.s32.totalorder %v351, 0
        %vm353 = vcmp.lt.s32.totalorder %v351, 16
        %vm354 = vmand %vm352, %vm353
        %355 = vrot.lane.b32.xlu0 %v305, 3
        %v356 = vpop.permute.xlu0 %355
        %357 = vrot.lane.b32.xlu0 %v307, 3
        %v358 = vpop.permute.xlu0 %357
        %359 = vrot.lane.b32.xlu0 %v309, 3
        %v360 = vpop.permute.xlu0 %359
        %361 = vrot.lane.b32.xlu0 %v311, 3
        %v362 = vpop.permute.xlu0 %361
        %363 = vrot.lane.b32.xlu0 %v306, 3
        %v364 = vpop.permute.xlu0 %363
        %365 = vrot.lane.b32.xlu0 %v308, 3
        %v366 = vpop.permute.xlu0 %365
        %367 = vrot.lane.b32.xlu0 %v310, 3
        %v368 = vpop.permute.xlu0 %367
        %369 = vrot.lane.b32.xlu0 %v312, 3
        %v370 = vpop.permute.xlu0 %369
        %vm371 = vcmp.lt.s32.totalorder %v318, 3
        %v372 = vsel %vm371, %v364, %v356
        %v373 = vsel %vm371, %v366, %v358
        %v374 = vsel %vm371, %v368, %v360
        %v375 = vsel %vm371, %v370, %v362
        %377 = vset.pattern.permute.xlu0 0
        %378 = vperm.xlu0 %377, %v313
        %v379 = vpop.permute.xlu0 %378
        %382 = vset.pattern.permute.xlu0 0
        %383 = vperm.xlu0 %382, %v314
        %v384 = vpop.permute.xlu0 %383
        %387 = vset.pattern.permute.xlu0 0
        %388 = vperm.xlu0 %387, %v315
        %v389 = vpop.permute.xlu0 %388
        %392 = vset.pattern.permute.xlu0 0
        %393 = vperm.xlu0 %392, %v316
        %v394 = vpop.permute.xlu0 %393
        %v396 = vmul.f32 %v379, %v372
        %v397 = vmul.f32 %v384, %v373
        %v398 = vmul.f32 %v389, %v374
        %v399 = vmul.f32 %v394, %v375
        %400 = vrot.lane.b32.xlu0 %v305, 115
        %v401 = vpop.permute.xlu0 %400
        %402 = vrot.lane.b32.xlu0 %v307, 115
        %v403 = vpop.permute.xlu0 %402
        %404 = vrot.lane.b32.xlu0 %v309, 115
        %v405 = vpop.permute.xlu0 %404
        %406 = vrot.lane.b32.xlu0 %v311, 115
        %v407 = vpop.permute.xlu0 %406
        %408 = vrot.lane.b32.xlu0 %v306, 115
        %v409 = vpop.permute.xlu0 %408
        %410 = vrot.lane.b32.xlu0 %v308, 115
        %v411 = vpop.permute.xlu0 %410
        %412 = vrot.lane.b32.xlu0 %v310, 115
        %v413 = vpop.permute.xlu0 %412
        %414 = vrot.lane.b32.xlu0 %v312, 115
        %v415 = vpop.permute.xlu0 %414
        %vm416 = vcmp.lt.s32.totalorder %v318, 115
        %v417 = vsel %vm416, %v401, %v409
        %v418 = vsel %vm416, %v403, %v411
        %v419 = vsel %vm416, %v405, %v413
        %v420 = vsel %vm416, %v407, %v415
        %421 = vset.pattern.permute.xlu0 7
        %422 = vperm.xlu0 %421, %v313
        %v423 = vpop.permute.xlu0 %422
        %425 = vset.pattern.permute.xlu0 7
        %426 = vperm.xlu0 %425, %v314
        %v427 = vpop.permute.xlu0 %426
        %429 = vset.pattern.permute.xlu0 7
        %430 = vperm.xlu0 %429, %v315
        %v431 = vpop.permute.xlu0 %430
        %433 = vset.pattern.permute.xlu0 7
        %434 = vperm.xlu0 %433, %v316
        %v435 = vpop.permute.xlu0 %434
        %v437 = vmul.f32 %v423, %v417
        %v438 = vmul.f32 %v427, %v418
        %v439 = vmul.f32 %v431, %v419
        %v440 = vmul.f32 %v435, %v420
        %v441 = vadd.f32 %v396, %v437
        %v442 = vadd.f32 %v397, %v438
        %v443 = vadd.f32 %v398, %v439
        %v444 = vadd.f32 %v399, %v440
        %445 = vrot.lane.b32.xlu0 %v305, 99
        %v446 = vpop.permute.xlu0 %445
        %447 = vrot.lane.b32.xlu0 %v307, 99
        %v448 = vpop.permute.xlu0 %447
        %449 = vrot.lane.b32.xlu0 %v309, 99
        %v450 = vpop.permute.xlu0 %449
        %451 = vrot.lane.b32.xlu0 %v311, 99
        %v452 = vpop.permute.xlu0 %451
        %453 = vrot.lane.b32.xlu0 %v306, 99
        %v454 = vpop.permute.xlu0 %453
        %455 = vrot.lane.b32.xlu0 %v308, 99
        %v456 = vpop.permute.xlu0 %455
        %457 = vrot.lane.b32.xlu0 %v310, 99
        %v458 = vpop.permute.xlu0 %457
        %459 = vrot.lane.b32.xlu0 %v312, 99
        %v460 = vpop.permute.xlu0 %459
        %vm461 = vcmp.lt.s32.totalorder %v318, 99
        %v462 = vsel %vm461, %v446, %v454
        %v463 = vsel %vm461, %v448, %v456
        %v464 = vsel %vm461, %v450, %v458
        %v465 = vsel %vm461, %v452, %v460
        %466 = vset.pattern.permute.xlu0 14
        %467 = vperm.xlu0 %466, %v313
        %v468 = vpop.permute.xlu0 %467
        %470 = vset.pattern.permute.xlu0 14
        %471 = vperm.xlu0 %470, %v314
        %v472 = vpop.permute.xlu0 %471
        %474 = vset.pattern.permute.xlu0 14
        %475 = vperm.xlu0 %474, %v315
        %v476 = vpop.permute.xlu0 %475
        %478 = vset.pattern.permute.xlu0 14
        %479 = vperm.xlu0 %478, %v316
        %v480 = vpop.permute.xlu0 %479
        %v482 = vmul.f32 %v468, %v462
        %v483 = vmul.f32 %v472, %v463
        %v484 = vmul.f32 %v476, %v464
        %v485 = vmul.f32 %v480, %v465
        %v486 = vadd.f32 %v441, %v482
        %v487 = vadd.f32 %v442, %v483
        %v488 = vadd.f32 %v443, %v484
        %v489 = vadd.f32 %v444, %v485
        %490 = vrot.lane.b32.xlu0 %v305, 83
        %v491 = vpop.permute.xlu0 %490
        %492 = vrot.lane.b32.xlu0 %v307, 83
        %v493 = vpop.permute.xlu0 %492
        %494 = vrot.lane.b32.xlu0 %v309, 83
        %v495 = vpop.permute.xlu0 %494
        %496 = vrot.lane.b32.xlu0 %v311, 83
        %v497 = vpop.permute.xlu0 %496
        %498 = vrot.lane.b32.xlu0 %v306, 83
        %v499 = vpop.permute.xlu0 %498
        %500 = vrot.lane.b32.xlu0 %v308, 83
        %v501 = vpop.permute.xlu0 %500
        %502 = vrot.lane.b32.xlu0 %v310, 83
        %v503 = vpop.permute.xlu0 %502
        %504 = vrot.lane.b32.xlu0 %v312, 83
        %v505 = vpop.permute.xlu0 %504
        %vm506 = vcmp.lt.s32.totalorder %v318, 83
        %v507 = vsel %vm506, %v491, %v499
        %v508 = vsel %vm506, %v493, %v501
        %v509 = vsel %vm506, %v495, %v503
        %v510 = vsel %vm506, %v497, %v505
        %511 = vset.pattern.permute.xlu0 21
        %512 = vperm.xlu0 %511, %v313
        %v513 = vpop.permute.xlu0 %512
        %515 = vset.pattern.permute.xlu0 21
        %516 = vperm.xlu0 %515, %v314
        %v517 = vpop.permute.xlu0 %516
        %519 = vset.pattern.permute.xlu0 21
        %520 = vperm.xlu0 %519, %v315
        %v521 = vpop.permute.xlu0 %520
        %523 = vset.pattern.permute.xlu0 21
        %524 = vperm.xlu0 %523, %v316
        %v525 = vpop.permute.xlu0 %524
        %v527 = vmul.f32 %v513, %v507
        %v528 = vmul.f32 %v517, %v508
        %v529 = vmul.f32 %v521, %v509
        %v530 = vmul.f32 %v525, %v510
        %v531 = vadd.f32 %v486, %v527
        %v532 = vadd.f32 %v487, %v528
        %v533 = vadd.f32 %v488, %v529
        %v534 = vadd.f32 %v489, %v530
        %535 = vrot.lane.b32.xlu0 %v305, 67
        %v536 = vpop.permute.xlu0 %535
        %537 = vrot.lane.b32.xlu0 %v307, 67
        %v538 = vpop.permute.xlu0 %537
        %539 = vrot.lane.b32.xlu0 %v309, 67
        %v540 = vpop.permute.xlu0 %539
        %541 = vrot.lane.b32.xlu0 %v311, 67
        %v542 = vpop.permute.xlu0 %541
        %543 = vrot.lane.b32.xlu0 %v306, 67
        %v544 = vpop.permute.xlu0 %543
        %545 = vrot.lane.b32.xlu0 %v308, 67
        %v546 = vpop.permute.xlu0 %545
        %547 = vrot.lane.b32.xlu0 %v310, 67
        %v548 = vpop.permute.xlu0 %547
        %549 = vrot.lane.b32.xlu0 %v312, 67
        %v550 = vpop.permute.xlu0 %549
        %vm551 = vcmp.lt.s32.totalorder %v318, 67
        %v552 = vsel %vm551, %v536, %v544
        %v553 = vsel %vm551, %v538, %v546
        %v554 = vsel %vm551, %v540, %v548
        %v555 = vsel %vm551, %v542, %v550
        %556 = vset.pattern.permute.xlu0 28
        %557 = vperm.xlu0 %556, %v313
        %v558 = vpop.permute.xlu0 %557
        %560 = vset.pattern.permute.xlu0 28
        %561 = vperm.xlu0 %560, %v314
        %v562 = vpop.permute.xlu0 %561
        %564 = vset.pattern.permute.xlu0 28
        %565 = vperm.xlu0 %564, %v315
        %v566 = vpop.permute.xlu0 %565
        %568 = vset.pattern.permute.xlu0 28
        %569 = vperm.xlu0 %568, %v316
        %v570 = vpop.permute.xlu0 %569
        %v572 = vmul.f32 %v558, %v552
        %v573 = vmul.f32 %v562, %v553
        %v574 = vmul.f32 %v566, %v554
        %v575 = vmul.f32 %v570, %v555
        %v576 = vadd.f32 %v531, %v572
        %v577 = vadd.f32 %v532, %v573
        %v578 = vadd.f32 %v533, %v574
        %v579 = vadd.f32 %v534, %v575
        %580 = vrot.lane.b32.xlu0 %v305, 51
        %v581 = vpop.permute.xlu0 %580
        %582 = vrot.lane.b32.xlu0 %v307, 51
        %v583 = vpop.permute.xlu0 %582
        %584 = vrot.lane.b32.xlu0 %v309, 51
        %v585 = vpop.permute.xlu0 %584
        %586 = vrot.lane.b32.xlu0 %v311, 51
        %v587 = vpop.permute.xlu0 %586
        %588 = vrot.lane.b32.xlu0 %v306, 51
        %v589 = vpop.permute.xlu0 %588
        %590 = vrot.lane.b32.xlu0 %v308, 51
        %v591 = vpop.permute.xlu0 %590
        %592 = vrot.lane.b32.xlu0 %v310, 51
        %v593 = vpop.permute.xlu0 %592
        %594 = vrot.lane.b32.xlu0 %v312, 51
        %v595 = vpop.permute.xlu0 %594
        %vm596 = vcmp.lt.s32.totalorder %v318, 51
        %v597 = vsel %vm596, %v581, %v589
        %v598 = vsel %vm596, %v583, %v591
        %v599 = vsel %vm596, %v585, %v593
        %v600 = vsel %vm596, %v587, %v595
        %601 = vset.pattern.permute.xlu0 35
        %602 = vperm.xlu0 %601, %v313
        %v603 = vpop.permute.xlu0 %602
        %605 = vset.pattern.permute.xlu0 35
        %606 = vperm.xlu0 %605, %v314
        %v607 = vpop.permute.xlu0 %606
        %609 = vset.pattern.permute.xlu0 35
        %610 = vperm.xlu0 %609, %v315
        %v611 = vpop.permute.xlu0 %610
        %613 = vset.pattern.permute.xlu0 35
        %614 = vperm.xlu0 %613, %v316
        %v615 = vpop.permute.xlu0 %614
        %v617 = vmul.f32 %v603, %v597
        %v618 = vmul.f32 %v607, %v598
        %v619 = vmul.f32 %v611, %v599
        %v620 = vmul.f32 %v615, %v600
        %v621 = vadd.f32 %v576, %v617
        %v622 = vadd.f32 %v577, %v618
        %v623 = vadd.f32 %v578, %v619
        %v624 = vadd.f32 %v579, %v620
        %625 = vrot.lane.b32.xlu0 %v305, 35
        %v626 = vpop.permute.xlu0 %625
        %627 = vrot.lane.b32.xlu0 %v307, 35
        %v628 = vpop.permute.xlu0 %627
        %629 = vrot.lane.b32.xlu0 %v309, 35
        %v630 = vpop.permute.xlu0 %629
        %631 = vrot.lane.b32.xlu0 %v311, 35
        %v632 = vpop.permute.xlu0 %631
        %633 = vrot.lane.b32.xlu0 %v306, 35
        %v634 = vpop.permute.xlu0 %633
        %635 = vrot.lane.b32.xlu0 %v308, 35
        %v636 = vpop.permute.xlu0 %635
        %637 = vrot.lane.b32.xlu0 %v310, 35
        %v638 = vpop.permute.xlu0 %637
        %639 = vrot.lane.b32.xlu0 %v312, 35
        %v640 = vpop.permute.xlu0 %639
        %vm641 = vcmp.lt.s32.totalorder %v318, 35
        %v642 = vsel %vm641, %v626, %v634
        %v643 = vsel %vm641, %v628, %v636
        %v644 = vsel %vm641, %v630, %v638
        %v645 = vsel %vm641, %v632, %v640
        %646 = vset.pattern.permute.xlu0 42
        %647 = vperm.xlu0 %646, %v313
        %v648 = vpop.permute.xlu0 %647
        %650 = vset.pattern.permute.xlu0 42
        %651 = vperm.xlu0 %650, %v314
        %v652 = vpop.permute.xlu0 %651
        %654 = vset.pattern.permute.xlu0 42
        %655 = vperm.xlu0 %654, %v315
        %v656 = vpop.permute.xlu0 %655
        %658 = vset.pattern.permute.xlu0 42
        %659 = vperm.xlu0 %658, %v316
        %v660 = vpop.permute.xlu0 %659
        %v662 = vmul.f32 %v648, %v642
        %v663 = vmul.f32 %v652, %v643
        %v664 = vmul.f32 %v656, %v644
        %v665 = vmul.f32 %v660, %v645
        %v666 = vadd.f32 %v621, %v662
        %v667 = vadd.f32 %v622, %v663
        %v668 = vadd.f32 %v623, %v664
        %v669 = vadd.f32 %v624, %v665
        %v670 = vsel %vm334, 1, 0
        %vm671 = vcmp.eq.s32.totalorder %v670, 1
        %v672 = vsel %vm671, %v666, 0.0
        %v673 = vsel %vm671, %v667, 0.0
        %v674 = vsel %vm671, %v668, 0.0
        %v675 = vsel %vm671, %v669, 0.0
        %676 = vrot.lane.b32.xlu0 %v305, 2
        %v677 = vpop.permute.xlu0 %676
        %678 = vrot.lane.b32.xlu0 %v307, 2
        %v679 = vpop.permute.xlu0 %678
        %680 = vrot.lane.b32.xlu0 %v309, 2
        %v681 = vpop.permute.xlu0 %680
        %682 = vrot.lane.b32.xlu0 %v311, 2
        %v683 = vpop.permute.xlu0 %682
        %684 = vrot.lane.b32.xlu0 %v306, 2
        %v685 = vpop.permute.xlu0 %684
        %686 = vrot.lane.b32.xlu0 %v308, 2
        %v687 = vpop.permute.xlu0 %686
        %688 = vrot.lane.b32.xlu0 %v310, 2
        %v689 = vpop.permute.xlu0 %688
        %690 = vrot.lane.b32.xlu0 %v312, 2
        %v691 = vpop.permute.xlu0 %690
        %vm692 = vcmp.lt.s32.totalorder %v318, 2
        %v693 = vsel %vm692, %v685, %v677
        %v694 = vsel %vm692, %v687, %v679
        %v695 = vsel %vm692, %v689, %v681
        %v696 = vsel %vm692, %v691, %v683
        %697 = vset.pattern.permute.xlu0 1
        %698 = vperm.xlu0 %697, %v313
        %v699 = vpop.permute.xlu0 %698
        %701 = vset.pattern.permute.xlu0 1
        %702 = vperm.xlu0 %701, %v314
        %v703 = vpop.permute.xlu0 %702
        %705 = vset.pattern.permute.xlu0 1
        %706 = vperm.xlu0 %705, %v315
        %v707 = vpop.permute.xlu0 %706
        %709 = vset.pattern.permute.xlu0 1
        %710 = vperm.xlu0 %709, %v316
        %v711 = vpop.permute.xlu0 %710
        %v713 = vmul.f32 %v699, %v693
        %v714 = vmul.f32 %v703, %v694
        %v715 = vmul.f32 %v707, %v695
        %v716 = vmul.f32 %v711, %v696
        %717 = vrot.lane.b32.xlu0 %v305, 114
        %v718 = vpop.permute.xlu0 %717
        %719 = vrot.lane.b32.xlu0 %v307, 114
        %v720 = vpop.permute.xlu0 %719
        %721 = vrot.lane.b32.xlu0 %v309, 114
        %v722 = vpop.permute.xlu0 %721
        %723 = vrot.lane.b32.xlu0 %v311, 114
        %v724 = vpop.permute.xlu0 %723
        %725 = vrot.lane.b32.xlu0 %v306, 114
        %v726 = vpop.permute.xlu0 %725
        %727 = vrot.lane.b32.xlu0 %v308, 114
        %v728 = vpop.permute.xlu0 %727
        %729 = vrot.lane.b32.xlu0 %v310, 114
        %v730 = vpop.permute.xlu0 %729
        %731 = vrot.lane.b32.xlu0 %v312, 114
        %v732 = vpop.permute.xlu0 %731
        %vm733 = vcmp.lt.s32.totalorder %v318, 114
        %v734 = vsel %vm733, %v718, %v726
        %v735 = vsel %vm733, %v720, %v728
        %v736 = vsel %vm733, %v722, %v730
        %v737 = vsel %vm733, %v724, %v732
        %738 = vset.pattern.permute.xlu0 8
        %739 = vperm.xlu0 %738, %v313
        %v740 = vpop.permute.xlu0 %739
        %742 = vset.pattern.permute.xlu0 8
        %743 = vperm.xlu0 %742, %v314
        %v744 = vpop.permute.xlu0 %743
        %746 = vset.pattern.permute.xlu0 8
        %747 = vperm.xlu0 %746, %v315
        %v748 = vpop.permute.xlu0 %747
        %750 = vset.pattern.permute.xlu0 8
        %751 = vperm.xlu0 %750, %v316
        %v752 = vpop.permute.xlu0 %751
        %v754 = vmul.f32 %v740, %v734
        %v755 = vmul.f32 %v744, %v735
        %v756 = vmul.f32 %v748, %v736
        %v757 = vmul.f32 %v752, %v737
        %v758 = vadd.f32 %v713, %v754
        %v759 = vadd.f32 %v714, %v755
        %v760 = vadd.f32 %v715, %v756
        %v761 = vadd.f32 %v716, %v757
        %762 = vrot.lane.b32.xlu0 %v305, 98
        %v763 = vpop.permute.xlu0 %762
        %764 = vrot.lane.b32.xlu0 %v307, 98
        %v765 = vpop.permute.xlu0 %764
        %766 = vrot.lane.b32.xlu0 %v309, 98
        %v767 = vpop.permute.xlu0 %766
        %768 = vrot.lane.b32.xlu0 %v311, 98
        %v769 = vpop.permute.xlu0 %768
        %770 = vrot.lane.b32.xlu0 %v306, 98
        %v771 = vpop.permute.xlu0 %770
        %772 = vrot.lane.b32.xlu0 %v308, 98
        %v773 = vpop.permute.xlu0 %772
        %774 = vrot.lane.b32.xlu0 %v310, 98
        %v775 = vpop.permute.xlu0 %774
        %776 = vrot.lane.b32.xlu0 %v312, 98
        %v777 = vpop.permute.xlu0 %776
        %vm778 = vcmp.lt.s32.totalorder %v318, 98
        %v779 = vsel %vm778, %v763, %v771
        %v780 = vsel %vm778, %v765, %v773
        %v781 = vsel %vm778, %v767, %v775
        %v782 = vsel %vm778, %v769, %v777
        %783 = vset.pattern.permute.xlu0 15
        %784 = vperm.xlu0 %783, %v313
        %v785 = vpop.permute.xlu0 %784
        %787 = vset.pattern.permute.xlu0 15
        %788 = vperm.xlu0 %787, %v314
        %v789 = vpop.permute.xlu0 %788
        %791 = vset.pattern.permute.xlu0 15
        %792 = vperm.xlu0 %791, %v315
        %v793 = vpop.permute.xlu0 %792
        %795 = vset.pattern.permute.xlu0 15
        %796 = vperm.xlu0 %795, %v316
        %v797 = vpop.permute.xlu0 %796
        %v799 = vmul.f32 %v785, %v779
        %v800 = vmul.f32 %v789, %v780
        %v801 = vmul.f32 %v793, %v781
        %v802 = vmul.f32 %v797, %v782
        %v803 = vadd.f32 %v758, %v799
        %v804 = vadd.f32 %v759, %v800
        %v805 = vadd.f32 %v760, %v801
        %v806 = vadd.f32 %v761, %v802
        %807 = vrot.lane.b32.xlu0 %v305, 82
        %v808 = vpop.permute.xlu0 %807
        %809 = vrot.lane.b32.xlu0 %v307, 82
        %v810 = vpop.permute.xlu0 %809
        %811 = vrot.lane.b32.xlu0 %v309, 82
        %v812 = vpop.permute.xlu0 %811
        %813 = vrot.lane.b32.xlu0 %v311, 82
        %v814 = vpop.permute.xlu0 %813
        %815 = vrot.lane.b32.xlu0 %v306, 82
        %v816 = vpop.permute.xlu0 %815
        %817 = vrot.lane.b32.xlu0 %v308, 82
        %v818 = vpop.permute.xlu0 %817
        %819 = vrot.lane.b32.xlu0 %v310, 82
        %v820 = vpop.permute.xlu0 %819
        %821 = vrot.lane.b32.xlu0 %v312, 82
        %v822 = vpop.permute.xlu0 %821
        %vm823 = vcmp.lt.s32.totalorder %v318, 82
        %v824 = vsel %vm823, %v808, %v816
        %v825 = vsel %vm823, %v810, %v818
        %v826 = vsel %vm823, %v812, %v820
        %v827 = vsel %vm823, %v814, %v822
        %828 = vset.pattern.permute.xlu0 22
        %829 = vperm.xlu0 %828, %v313
        %v830 = vpop.permute.xlu0 %829
        %832 = vset.pattern.permute.xlu0 22
        %833 = vperm.xlu0 %832, %v314
        %v834 = vpop.permute.xlu0 %833
        %836 = vset.pattern.permute.xlu0 22
        %837 = vperm.xlu0 %836, %v315
        %v838 = vpop.permute.xlu0 %837
        %840 = vset.pattern.permute.xlu0 22
        %841 = vperm.xlu0 %840, %v316
        %v842 = vpop.permute.xlu0 %841
        %v844 = vmul.f32 %v830, %v824
        %v845 = vmul.f32 %v834, %v825
        %v846 = vmul.f32 %v838, %v826
        %v847 = vmul.f32 %v842, %v827
        %v848 = vadd.f32 %v803, %v844
        %v849 = vadd.f32 %v804, %v845
        %v850 = vadd.f32 %v805, %v846
        %v851 = vadd.f32 %v806, %v847
        %852 = vrot.lane.b32.xlu0 %v305, 66
        %v853 = vpop.permute.xlu0 %852
        %854 = vrot.lane.b32.xlu0 %v307, 66
        %v855 = vpop.permute.xlu0 %854
        %856 = vrot.lane.b32.xlu0 %v309, 66
        %v857 = vpop.permute.xlu0 %856
        %858 = vrot.lane.b32.xlu0 %v311, 66
        %v859 = vpop.permute.xlu0 %858
        %860 = vrot.lane.b32.xlu0 %v306, 66
        %v861 = vpop.permute.xlu0 %860
        %862 = vrot.lane.b32.xlu0 %v308, 66
        %v863 = vpop.permute.xlu0 %862
        %864 = vrot.lane.b32.xlu0 %v310, 66
        %v865 = vpop.permute.xlu0 %864
        %866 = vrot.lane.b32.xlu0 %v312, 66
        %v867 = vpop.permute.xlu0 %866
        %vm868 = vcmp.lt.s32.totalorder %v318, 66
        %v869 = vsel %vm868, %v853, %v861
        %v870 = vsel %vm868, %v855, %v863
        %v871 = vsel %vm868, %v857, %v865
        %v872 = vsel %vm868, %v859, %v867
        %873 = vset.pattern.permute.xlu0 29
        %874 = vperm.xlu0 %873, %v313
        %v875 = vpop.permute.xlu0 %874
        %877 = vset.pattern.permute.xlu0 29
        %878 = vperm.xlu0 %877, %v314
        %v879 = vpop.permute.xlu0 %878
        %881 = vset.pattern.permute.xlu0 29
        %882 = vperm.xlu0 %881, %v315
        %v883 = vpop.permute.xlu0 %882
        %885 = vset.pattern.permute.xlu0 29
        %886 = vperm.xlu0 %885, %v316
        %v887 = vpop.permute.xlu0 %886
        %v889 = vmul.f32 %v875, %v869
        %v890 = vmul.f32 %v879, %v870
        %v891 = vmul.f32 %v883, %v871
        %v892 = vmul.f32 %v887, %v872
        %v893 = vadd.f32 %v848, %v889
        %v894 = vadd.f32 %v849, %v890
        %v895 = vadd.f32 %v850, %v891
        %v896 = vadd.f32 %v851, %v892
        %897 = vrot.lane.b32.xlu0 %v305, 50
        %v898 = vpop.permute.xlu0 %897
        %899 = vrot.lane.b32.xlu0 %v307, 50
        %v900 = vpop.permute.xlu0 %899
        %901 = vrot.lane.b32.xlu0 %v309, 50
        %v902 = vpop.permute.xlu0 %901
        %903 = vrot.lane.b32.xlu0 %v311, 50
        %v904 = vpop.permute.xlu0 %903
        %905 = vrot.lane.b32.xlu0 %v306, 50
        %v906 = vpop.permute.xlu0 %905
        %907 = vrot.lane.b32.xlu0 %v308, 50
        %v908 = vpop.permute.xlu0 %907
        %909 = vrot.lane.b32.xlu0 %v310, 50
        %v910 = vpop.permute.xlu0 %909
        %911 = vrot.lane.b32.xlu0 %v312, 50
        %v912 = vpop.permute.xlu0 %911
        %vm913 = vcmp.lt.s32.totalorder %v318, 50
        %v914 = vsel %vm913, %v898, %v906
        %v915 = vsel %vm913, %v900, %v908
        %v916 = vsel %vm913, %v902, %v910
        %v917 = vsel %vm913, %v904, %v912
        %918 = vset.pattern.permute.xlu0 36
        %919 = vperm.xlu0 %918, %v313
        %v920 = vpop.permute.xlu0 %919
        %922 = vset.pattern.permute.xlu0 36
        %923 = vperm.xlu0 %922, %v314
        %v924 = vpop.permute.xlu0 %923
        %926 = vset.pattern.permute.xlu0 36
        %927 = vperm.xlu0 %926, %v315
        %v928 = vpop.permute.xlu0 %927
        %930 = vset.pattern.permute.xlu0 36
        %931 = vperm.xlu0 %930, %v316
        %v932 = vpop.permute.xlu0 %931
        %v934 = vmul.f32 %v920, %v914
        %v935 = vmul.f32 %v924, %v915
        %v936 = vmul.f32 %v928, %v916
        %v937 = vmul.f32 %v932, %v917
        %v938 = vadd.f32 %v893, %v934
        %v939 = vadd.f32 %v894, %v935
        %v940 = vadd.f32 %v895, %v936
        %v941 = vadd.f32 %v896, %v937
        %942 = vrot.lane.b32.xlu0 %v305, 34
        %v943 = vpop.permute.xlu0 %942
        %944 = vrot.lane.b32.xlu0 %v307, 34
        %v945 = vpop.permute.xlu0 %944
        %946 = vrot.lane.b32.xlu0 %v309, 34
        %v947 = vpop.permute.xlu0 %946
        %948 = vrot.lane.b32.xlu0 %v311, 34
        %v949 = vpop.permute.xlu0 %948
        %950 = vrot.lane.b32.xlu0 %v306, 34
        %v951 = vpop.permute.xlu0 %950
        %952 = vrot.lane.b32.xlu0 %v308, 34
        %v953 = vpop.permute.xlu0 %952
        %954 = vrot.lane.b32.xlu0 %v310, 34
        %v955 = vpop.permute.xlu0 %954
        %956 = vrot.lane.b32.xlu0 %v312, 34
        %v957 = vpop.permute.xlu0 %956
        %vm958 = vcmp.lt.s32.totalorder %v318, 34
        %v959 = vsel %vm958, %v943, %v951
        %v960 = vsel %vm958, %v945, %v953
        %v961 = vsel %vm958, %v947, %v955
        %v962 = vsel %vm958, %v949, %v957
        %963 = vset.pattern.permute.xlu0 43
        %964 = vperm.xlu0 %963, %v313
        %v965 = vpop.permute.xlu0 %964
        %967 = vset.pattern.permute.xlu0 43
        %968 = vperm.xlu0 %967, %v314
        %v969 = vpop.permute.xlu0 %968
        %971 = vset.pattern.permute.xlu0 43
        %972 = vperm.xlu0 %971, %v315
        %v973 = vpop.permute.xlu0 %972
        %975 = vset.pattern.permute.xlu0 43
        %976 = vperm.xlu0 %975, %v316
        %v977 = vpop.permute.xlu0 %976
        %v979 = vmul.f32 %v965, %v959
        %v980 = vmul.f32 %v969, %v960
        %v981 = vmul.f32 %v973, %v961
        %v982 = vmul.f32 %v977, %v962
        %v983 = vadd.f32 %v938, %v979
        %v984 = vadd.f32 %v939, %v980
        %v985 = vadd.f32 %v940, %v981
        %v986 = vadd.f32 %v941, %v982
        %v987 = vsel %vm338, 1, 0
        %vm988 = vcmp.eq.s32.totalorder %v987, 1
        %v989 = vsel %vm988, %v983, 0.0
        %v990 = vsel %vm988, %v984, 0.0
        %v991 = vsel %vm988, %v985, 0.0
        %v992 = vsel %vm988, %v986, 0.0
        %993 = vrot.lane.b32.xlu0 %v305, 1
        %v994 = vpop.permute.xlu0 %993
        %995 = vrot.lane.b32.xlu0 %v307, 1
        %v996 = vpop.permute.xlu0 %995
        %997 = vrot.lane.b32.xlu0 %v309, 1
        %v998 = vpop.permute.xlu0 %997
        %999 = vrot.lane.b32.xlu0 %v311, 1
        %v1000 = vpop.permute.xlu0 %999
        %1001 = vrot.lane.b32.xlu0 %v306, 1
        %v1002 = vpop.permute.xlu0 %1001
        %1003 = vrot.lane.b32.xlu0 %v308, 1
        %v1004 = vpop.permute.xlu0 %1003
        %1005 = vrot.lane.b32.xlu0 %v310, 1
        %v1006 = vpop.permute.xlu0 %1005
        %1007 = vrot.lane.b32.xlu0 %v312, 1
        %v1008 = vpop.permute.xlu0 %1007
        %vm1009 = vcmp.lt.s32.totalorder %v318, 1
        %v1010 = vsel %vm1009, %v1002, %v994
        %v1011 = vsel %vm1009, %v1004, %v996
        %v1012 = vsel %vm1009, %v1006, %v998
        %v1013 = vsel %vm1009, %v1008, %v1000
        %1014 = vset.pattern.permute.xlu0 2
        %1015 = vperm.xlu0 %1014, %v313
        %v1016 = vpop.permute.xlu0 %1015
        %1018 = vset.pattern.permute.xlu0 2
        %1019 = vperm.xlu0 %1018, %v314
        %v1020 = vpop.permute.xlu0 %1019
        %1022 = vset.pattern.permute.xlu0 2
        %1023 = vperm.xlu0 %1022, %v315
        %v1024 = vpop.permute.xlu0 %1023
        %1026 = vset.pattern.permute.xlu0 2
        %1027 = vperm.xlu0 %1026, %v316
        %v1028 = vpop.permute.xlu0 %1027
        %v1030 = vmul.f32 %v1016, %v1010
        %v1031 = vmul.f32 %v1020, %v1011
        %v1032 = vmul.f32 %v1024, %v1012
        %v1033 = vmul.f32 %v1028, %v1013
        %1034 = vrot.lane.b32.xlu0 %v305, 113
        %v1035 = vpop.permute.xlu0 %1034
        %1036 = vrot.lane.b32.xlu0 %v307, 113
        %v1037 = vpop.permute.xlu0 %1036
        %1038 = vrot.lane.b32.xlu0 %v309, 113
        %v1039 = vpop.permute.xlu0 %1038
        %1040 = vrot.lane.b32.xlu0 %v311, 113
        %v1041 = vpop.permute.xlu0 %1040
        %1042 = vrot.lane.b32.xlu0 %v306, 113
        %v1043 = vpop.permute.xlu0 %1042
        %1044 = vrot.lane.b32.xlu0 %v308, 113
        %v1045 = vpop.permute.xlu0 %1044
        %1046 = vrot.lane.b32.xlu0 %v310, 113
        %v1047 = vpop.permute.xlu0 %1046
        %1048 = vrot.lane.b32.xlu0 %v312, 113
        %v1049 = vpop.permute.xlu0 %1048
        %vm1050 = vcmp.lt.s32.totalorder %v318, 113
        %v1051 = vsel %vm1050, %v1035, %v1043
        %v1052 = vsel %vm1050, %v1037, %v1045
        %v1053 = vsel %vm1050, %v1039, %v1047
        %v1054 = vsel %vm1050, %v1041, %v1049
        %1055 = vset.pattern.permute.xlu0 9
        %1056 = vperm.xlu0 %1055, %v313
        %v1057 = vpop.permute.xlu0 %1056
        %1059 = vset.pattern.permute.xlu0 9
        %1060 = vperm.xlu0 %1059, %v314
        %v1061 = vpop.permute.xlu0 %1060
        %1063 = vset.pattern.permute.xlu0 9
        %1064 = vperm.xlu0 %1063, %v315
        %v1065 = vpop.permute.xlu0 %1064
        %1067 = vset.pattern.permute.xlu0 9
        %1068 = vperm.xlu0 %1067, %v316
        %v1069 = vpop.permute.xlu0 %1068
        %v1071 = vmul.f32 %v1057, %v1051
        %v1072 = vmul.f32 %v1061, %v1052
        %v1073 = vmul.f32 %v1065, %v1053
        %v1074 = vmul.f32 %v1069, %v1054
        %v1075 = vadd.f32 %v1030, %v1071
        %v1076 = vadd.f32 %v1031, %v1072
        %v1077 = vadd.f32 %v1032, %v1073
        %v1078 = vadd.f32 %v1033, %v1074
        %1079 = vrot.lane.b32.xlu0 %v305, 97
        %v1080 = vpop.permute.xlu0 %1079
        %1081 = vrot.lane.b32.xlu0 %v307, 97
        %v1082 = vpop.permute.xlu0 %1081
        %1083 = vrot.lane.b32.xlu0 %v309, 97
        %v1084 = vpop.permute.xlu0 %1083
        %1085 = vrot.lane.b32.xlu0 %v311, 97
        %v1086 = vpop.permute.xlu0 %1085
        %1087 = vrot.lane.b32.xlu0 %v306, 97
        %v1088 = vpop.permute.xlu0 %1087
        %1089 = vrot.lane.b32.xlu0 %v308, 97
        %v1090 = vpop.permute.xlu0 %1089
        %1091 = vrot.lane.b32.xlu0 %v310, 97
        %v1092 = vpop.permute.xlu0 %1091
        %1093 = vrot.lane.b32.xlu0 %v312, 97
        %v1094 = vpop.permute.xlu0 %1093
        %vm1095 = vcmp.lt.s32.totalorder %v318, 97
        %v1096 = vsel %vm1095, %v1080, %v1088
        %v1097 = vsel %vm1095, %v1082, %v1090
        %v1098 = vsel %vm1095, %v1084, %v1092
        %v1099 = vsel %vm1095, %v1086, %v1094
        %1100 = vset.pattern.permute.xlu0 16
        %1101 = vperm.xlu0 %1100, %v313
        %v1102 = vpop.permute.xlu0 %1101
        %1104 = vset.pattern.permute.xlu0 16
        %1105 = vperm.xlu0 %1104, %v314
        %v1106 = vpop.permute.xlu0 %1105
        %1108 = vset.pattern.permute.xlu0 16
        %1109 = vperm.xlu0 %1108, %v315
        %v1110 = vpop.permute.xlu0 %1109
        %1112 = vset.pattern.permute.xlu0 16
        %1113 = vperm.xlu0 %1112, %v316
        %v1114 = vpop.permute.xlu0 %1113
        %v1116 = vmul.f32 %v1102, %v1096
        %v1117 = vmul.f32 %v1106, %v1097
        %v1118 = vmul.f32 %v1110, %v1098
        %v1119 = vmul.f32 %v1114, %v1099
        %v1120 = vadd.f32 %v1075, %v1116
        %v1121 = vadd.f32 %v1076, %v1117
        %v1122 = vadd.f32 %v1077, %v1118
        %v1123 = vadd.f32 %v1078, %v1119
        %1124 = vrot.lane.b32.xlu0 %v305, 81
        %v1125 = vpop.permute.xlu0 %1124
        %1126 = vrot.lane.b32.xlu0 %v307, 81
        %v1127 = vpop.permute.xlu0 %1126
        %1128 = vrot.lane.b32.xlu0 %v309, 81
        %v1129 = vpop.permute.xlu0 %1128
        %1130 = vrot.lane.b32.xlu0 %v311, 81
        %v1131 = vpop.permute.xlu0 %1130
        %1132 = vrot.lane.b32.xlu0 %v306, 81
        %v1133 = vpop.permute.xlu0 %1132
        %1134 = vrot.lane.b32.xlu0 %v308, 81
        %v1135 = vpop.permute.xlu0 %1134
        %1136 = vrot.lane.b32.xlu0 %v310, 81
        %v1137 = vpop.permute.xlu0 %1136
        %1138 = vrot.lane.b32.xlu0 %v312, 81
        %v1139 = vpop.permute.xlu0 %1138
        %vm1140 = vcmp.lt.s32.totalorder %v318, 81
        %v1141 = vsel %vm1140, %v1125, %v1133
        %v1142 = vsel %vm1140, %v1127, %v1135
        %v1143 = vsel %vm1140, %v1129, %v1137
        %v1144 = vsel %vm1140, %v1131, %v1139
        %1145 = vset.pattern.permute.xlu0 23
        %1146 = vperm.xlu0 %1145, %v313
        %v1147 = vpop.permute.xlu0 %1146
        %1149 = vset.pattern.permute.xlu0 23
        %1150 = vperm.xlu0 %1149, %v314
        %v1151 = vpop.permute.xlu0 %1150
        %1153 = vset.pattern.permute.xlu0 23
        %1154 = vperm.xlu0 %1153, %v315
        %v1155 = vpop.permute.xlu0 %1154
        %1157 = vset.pattern.permute.xlu0 23
        %1158 = vperm.xlu0 %1157, %v316
        %v1159 = vpop.permute.xlu0 %1158
        %v1161 = vmul.f32 %v1147, %v1141
        %v1162 = vmul.f32 %v1151, %v1142
        %v1163 = vmul.f32 %v1155, %v1143
        %v1164 = vmul.f32 %v1159, %v1144
        %v1165 = vadd.f32 %v1120, %v1161
        %v1166 = vadd.f32 %v1121, %v1162
        %v1167 = vadd.f32 %v1122, %v1163
        %v1168 = vadd.f32 %v1123, %v1164
        %1169 = vrot.lane.b32.xlu0 %v305, 65
        %v1170 = vpop.permute.xlu0 %1169
        %1171 = vrot.lane.b32.xlu0 %v307, 65
        %v1172 = vpop.permute.xlu0 %1171
        %1173 = vrot.lane.b32.xlu0 %v309, 65
        %v1174 = vpop.permute.xlu0 %1173
        %1175 = vrot.lane.b32.xlu0 %v311, 65
        %v1176 = vpop.permute.xlu0 %1175
        %1177 = vrot.lane.b32.xlu0 %v306, 65
        %v1178 = vpop.permute.xlu0 %1177
        %1179 = vrot.lane.b32.xlu0 %v308, 65
        %v1180 = vpop.permute.xlu0 %1179
        %1181 = vrot.lane.b32.xlu0 %v310, 65
        %v1182 = vpop.permute.xlu0 %1181
        %1183 = vrot.lane.b32.xlu0 %v312, 65
        %v1184 = vpop.permute.xlu0 %1183
        %vm1185 = vcmp.lt.s32.totalorder %v318, 65
        %v1186 = vsel %vm1185, %v1170, %v1178
        %v1187 = vsel %vm1185, %v1172, %v1180
        %v1188 = vsel %vm1185, %v1174, %v1182
        %v1189 = vsel %vm1185, %v1176, %v1184
        %1190 = vset.pattern.permute.xlu0 30
        %1191 = vperm.xlu0 %1190, %v313
        %v1192 = vpop.permute.xlu0 %1191
        %1194 = vset.pattern.permute.xlu0 30
        %1195 = vperm.xlu0 %1194, %v314
        %v1196 = vpop.permute.xlu0 %1195
        %1198 = vset.pattern.permute.xlu0 30
        %1199 = vperm.xlu0 %1198, %v315
        %v1200 = vpop.permute.xlu0 %1199
        %1202 = vset.pattern.permute.xlu0 30
        %1203 = vperm.xlu0 %1202, %v316
        %v1204 = vpop.permute.xlu0 %1203
        %v1206 = vmul.f32 %v1192, %v1186
        %v1207 = vmul.f32 %v1196, %v1187
        %v1208 = vmul.f32 %v1200, %v1188
        %v1209 = vmul.f32 %v1204, %v1189
        %v1210 = vadd.f32 %v1165, %v1206
        %v1211 = vadd.f32 %v1166, %v1207
        %v1212 = vadd.f32 %v1167, %v1208
        %v1213 = vadd.f32 %v1168, %v1209
        %1214 = vrot.lane.b32.xlu0 %v305, 49
        %v1215 = vpop.permute.xlu0 %1214
        %1216 = vrot.lane.b32.xlu0 %v307, 49
        %v1217 = vpop.permute.xlu0 %1216
        %1218 = vrot.lane.b32.xlu0 %v309, 49
        %v1219 = vpop.permute.xlu0 %1218
        %1220 = vrot.lane.b32.xlu0 %v311, 49
        %v1221 = vpop.permute.xlu0 %1220
        %1222 = vrot.lane.b32.xlu0 %v306, 49
        %v1223 = vpop.permute.xlu0 %1222
        %1224 = vrot.lane.b32.xlu0 %v308, 49
        %v1225 = vpop.permute.xlu0 %1224
        %1226 = vrot.lane.b32.xlu0 %v310, 49
        %v1227 = vpop.permute.xlu0 %1226
        %1228 = vrot.lane.b32.xlu0 %v312, 49
        %v1229 = vpop.permute.xlu0 %1228
        %vm1230 = vcmp.lt.s32.totalorder %v318, 49
        %v1231 = vsel %vm1230, %v1215, %v1223
        %v1232 = vsel %vm1230, %v1217, %v1225
        %v1233 = vsel %vm1230, %v1219, %v1227
        %v1234 = vsel %vm1230, %v1221, %v1229
        %1235 = vset.pattern.permute.xlu0 37
        %1236 = vperm.xlu0 %1235, %v313
        %v1237 = vpop.permute.xlu0 %1236
        %1239 = vset.pattern.permute.xlu0 37
        %1240 = vperm.xlu0 %1239, %v314
        %v1241 = vpop.permute.xlu0 %1240
        %1243 = vset.pattern.permute.xlu0 37
        %1244 = vperm.xlu0 %1243, %v315
        %v1245 = vpop.permute.xlu0 %1244
        %1247 = vset.pattern.permute.xlu0 37
        %1248 = vperm.xlu0 %1247, %v316
        %v1249 = vpop.permute.xlu0 %1248
        %v1251 = vmul.f32 %v1237, %v1231
        %v1252 = vmul.f32 %v1241, %v1232
        %v1253 = vmul.f32 %v1245, %v1233
        %v1254 = vmul.f32 %v1249, %v1234
        %v1255 = vadd.f32 %v1210, %v1251
        %v1256 = vadd.f32 %v1211, %v1252
        %v1257 = vadd.f32 %v1212, %v1253
        %v1258 = vadd.f32 %v1213, %v1254
        %1259 = vrot.lane.b32.xlu0 %v305, 33
        %v1260 = vpop.permute.xlu0 %1259
        %1261 = vrot.lane.b32.xlu0 %v307, 33
        %v1262 = vpop.permute.xlu0 %1261
        %1263 = vrot.lane.b32.xlu0 %v309, 33
        %v1264 = vpop.permute.xlu0 %1263
        %1265 = vrot.lane.b32.xlu0 %v311, 33
        %v1266 = vpop.permute.xlu0 %1265
        %1267 = vrot.lane.b32.xlu0 %v306, 33
        %v1268 = vpop.permute.xlu0 %1267
        %1269 = vrot.lane.b32.xlu0 %v308, 33
        %v1270 = vpop.permute.xlu0 %1269
        %1271 = vrot.lane.b32.xlu0 %v310, 33
        %v1272 = vpop.permute.xlu0 %1271
        %1273 = vrot.lane.b32.xlu0 %v312, 33
        %v1274 = vpop.permute.xlu0 %1273
        %vm1275 = vcmp.lt.s32.totalorder %v318, 33
        %v1276 = vsel %vm1275, %v1260, %v1268
        %v1277 = vsel %vm1275, %v1262, %v1270
        %v1278 = vsel %vm1275, %v1264, %v1272
        %v1279 = vsel %vm1275, %v1266, %v1274
        %1280 = vset.pattern.permute.xlu0 44
        %1281 = vperm.xlu0 %1280, %v313
        %v1282 = vpop.permute.xlu0 %1281
        %1284 = vset.pattern.permute.xlu0 44
        %1285 = vperm.xlu0 %1284, %v314
        %v1286 = vpop.permute.xlu0 %1285
        %1288 = vset.pattern.permute.xlu0 44
        %1289 = vperm.xlu0 %1288, %v315
        %v1290 = vpop.permute.xlu0 %1289
        %1292 = vset.pattern.permute.xlu0 44
        %1293 = vperm.xlu0 %1292, %v316
        %v1294 = vpop.permute.xlu0 %1293
        %v1296 = vmul.f32 %v1282, %v1276
        %v1297 = vmul.f32 %v1286, %v1277
        %v1298 = vmul.f32 %v1290, %v1278
        %v1299 = vmul.f32 %v1294, %v1279
        %v1300 = vadd.f32 %v1255, %v1296
        %v1301 = vadd.f32 %v1256, %v1297
        %v1302 = vadd.f32 %v1257, %v1298
        %v1303 = vadd.f32 %v1258, %v1299
        %v1304 = vsel %vm342, 1, 0
        %vm1305 = vcmp.eq.s32.totalorder %v1304, 1
        %v1306 = vsel %vm1305, %v1300, 0.0
        %v1307 = vsel %vm1305, %v1301, 0.0
        %v1308 = vsel %vm1305, %v1302, 0.0
        %v1309 = vsel %vm1305, %v1303, 0.0
        %1310 = vset.pattern.permute.xlu0 3
        %1311 = vperm.xlu0 %1310, %v313
        %v1312 = vpop.permute.xlu0 %1311
        %1314 = vset.pattern.permute.xlu0 3
        %1315 = vperm.xlu0 %1314, %v314
        %v1316 = vpop.permute.xlu0 %1315
        %1318 = vset.pattern.permute.xlu0 3
        %1319 = vperm.xlu0 %1318, %v315
        %v1320 = vpop.permute.xlu0 %1319
        %1322 = vset.pattern.permute.xlu0 3
        %1323 = vperm.xlu0 %1322, %v316
        %v1324 = vpop.permute.xlu0 %1323
        %v1326 = vmul.f32 %v1312, %v305
        %v1327 = vmul.f32 %v1316, %v307
        %v1328 = vmul.f32 %v1320, %v309
        %v1329 = vmul.f32 %v1324, %v311
        %1330 = vrot.lane.b32.xlu0 %v305, 112
        %v1331 = vpop.permute.xlu0 %1330
        %1332 = vrot.lane.b32.xlu0 %v307, 112
        %v1333 = vpop.permute.xlu0 %1332
        %1334 = vrot.lane.b32.xlu0 %v309, 112
        %v1335 = vpop.permute.xlu0 %1334
        %1336 = vrot.lane.b32.xlu0 %v311, 112
        %v1337 = vpop.permute.xlu0 %1336
        %1338 = vrot.lane.b32.xlu0 %v306, 112
        %v1339 = vpop.permute.xlu0 %1338
        %1340 = vrot.lane.b32.xlu0 %v308, 112
        %v1341 = vpop.permute.xlu0 %1340
        %1342 = vrot.lane.b32.xlu0 %v310, 112
        %v1343 = vpop.permute.xlu0 %1342
        %1344 = vrot.lane.b32.xlu0 %v312, 112
        %v1345 = vpop.permute.xlu0 %1344
        %vm1346 = vcmp.lt.s32.totalorder %v318, 112
        %v1347 = vsel %vm1346, %v1331, %v1339
        %v1348 = vsel %vm1346, %v1333, %v1341
        %v1349 = vsel %vm1346, %v1335, %v1343
        %v1350 = vsel %vm1346, %v1337, %v1345
        %1351 = vset.pattern.permute.xlu0 10
        %1352 = vperm.xlu0 %1351, %v313
        %v1353 = vpop.permute.xlu0 %1352
        %1355 = vset.pattern.permute.xlu0 10
        %1356 = vperm.xlu0 %1355, %v314
        %v1357 = vpop.permute.xlu0 %1356
        %1359 = vset.pattern.permute.xlu0 10
        %1360 = vperm.xlu0 %1359, %v315
        %v1361 = vpop.permute.xlu0 %1360
        %1363 = vset.pattern.permute.xlu0 10
        %1364 = vperm.xlu0 %1363, %v316
        %v1365 = vpop.permute.xlu0 %1364
        %v1367 = vmul.f32 %v1353, %v1347
        %v1368 = vmul.f32 %v1357, %v1348
        %v1369 = vmul.f32 %v1361, %v1349
        %v1370 = vmul.f32 %v1365, %v1350
        %v1371 = vadd.f32 %v1326, %v1367
        %v1372 = vadd.f32 %v1327, %v1368
        %v1373 = vadd.f32 %v1328, %v1369
        %v1374 = vadd.f32 %v1329, %v1370
        %1375 = vrot.lane.b32.xlu0 %v305, 96
        %v1376 = vpop.permute.xlu0 %1375
        %1377 = vrot.lane.b32.xlu0 %v307, 96
        %v1378 = vpop.permute.xlu0 %1377
        %1379 = vrot.lane.b32.xlu0 %v309, 96
        %v1380 = vpop.permute.xlu0 %1379
        %1381 = vrot.lane.b32.xlu0 %v311, 96
        %v1382 = vpop.permute.xlu0 %1381
        %1383 = vrot.lane.b32.xlu0 %v306, 96
        %v1384 = vpop.permute.xlu0 %1383
        %1385 = vrot.lane.b32.xlu0 %v308, 96
        %v1386 = vpop.permute.xlu0 %1385
        %1387 = vrot.lane.b32.xlu0 %v310, 96
        %v1388 = vpop.permute.xlu0 %1387
        %1389 = vrot.lane.b32.xlu0 %v312, 96
        %v1390 = vpop.permute.xlu0 %1389
        %vm1391 = vcmp.lt.s32.totalorder %v318, 96
        %v1392 = vsel %vm1391, %v1376, %v1384
        %v1393 = vsel %vm1391, %v1378, %v1386
        %v1394 = vsel %vm1391, %v1380, %v1388
        %v1395 = vsel %vm1391, %v1382, %v1390
        %1396 = vset.pattern.permute.xlu0 17
        %1397 = vperm.xlu0 %1396, %v313
        %v1398 = vpop.permute.xlu0 %1397
        %1400 = vset.pattern.permute.xlu0 17
        %1401 = vperm.xlu0 %1400, %v314
        %v1402 = vpop.permute.xlu0 %1401
        %1404 = vset.pattern.permute.xlu0 17
        %1405 = vperm.xlu0 %1404, %v315
        %v1406 = vpop.permute.xlu0 %1405
        %1408 = vset.pattern.permute.xlu0 17
        %1409 = vperm.xlu0 %1408, %v316
        %v1410 = vpop.permute.xlu0 %1409
        %v1412 = vmul.f32 %v1398, %v1392
        %v1413 = vmul.f32 %v1402, %v1393
        %v1414 = vmul.f32 %v1406, %v1394
        %v1415 = vmul.f32 %v1410, %v1395
        %v1416 = vadd.f32 %v1371, %v1412
        %v1417 = vadd.f32 %v1372, %v1413
        %v1418 = vadd.f32 %v1373, %v1414
        %v1419 = vadd.f32 %v1374, %v1415
        %1420 = vrot.lane.b32.xlu0 %v305, 80
        %v1421 = vpop.permute.xlu0 %1420
        %1422 = vrot.lane.b32.xlu0 %v307, 80
        %v1423 = vpop.permute.xlu0 %1422
        %1424 = vrot.lane.b32.xlu0 %v309, 80
        %v1425 = vpop.permute.xlu0 %1424
        %1426 = vrot.lane.b32.xlu0 %v311, 80
        %v1427 = vpop.permute.xlu0 %1426
        %1428 = vrot.lane.b32.xlu0 %v306, 80
        %v1429 = vpop.permute.xlu0 %1428
        %1430 = vrot.lane.b32.xlu0 %v308, 80
        %v1431 = vpop.permute.xlu0 %1430
        %1432 = vrot.lane.b32.xlu0 %v310, 80
        %v1433 = vpop.permute.xlu0 %1432
        %1434 = vrot.lane.b32.xlu0 %v312, 80
        %v1435 = vpop.permute.xlu0 %1434
        %vm1436 = vcmp.lt.s32.totalorder %v318, 80
        %v1437 = vsel %vm1436, %v1421, %v1429
        %v1438 = vsel %vm1436, %v1423, %v1431
        %v1439 = vsel %vm1436, %v1425, %v1433
        %v1440 = vsel %vm1436, %v1427, %v1435
        %1441 = vset.pattern.permute.xlu0 24
        %1442 = vperm.xlu0 %1441, %v313
        %v1443 = vpop.permute.xlu0 %1442
        %1445 = vset.pattern.permute.xlu0 24
        %1446 = vperm.xlu0 %1445, %v314
        %v1447 = vpop.permute.xlu0 %1446
        %1449 = vset.pattern.permute.xlu0 24
        %1450 = vperm.xlu0 %1449, %v315
        %v1451 = vpop.permute.xlu0 %1450
        %1453 = vset.pattern.permute.xlu0 24
        %1454 = vperm.xlu0 %1453, %v316
        %v1455 = vpop.permute.xlu0 %1454
        %v1457 = vmul.f32 %v1443, %v1437
        %v1458 = vmul.f32 %v1447, %v1438
        %v1459 = vmul.f32 %v1451, %v1439
        %v1460 = vmul.f32 %v1455, %v1440
        %v1461 = vadd.f32 %v1416, %v1457
        %v1462 = vadd.f32 %v1417, %v1458
        %v1463 = vadd.f32 %v1418, %v1459
        %v1464 = vadd.f32 %v1419, %v1460
        %1465 = vrot.lane.b32.xlu0 %v305, 64
        %v1466 = vpop.permute.xlu0 %1465
        %1467 = vrot.lane.b32.xlu0 %v307, 64
        %v1468 = vpop.permute.xlu0 %1467
        %1469 = vrot.lane.b32.xlu0 %v309, 64
        %v1470 = vpop.permute.xlu0 %1469
        %1471 = vrot.lane.b32.xlu0 %v311, 64
        %v1472 = vpop.permute.xlu0 %1471
        %1473 = vrot.lane.b32.xlu0 %v306, 64
        %v1474 = vpop.permute.xlu0 %1473
        %1475 = vrot.lane.b32.xlu0 %v308, 64
        %v1476 = vpop.permute.xlu0 %1475
        %1477 = vrot.lane.b32.xlu0 %v310, 64
        %v1478 = vpop.permute.xlu0 %1477
        %1479 = vrot.lane.b32.xlu0 %v312, 64
        %v1480 = vpop.permute.xlu0 %1479
        %vm1481 = vcmp.lt.s32.totalorder %v318, 64
        %v1482 = vsel %vm1481, %v1466, %v1474
        %v1483 = vsel %vm1481, %v1468, %v1476
        %v1484 = vsel %vm1481, %v1470, %v1478
        %v1485 = vsel %vm1481, %v1472, %v1480
        %1486 = vset.pattern.permute.xlu0 31
        %1487 = vperm.xlu0 %1486, %v313
        %v1488 = vpop.permute.xlu0 %1487
        %1490 = vset.pattern.permute.xlu0 31
        %1491 = vperm.xlu0 %1490, %v314
        %v1492 = vpop.permute.xlu0 %1491
        %1494 = vset.pattern.permute.xlu0 31
        %1495 = vperm.xlu0 %1494, %v315
        %v1496 = vpop.permute.xlu0 %1495
        %1498 = vset.pattern.permute.xlu0 31
        %1499 = vperm.xlu0 %1498, %v316
        %v1500 = vpop.permute.xlu0 %1499
        %v1502 = vmul.f32 %v1488, %v1482
        %v1503 = vmul.f32 %v1492, %v1483
        %v1504 = vmul.f32 %v1496, %v1484
        %v1505 = vmul.f32 %v1500, %v1485
        %v1506 = vadd.f32 %v1461, %v1502
        %v1507 = vadd.f32 %v1462, %v1503
        %v1508 = vadd.f32 %v1463, %v1504
        %v1509 = vadd.f32 %v1464, %v1505
        %1510 = vrot.lane.b32.xlu0 %v305, 48
        %v1511 = vpop.permute.xlu0 %1510
        %1512 = vrot.lane.b32.xlu0 %v307, 48
        %v1513 = vpop.permute.xlu0 %1512
        %1514 = vrot.lane.b32.xlu0 %v309, 48
        %v1515 = vpop.permute.xlu0 %1514
        %1516 = vrot.lane.b32.xlu0 %v311, 48
        %v1517 = vpop.permute.xlu0 %1516
        %1518 = vrot.lane.b32.xlu0 %v306, 48
        %v1519 = vpop.permute.xlu0 %1518
        %1520 = vrot.lane.b32.xlu0 %v308, 48
        %v1521 = vpop.permute.xlu0 %1520
        %1522 = vrot.lane.b32.xlu0 %v310, 48
        %v1523 = vpop.permute.xlu0 %1522
        %1524 = vrot.lane.b32.xlu0 %v312, 48
        %v1525 = vpop.permute.xlu0 %1524
        %vm1526 = vcmp.lt.s32.totalorder %v318, 48
        %v1527 = vsel %vm1526, %v1511, %v1519
        %v1528 = vsel %vm1526, %v1513, %v1521
        %v1529 = vsel %vm1526, %v1515, %v1523
        %v1530 = vsel %vm1526, %v1517, %v1525
        %1531 = vset.pattern.permute.xlu0 38
        %1532 = vperm.xlu0 %1531, %v313
        %v1533 = vpop.permute.xlu0 %1532
        %1535 = vset.pattern.permute.xlu0 38
        %1536 = vperm.xlu0 %1535, %v314
        %v1537 = vpop.permute.xlu0 %1536
        %1539 = vset.pattern.permute.xlu0 38
        %1540 = vperm.xlu0 %1539, %v315
        %v1541 = vpop.permute.xlu0 %1540
        %1543 = vset.pattern.permute.xlu0 38
        %1544 = vperm.xlu0 %1543, %v316
        %v1545 = vpop.permute.xlu0 %1544
        %v1547 = vmul.f32 %v1533, %v1527
        %v1548 = vmul.f32 %v1537, %v1528
        %v1549 = vmul.f32 %v1541, %v1529
        %v1550 = vmul.f32 %v1545, %v1530
        %v1551 = vadd.f32 %v1506, %v1547
        %v1552 = vadd.f32 %v1507, %v1548
        %v1553 = vadd.f32 %v1508, %v1549
        %v1554 = vadd.f32 %v1509, %v1550
        %1555 = vrot.lane.b32.xlu0 %v305, 32
        %v1556 = vpop.permute.xlu0 %1555
        %1557 = vrot.lane.b32.xlu0 %v307, 32
        %v1558 = vpop.permute.xlu0 %1557
        %1559 = vrot.lane.b32.xlu0 %v309, 32
        %v1560 = vpop.permute.xlu0 %1559
        %1561 = vrot.lane.b32.xlu0 %v311, 32
        %v1562 = vpop.permute.xlu0 %1561
        %1563 = vrot.lane.b32.xlu0 %v306, 32
        %v1564 = vpop.permute.xlu0 %1563
        %1565 = vrot.lane.b32.xlu0 %v308, 32
        %v1566 = vpop.permute.xlu0 %1565
        %1567 = vrot.lane.b32.xlu0 %v310, 32
        %v1568 = vpop.permute.xlu0 %1567
        %1569 = vrot.lane.b32.xlu0 %v312, 32
        %v1570 = vpop.permute.xlu0 %1569
        %vm1571 = vcmp.lt.s32.totalorder %v318, 32
        %v1572 = vsel %vm1571, %v1556, %v1564
        %v1573 = vsel %vm1571, %v1558, %v1566
        %v1574 = vsel %vm1571, %v1560, %v1568
        %v1575 = vsel %vm1571, %v1562, %v1570
        %1576 = vset.pattern.permute.xlu0 45
        %1577 = vperm.xlu0 %1576, %v313
        %v1578 = vpop.permute.xlu0 %1577
        %1580 = vset.pattern.permute.xlu0 45
        %1581 = vperm.xlu0 %1580, %v314
        %v1582 = vpop.permute.xlu0 %1581
        %1584 = vset.pattern.permute.xlu0 45
        %1585 = vperm.xlu0 %1584, %v315
        %v1586 = vpop.permute.xlu0 %1585
        %1588 = vset.pattern.permute.xlu0 45
        %1589 = vperm.xlu0 %1588, %v316
        %v1590 = vpop.permute.xlu0 %1589
        %v1592 = vmul.f32 %v1578, %v1572
        %v1593 = vmul.f32 %v1582, %v1573
        %v1594 = vmul.f32 %v1586, %v1574
        %v1595 = vmul.f32 %v1590, %v1575
        %v1596 = vadd.f32 %v1551, %v1592
        %v1597 = vadd.f32 %v1552, %v1593
        %v1598 = vadd.f32 %v1553, %v1594
        %v1599 = vadd.f32 %v1554, %v1595
        %1600 = vrot.lane.b32.xlu0 %v305, 127
        %v1601 = vpop.permute.xlu0 %1600
        %1602 = vrot.lane.b32.xlu0 %v307, 127
        %v1603 = vpop.permute.xlu0 %1602
        %1604 = vrot.lane.b32.xlu0 %v309, 127
        %v1605 = vpop.permute.xlu0 %1604
        %1606 = vrot.lane.b32.xlu0 %v311, 127
        %v1607 = vpop.permute.xlu0 %1606
        %1608 = vrot.lane.b32.xlu0 %v306, 127
        %v1609 = vpop.permute.xlu0 %1608
        %1610 = vrot.lane.b32.xlu0 %v308, 127
        %v1611 = vpop.permute.xlu0 %1610
        %1612 = vrot.lane.b32.xlu0 %v310, 127
        %v1613 = vpop.permute.xlu0 %1612
        %1614 = vrot.lane.b32.xlu0 %v312, 127
        %v1615 = vpop.permute.xlu0 %1614
        %vm1616 = vcmp.lt.s32.totalorder %v318, 127
        %v1617 = vsel %vm1616, %v1601, %v1609
        %v1618 = vsel %vm1616, %v1603, %v1611
        %v1619 = vsel %vm1616, %v1605, %v1613
        %v1620 = vsel %vm1616, %v1607, %v1615
        %1621 = vset.pattern.permute.xlu0 4
        %1622 = vperm.xlu0 %1621, %v313
        %v1623 = vpop.permute.xlu0 %1622
        %1625 = vset.pattern.permute.xlu0 4
        %1626 = vperm.xlu0 %1625, %v314
        %v1627 = vpop.permute.xlu0 %1626
        %1629 = vset.pattern.permute.xlu0 4
        %1630 = vperm.xlu0 %1629, %v315
        %v1631 = vpop.permute.xlu0 %1630
        %1633 = vset.pattern.permute.xlu0 4
        %1634 = vperm.xlu0 %1633, %v316
        %v1635 = vpop.permute.xlu0 %1634
        %v1637 = vmul.f32 %v1623, %v1617
        %v1638 = vmul.f32 %v1627, %v1618
        %v1639 = vmul.f32 %v1631, %v1619
        %v1640 = vmul.f32 %v1635, %v1620
        %1641 = vrot.lane.b32.xlu0 %v305, 111
        %v1642 = vpop.permute.xlu0 %1641
        %1643 = vrot.lane.b32.xlu0 %v307, 111
        %v1644 = vpop.permute.xlu0 %1643
        %1645 = vrot.lane.b32.xlu0 %v309, 111
        %v1646 = vpop.permute.xlu0 %1645
        %1647 = vrot.lane.b32.xlu0 %v311, 111
        %v1648 = vpop.permute.xlu0 %1647
        %1649 = vrot.lane.b32.xlu0 %v306, 111
        %v1650 = vpop.permute.xlu0 %1649
        %1651 = vrot.lane.b32.xlu0 %v308, 111
        %v1652 = vpop.permute.xlu0 %1651
        %1653 = vrot.lane.b32.xlu0 %v310, 111
        %v1654 = vpop.permute.xlu0 %1653
        %1655 = vrot.lane.b32.xlu0 %v312, 111
        %v1656 = vpop.permute.xlu0 %1655
        %vm1657 = vcmp.lt.s32.totalorder %v318, 111
        %v1658 = vsel %vm1657, %v1642, %v1650
        %v1659 = vsel %vm1657, %v1644, %v1652
        %v1660 = vsel %vm1657, %v1646, %v1654
        %v1661 = vsel %vm1657, %v1648, %v1656
        %1662 = vset.pattern.permute.xlu0 11
        %1663 = vperm.xlu0 %1662, %v313
        %v1664 = vpop.permute.xlu0 %1663
        %1666 = vset.pattern.permute.xlu0 11
        %1667 = vperm.xlu0 %1666, %v314
        %v1668 = vpop.permute.xlu0 %1667
        %1670 = vset.pattern.permute.xlu0 11
        %1671 = vperm.xlu0 %1670, %v315
        %v1672 = vpop.permute.xlu0 %1671
        %1674 = vset.pattern.permute.xlu0 11
        %1675 = vperm.xlu0 %1674, %v316
        %v1676 = vpop.permute.xlu0 %1675
        %v1678 = vmul.f32 %v1664, %v1658
        %v1679 = vmul.f32 %v1668, %v1659
        %v1680 = vmul.f32 %v1672, %v1660
        %v1681 = vmul.f32 %v1676, %v1661
        %v1682 = vadd.f32 %v1637, %v1678
        %v1683 = vadd.f32 %v1638, %v1679
        %v1684 = vadd.f32 %v1639, %v1680
        %v1685 = vadd.f32 %v1640, %v1681
        %1686 = vrot.lane.b32.xlu0 %v305, 95
        %v1687 = vpop.permute.xlu0 %1686
        %1688 = vrot.lane.b32.xlu0 %v307, 95
        %v1689 = vpop.permute.xlu0 %1688
        %1690 = vrot.lane.b32.xlu0 %v309, 95
        %v1691 = vpop.permute.xlu0 %1690
        %1692 = vrot.lane.b32.xlu0 %v311, 95
        %v1693 = vpop.permute.xlu0 %1692
        %1694 = vrot.lane.b32.xlu0 %v306, 95
        %v1695 = vpop.permute.xlu0 %1694
        %1696 = vrot.lane.b32.xlu0 %v308, 95
        %v1697 = vpop.permute.xlu0 %1696
        %1698 = vrot.lane.b32.xlu0 %v310, 95
        %v1699 = vpop.permute.xlu0 %1698
        %1700 = vrot.lane.b32.xlu0 %v312, 95
        %v1701 = vpop.permute.xlu0 %1700
        %vm1702 = vcmp.lt.s32.totalorder %v318, 95
        %v1703 = vsel %vm1702, %v1687, %v1695
        %v1704 = vsel %vm1702, %v1689, %v1697
        %v1705 = vsel %vm1702, %v1691, %v1699
        %v1706 = vsel %vm1702, %v1693, %v1701
        %1707 = vset.pattern.permute.xlu0 18
        %1708 = vperm.xlu0 %1707, %v313
        %v1709 = vpop.permute.xlu0 %1708
        %1711 = vset.pattern.permute.xlu0 18
        %1712 = vperm.xlu0 %1711, %v314
        %v1713 = vpop.permute.xlu0 %1712
        %1715 = vset.pattern.permute.xlu0 18
        %1716 = vperm.xlu0 %1715, %v315
        %v1717 = vpop.permute.xlu0 %1716
        %1719 = vset.pattern.permute.xlu0 18
        %1720 = vperm.xlu0 %1719, %v316
        %v1721 = vpop.permute.xlu0 %1720
        %v1723 = vmul.f32 %v1709, %v1703
        %v1724 = vmul.f32 %v1713, %v1704
        %v1725 = vmul.f32 %v1717, %v1705
        %v1726 = vmul.f32 %v1721, %v1706
        %v1727 = vadd.f32 %v1682, %v1723
        %v1728 = vadd.f32 %v1683, %v1724
        %v1729 = vadd.f32 %v1684, %v1725
        %v1730 = vadd.f32 %v1685, %v1726
        %1731 = vrot.lane.b32.xlu0 %v305, 79
        %v1732 = vpop.permute.xlu0 %1731
        %1733 = vrot.lane.b32.xlu0 %v307, 79
        %v1734 = vpop.permute.xlu0 %1733
        %1735 = vrot.lane.b32.xlu0 %v309, 79
        %v1736 = vpop.permute.xlu0 %1735
        %1737 = vrot.lane.b32.xlu0 %v311, 79
        %v1738 = vpop.permute.xlu0 %1737
        %1739 = vrot.lane.b32.xlu0 %v306, 79
        %v1740 = vpop.permute.xlu0 %1739
        %1741 = vrot.lane.b32.xlu0 %v308, 79
        %v1742 = vpop.permute.xlu0 %1741
        %1743 = vrot.lane.b32.xlu0 %v310, 79
        %v1744 = vpop.permute.xlu0 %1743
        %1745 = vrot.lane.b32.xlu0 %v312, 79
        %v1746 = vpop.permute.xlu0 %1745
        %vm1747 = vcmp.lt.s32.totalorder %v318, 79
        %v1748 = vsel %vm1747, %v1732, %v1740
        %v1749 = vsel %vm1747, %v1734, %v1742
        %v1750 = vsel %vm1747, %v1736, %v1744
        %v1751 = vsel %vm1747, %v1738, %v1746
        %1752 = vset.pattern.permute.xlu0 25
        %1753 = vperm.xlu0 %1752, %v313
        %v1754 = vpop.permute.xlu0 %1753
        %1756 = vset.pattern.permute.xlu0 25
        %1757 = vperm.xlu0 %1756, %v314
        %v1758 = vpop.permute.xlu0 %1757
        %1760 = vset.pattern.permute.xlu0 25
        %1761 = vperm.xlu0 %1760, %v315
        %v1762 = vpop.permute.xlu0 %1761
        %1764 = vset.pattern.permute.xlu0 25
        %1765 = vperm.xlu0 %1764, %v316
        %v1766 = vpop.permute.xlu0 %1765
        %v1768 = vmul.f32 %v1754, %v1748
        %v1769 = vmul.f32 %v1758, %v1749
        %v1770 = vmul.f32 %v1762, %v1750
        %v1771 = vmul.f32 %v1766, %v1751
        %v1772 = vadd.f32 %v1727, %v1768
        %v1773 = vadd.f32 %v1728, %v1769
        %v1774 = vadd.f32 %v1729, %v1770
        %v1775 = vadd.f32 %v1730, %v1771
        %1776 = vrot.lane.b32.xlu0 %v305, 63
        %v1777 = vpop.permute.xlu0 %1776
        %1778 = vrot.lane.b32.xlu0 %v307, 63
        %v1779 = vpop.permute.xlu0 %1778
        %1780 = vrot.lane.b32.xlu0 %v309, 63
        %v1781 = vpop.permute.xlu0 %1780
        %1782 = vrot.lane.b32.xlu0 %v311, 63
        %v1783 = vpop.permute.xlu0 %1782
        %1784 = vrot.lane.b32.xlu0 %v306, 63
        %v1785 = vpop.permute.xlu0 %1784
        %1786 = vrot.lane.b32.xlu0 %v308, 63
        %v1787 = vpop.permute.xlu0 %1786
        %1788 = vrot.lane.b32.xlu0 %v310, 63
        %v1789 = vpop.permute.xlu0 %1788
        %1790 = vrot.lane.b32.xlu0 %v312, 63
        %v1791 = vpop.permute.xlu0 %1790
        %vm1792 = vcmp.lt.s32.totalorder %v318, 63
        %v1793 = vsel %vm1792, %v1777, %v1785
        %v1794 = vsel %vm1792, %v1779, %v1787
        %v1795 = vsel %vm1792, %v1781, %v1789
        %v1796 = vsel %vm1792, %v1783, %v1791
        %1797 = vset.pattern.permute.xlu0 32
        %1798 = vperm.xlu0 %1797, %v313
        %v1799 = vpop.permute.xlu0 %1798
        %1801 = vset.pattern.permute.xlu0 32
        %1802 = vperm.xlu0 %1801, %v314
        %v1803 = vpop.permute.xlu0 %1802
        %1805 = vset.pattern.permute.xlu0 32
        %1806 = vperm.xlu0 %1805, %v315
        %v1807 = vpop.permute.xlu0 %1806
        %1809 = vset.pattern.permute.xlu0 32
        %1810 = vperm.xlu0 %1809, %v316
        %v1811 = vpop.permute.xlu0 %1810
        %v1813 = vmul.f32 %v1799, %v1793
        %v1814 = vmul.f32 %v1803, %v1794
        %v1815 = vmul.f32 %v1807, %v1795
        %v1816 = vmul.f32 %v1811, %v1796
        %v1817 = vadd.f32 %v1772, %v1813
        %v1818 = vadd.f32 %v1773, %v1814
        %v1819 = vadd.f32 %v1774, %v1815
        %v1820 = vadd.f32 %v1775, %v1816
        %1821 = vrot.lane.b32.xlu0 %v305, 47
        %v1822 = vpop.permute.xlu0 %1821
        %1823 = vrot.lane.b32.xlu0 %v307, 47
        %v1824 = vpop.permute.xlu0 %1823
        %1825 = vrot.lane.b32.xlu0 %v309, 47
        %v1826 = vpop.permute.xlu0 %1825
        %1827 = vrot.lane.b32.xlu0 %v311, 47
        %v1828 = vpop.permute.xlu0 %1827
        %1829 = vrot.lane.b32.xlu0 %v306, 47
        %v1830 = vpop.permute.xlu0 %1829
        %1831 = vrot.lane.b32.xlu0 %v308, 47
        %v1832 = vpop.permute.xlu0 %1831
        %1833 = vrot.lane.b32.xlu0 %v310, 47
        %v1834 = vpop.permute.xlu0 %1833
        %1835 = vrot.lane.b32.xlu0 %v312, 47
        %v1836 = vpop.permute.xlu0 %1835
        %vm1837 = vcmp.lt.s32.totalorder %v318, 47
        %v1838 = vsel %vm1837, %v1822, %v1830
        %v1839 = vsel %vm1837, %v1824, %v1832
        %v1840 = vsel %vm1837, %v1826, %v1834
        %v1841 = vsel %vm1837, %v1828, %v1836
        %1842 = vset.pattern.permute.xlu0 39
        %1843 = vperm.xlu0 %1842, %v313
        %v1844 = vpop.permute.xlu0 %1843
        %1846 = vset.pattern.permute.xlu0 39
        %1847 = vperm.xlu0 %1846, %v314
        %v1848 = vpop.permute.xlu0 %1847
        %1850 = vset.pattern.permute.xlu0 39
        %1851 = vperm.xlu0 %1850, %v315
        %v1852 = vpop.permute.xlu0 %1851
        %1854 = vset.pattern.permute.xlu0 39
        %1855 = vperm.xlu0 %1854, %v316
        %v1856 = vpop.permute.xlu0 %1855
        %v1858 = vmul.f32 %v1844, %v1838
        %v1859 = vmul.f32 %v1848, %v1839
        %v1860 = vmul.f32 %v1852, %v1840
        %v1861 = vmul.f32 %v1856, %v1841
        %v1862 = vadd.f32 %v1817, %v1858
        %v1863 = vadd.f32 %v1818, %v1859
        %v1864 = vadd.f32 %v1819, %v1860
        %v1865 = vadd.f32 %v1820, %v1861
        %1866 = vrot.lane.b32.xlu0 %v305, 31
        %v1867 = vpop.permute.xlu0 %1866
        %1868 = vrot.lane.b32.xlu0 %v307, 31
        %v1869 = vpop.permute.xlu0 %1868
        %1870 = vrot.lane.b32.xlu0 %v309, 31
        %v1871 = vpop.permute.xlu0 %1870
        %1872 = vrot.lane.b32.xlu0 %v311, 31
        %v1873 = vpop.permute.xlu0 %1872
        %1874 = vrot.lane.b32.xlu0 %v306, 31
        %v1875 = vpop.permute.xlu0 %1874
        %1876 = vrot.lane.b32.xlu0 %v308, 31
        %v1877 = vpop.permute.xlu0 %1876
        %1878 = vrot.lane.b32.xlu0 %v310, 31
        %v1879 = vpop.permute.xlu0 %1878
        %1880 = vrot.lane.b32.xlu0 %v312, 31
        %v1881 = vpop.permute.xlu0 %1880
        %vm1882 = vcmp.lt.s32.totalorder %v318, 31
        %v1883 = vsel %vm1882, %v1867, %v1875
        %v1884 = vsel %vm1882, %v1869, %v1877
        %v1885 = vsel %vm1882, %v1871, %v1879
        %v1886 = vsel %vm1882, %v1873, %v1881
        %1887 = vset.pattern.permute.xlu0 46
        %1888 = vperm.xlu0 %1887, %v313
        %v1889 = vpop.permute.xlu0 %1888
        %1891 = vset.pattern.permute.xlu0 46
        %1892 = vperm.xlu0 %1891, %v314
        %v1893 = vpop.permute.xlu0 %1892
        %1895 = vset.pattern.permute.xlu0 46
        %1896 = vperm.xlu0 %1895, %v315
        %v1897 = vpop.permute.xlu0 %1896
        %1899 = vset.pattern.permute.xlu0 46
        %1900 = vperm.xlu0 %1899, %v316
        %v1901 = vpop.permute.xlu0 %1900
        %v1903 = vmul.f32 %v1889, %v1883
        %v1904 = vmul.f32 %v1893, %v1884
        %v1905 = vmul.f32 %v1897, %v1885
        %v1906 = vmul.f32 %v1901, %v1886
        %v1907 = vadd.f32 %v1862, %v1903
        %v1908 = vadd.f32 %v1863, %v1904
        %v1909 = vadd.f32 %v1864, %v1905
        %v1910 = vadd.f32 %v1865, %v1906
        %v1911 = vsel %vm346, 1, 0
        %vm1912 = vcmp.eq.s32.totalorder %v1911, 1
        %v1913 = vsel %vm1912, %v1907, 0.0
        %v1914 = vsel %vm1912, %v1908, 0.0
        %v1915 = vsel %vm1912, %v1909, 0.0
        %v1916 = vsel %vm1912, %v1910, 0.0
        %1917 = vrot.lane.b32.xlu0 %v305, 126
        %v1918 = vpop.permute.xlu0 %1917
        %1919 = vrot.lane.b32.xlu0 %v307, 126
        %v1920 = vpop.permute.xlu0 %1919
        %1921 = vrot.lane.b32.xlu0 %v309, 126
        %v1922 = vpop.permute.xlu0 %1921
        %1923 = vrot.lane.b32.xlu0 %v311, 126
        %v1924 = vpop.permute.xlu0 %1923
        %1925 = vrot.lane.b32.xlu0 %v306, 126
        %v1926 = vpop.permute.xlu0 %1925
        %1927 = vrot.lane.b32.xlu0 %v308, 126
        %v1928 = vpop.permute.xlu0 %1927
        %1929 = vrot.lane.b32.xlu0 %v310, 126
        %v1930 = vpop.permute.xlu0 %1929
        %1931 = vrot.lane.b32.xlu0 %v312, 126
        %v1932 = vpop.permute.xlu0 %1931
        %vm1933 = vcmp.lt.s32.totalorder %v318, 126
        %v1934 = vsel %vm1933, %v1918, %v1926
        %v1935 = vsel %vm1933, %v1920, %v1928
        %v1936 = vsel %vm1933, %v1922, %v1930
        %v1937 = vsel %vm1933, %v1924, %v1932
        %1938 = vset.pattern.permute.xlu0 5
        %1939 = vperm.xlu0 %1938, %v313
        %v1940 = vpop.permute.xlu0 %1939
        %1942 = vset.pattern.permute.xlu0 5
        %1943 = vperm.xlu0 %1942, %v314
        %v1944 = vpop.permute.xlu0 %1943
        %1946 = vset.pattern.permute.xlu0 5
        %1947 = vperm.xlu0 %1946, %v315
        %v1948 = vpop.permute.xlu0 %1947
        %1950 = vset.pattern.permute.xlu0 5
        %1951 = vperm.xlu0 %1950, %v316
        %v1952 = vpop.permute.xlu0 %1951
        %v1954 = vmul.f32 %v1940, %v1934
        %v1955 = vmul.f32 %v1944, %v1935
        %v1956 = vmul.f32 %v1948, %v1936
        %v1957 = vmul.f32 %v1952, %v1937
        %1958 = vrot.lane.b32.xlu0 %v305, 110
        %v1959 = vpop.permute.xlu0 %1958
        %1960 = vrot.lane.b32.xlu0 %v307, 110
        %v1961 = vpop.permute.xlu0 %1960
        %1962 = vrot.lane.b32.xlu0 %v309, 110
        %v1963 = vpop.permute.xlu0 %1962
        %1964 = vrot.lane.b32.xlu0 %v311, 110
        %v1965 = vpop.permute.xlu0 %1964
        %1966 = vrot.lane.b32.xlu0 %v306, 110
        %v1967 = vpop.permute.xlu0 %1966
        %1968 = vrot.lane.b32.xlu0 %v308, 110
        %v1969 = vpop.permute.xlu0 %1968
        %1970 = vrot.lane.b32.xlu0 %v310, 110
        %v1971 = vpop.permute.xlu0 %1970
        %1972 = vrot.lane.b32.xlu0 %v312, 110
        %v1973 = vpop.permute.xlu0 %1972
        %vm1974 = vcmp.lt.s32.totalorder %v318, 110
        %v1975 = vsel %vm1974, %v1959, %v1967
        %v1976 = vsel %vm1974, %v1961, %v1969
        %v1977 = vsel %vm1974, %v1963, %v1971
        %v1978 = vsel %vm1974, %v1965, %v1973
        %1979 = vset.pattern.permute.xlu0 12
        %1980 = vperm.xlu0 %1979, %v313
        %v1981 = vpop.permute.xlu0 %1980
        %1983 = vset.pattern.permute.xlu0 12
        %1984 = vperm.xlu0 %1983, %v314
        %v1985 = vpop.permute.xlu0 %1984
        %1987 = vset.pattern.permute.xlu0 12
        %1988 = vperm.xlu0 %1987, %v315
        %v1989 = vpop.permute.xlu0 %1988
        %1991 = vset.pattern.permute.xlu0 12
        %1992 = vperm.xlu0 %1991, %v316
        %v1993 = vpop.permute.xlu0 %1992
        %v1995 = vmul.f32 %v1981, %v1975
        %v1996 = vmul.f32 %v1985, %v1976
        %v1997 = vmul.f32 %v1989, %v1977
        %v1998 = vmul.f32 %v1993, %v1978
        %v1999 = vadd.f32 %v1954, %v1995
        %v2000 = vadd.f32 %v1955, %v1996
        %v2001 = vadd.f32 %v1956, %v1997
        %v2002 = vadd.f32 %v1957, %v1998
        %2003 = vrot.lane.b32.xlu0 %v305, 94
        %v2004 = vpop.permute.xlu0 %2003
        %2005 = vrot.lane.b32.xlu0 %v307, 94
        %v2006 = vpop.permute.xlu0 %2005
        %2007 = vrot.lane.b32.xlu0 %v309, 94
        %v2008 = vpop.permute.xlu0 %2007
        %2009 = vrot.lane.b32.xlu0 %v311, 94
        %v2010 = vpop.permute.xlu0 %2009
        %2011 = vrot.lane.b32.xlu0 %v306, 94
        %v2012 = vpop.permute.xlu0 %2011
        %2013 = vrot.lane.b32.xlu0 %v308, 94
        %v2014 = vpop.permute.xlu0 %2013
        %2015 = vrot.lane.b32.xlu0 %v310, 94
        %v2016 = vpop.permute.xlu0 %2015
        %2017 = vrot.lane.b32.xlu0 %v312, 94
        %v2018 = vpop.permute.xlu0 %2017
        %vm2019 = vcmp.lt.s32.totalorder %v318, 94
        %v2020 = vsel %vm2019, %v2004, %v2012
        %v2021 = vsel %vm2019, %v2006, %v2014
        %v2022 = vsel %vm2019, %v2008, %v2016
        %v2023 = vsel %vm2019, %v2010, %v2018
        %2024 = vset.pattern.permute.xlu0 19
        %2025 = vperm.xlu0 %2024, %v313
        %v2026 = vpop.permute.xlu0 %2025
        %2028 = vset.pattern.permute.xlu0 19
        %2029 = vperm.xlu0 %2028, %v314
        %v2030 = vpop.permute.xlu0 %2029
        %2032 = vset.pattern.permute.xlu0 19
        %2033 = vperm.xlu0 %2032, %v315
        %v2034 = vpop.permute.xlu0 %2033
        %2036 = vset.pattern.permute.xlu0 19
        %2037 = vperm.xlu0 %2036, %v316
        %v2038 = vpop.permute.xlu0 %2037
        %v2040 = vmul.f32 %v2026, %v2020
        %v2041 = vmul.f32 %v2030, %v2021
        %v2042 = vmul.f32 %v2034, %v2022
        %v2043 = vmul.f32 %v2038, %v2023
        %v2044 = vadd.f32 %v1999, %v2040
        %v2045 = vadd.f32 %v2000, %v2041
        %v2046 = vadd.f32 %v2001, %v2042
        %v2047 = vadd.f32 %v2002, %v2043
        %2048 = vrot.lane.b32.xlu0 %v305, 78
        %v2049 = vpop.permute.xlu0 %2048
        %2050 = vrot.lane.b32.xlu0 %v307, 78
        %v2051 = vpop.permute.xlu0 %2050
        %2052 = vrot.lane.b32.xlu0 %v309, 78
        %v2053 = vpop.permute.xlu0 %2052
        %2054 = vrot.lane.b32.xlu0 %v311, 78
        %v2055 = vpop.permute.xlu0 %2054
        %2056 = vrot.lane.b32.xlu0 %v306, 78
        %v2057 = vpop.permute.xlu0 %2056
        %2058 = vrot.lane.b32.xlu0 %v308, 78
        %v2059 = vpop.permute.xlu0 %2058
        %2060 = vrot.lane.b32.xlu0 %v310, 78
        %v2061 = vpop.permute.xlu0 %2060
        %2062 = vrot.lane.b32.xlu0 %v312, 78
        %v2063 = vpop.permute.xlu0 %2062
        %vm2064 = vcmp.lt.s32.totalorder %v318, 78
        %v2065 = vsel %vm2064, %v2049, %v2057
        %v2066 = vsel %vm2064, %v2051, %v2059
        %v2067 = vsel %vm2064, %v2053, %v2061
        %v2068 = vsel %vm2064, %v2055, %v2063
        %2069 = vset.pattern.permute.xlu0 26
        %2070 = vperm.xlu0 %2069, %v313
        %v2071 = vpop.permute.xlu0 %2070
        %2073 = vset.pattern.permute.xlu0 26
        %2074 = vperm.xlu0 %2073, %v314
        %v2075 = vpop.permute.xlu0 %2074
        %2077 = vset.pattern.permute.xlu0 26
        %2078 = vperm.xlu0 %2077, %v315
        %v2079 = vpop.permute.xlu0 %2078
        %2081 = vset.pattern.permute.xlu0 26
        %2082 = vperm.xlu0 %2081, %v316
        %v2083 = vpop.permute.xlu0 %2082
        %v2085 = vmul.f32 %v2071, %v2065
        %v2086 = vmul.f32 %v2075, %v2066
        %v2087 = vmul.f32 %v2079, %v2067
        %v2088 = vmul.f32 %v2083, %v2068
        %v2089 = vadd.f32 %v2044, %v2085
        %v2090 = vadd.f32 %v2045, %v2086
        %v2091 = vadd.f32 %v2046, %v2087
        %v2092 = vadd.f32 %v2047, %v2088
        %2093 = vrot.lane.b32.xlu0 %v305, 62
        %v2094 = vpop.permute.xlu0 %2093
        %2095 = vrot.lane.b32.xlu0 %v307, 62
        %v2096 = vpop.permute.xlu0 %2095
        %2097 = vrot.lane.b32.xlu0 %v309, 62
        %v2098 = vpop.permute.xlu0 %2097
        %2099 = vrot.lane.b32.xlu0 %v311, 62
        %v2100 = vpop.permute.xlu0 %2099
        %2101 = vrot.lane.b32.xlu0 %v306, 62
        %v2102 = vpop.permute.xlu0 %2101
        %2103 = vrot.lane.b32.xlu0 %v308, 62
        %v2104 = vpop.permute.xlu0 %2103
        %2105 = vrot.lane.b32.xlu0 %v310, 62
        %v2106 = vpop.permute.xlu0 %2105
        %2107 = vrot.lane.b32.xlu0 %v312, 62
        %v2108 = vpop.permute.xlu0 %2107
        %vm2109 = vcmp.lt.s32.totalorder %v318, 62
        %v2110 = vsel %vm2109, %v2094, %v2102
        %v2111 = vsel %vm2109, %v2096, %v2104
        %v2112 = vsel %vm2109, %v2098, %v2106
        %v2113 = vsel %vm2109, %v2100, %v2108
        %2114 = vset.pattern.permute.xlu0 33
        %2115 = vperm.xlu0 %2114, %v313
        %v2116 = vpop.permute.xlu0 %2115
        %2118 = vset.pattern.permute.xlu0 33
        %2119 = vperm.xlu0 %2118, %v314
        %v2120 = vpop.permute.xlu0 %2119
        %2122 = vset.pattern.permute.xlu0 33
        %2123 = vperm.xlu0 %2122, %v315
        %v2124 = vpop.permute.xlu0 %2123
        %2126 = vset.pattern.permute.xlu0 33
        %2127 = vperm.xlu0 %2126, %v316
        %v2128 = vpop.permute.xlu0 %2127
        %v2130 = vmul.f32 %v2116, %v2110
        %v2131 = vmul.f32 %v2120, %v2111
        %v2132 = vmul.f32 %v2124, %v2112
        %v2133 = vmul.f32 %v2128, %v2113
        %v2134 = vadd.f32 %v2089, %v2130
        %v2135 = vadd.f32 %v2090, %v2131
        %v2136 = vadd.f32 %v2091, %v2132
        %v2137 = vadd.f32 %v2092, %v2133
        %2138 = vrot.lane.b32.xlu0 %v305, 46
        %v2139 = vpop.permute.xlu0 %2138
        %2140 = vrot.lane.b32.xlu0 %v307, 46
        %v2141 = vpop.permute.xlu0 %2140
        %2142 = vrot.lane.b32.xlu0 %v309, 46
        %v2143 = vpop.permute.xlu0 %2142
        %2144 = vrot.lane.b32.xlu0 %v311, 46
        %v2145 = vpop.permute.xlu0 %2144
        %2146 = vrot.lane.b32.xlu0 %v306, 46
        %v2147 = vpop.permute.xlu0 %2146
        %2148 = vrot.lane.b32.xlu0 %v308, 46
        %v2149 = vpop.permute.xlu0 %2148
        %2150 = vrot.lane.b32.xlu0 %v310, 46
        %v2151 = vpop.permute.xlu0 %2150
        %2152 = vrot.lane.b32.xlu0 %v312, 46
        %v2153 = vpop.permute.xlu0 %2152
        %vm2154 = vcmp.lt.s32.totalorder %v318, 46
        %v2155 = vsel %vm2154, %v2139, %v2147
        %v2156 = vsel %vm2154, %v2141, %v2149
        %v2157 = vsel %vm2154, %v2143, %v2151
        %v2158 = vsel %vm2154, %v2145, %v2153
        %2159 = vset.pattern.permute.xlu0 40
        %2160 = vperm.xlu0 %2159, %v313
        %v2161 = vpop.permute.xlu0 %2160
        %2163 = vset.pattern.permute.xlu0 40
        %2164 = vperm.xlu0 %2163, %v314
        %v2165 = vpop.permute.xlu0 %2164
        %2167 = vset.pattern.permute.xlu0 40
        %2168 = vperm.xlu0 %2167, %v315
        %v2169 = vpop.permute.xlu0 %2168
        %2171 = vset.pattern.permute.xlu0 40
        %2172 = vperm.xlu0 %2171, %v316
        %v2173 = vpop.permute.xlu0 %2172
        %v2175 = vmul.f32 %v2161, %v2155
        %v2176 = vmul.f32 %v2165, %v2156
        %v2177 = vmul.f32 %v2169, %v2157
        %v2178 = vmul.f32 %v2173, %v2158
        %v2179 = vadd.f32 %v2134, %v2175
        %v2180 = vadd.f32 %v2135, %v2176
        %v2181 = vadd.f32 %v2136, %v2177
        %v2182 = vadd.f32 %v2137, %v2178
        %2183 = vrot.lane.b32.xlu0 %v305, 30
        %v2184 = vpop.permute.xlu0 %2183
        %2185 = vrot.lane.b32.xlu0 %v307, 30
        %v2186 = vpop.permute.xlu0 %2185
        %2187 = vrot.lane.b32.xlu0 %v309, 30
        %v2188 = vpop.permute.xlu0 %2187
        %2189 = vrot.lane.b32.xlu0 %v311, 30
        %v2190 = vpop.permute.xlu0 %2189
        %2191 = vrot.lane.b32.xlu0 %v306, 30
        %v2192 = vpop.permute.xlu0 %2191
        %2193 = vrot.lane.b32.xlu0 %v308, 30
        %v2194 = vpop.permute.xlu0 %2193
        %2195 = vrot.lane.b32.xlu0 %v310, 30
        %v2196 = vpop.permute.xlu0 %2195
        %2197 = vrot.lane.b32.xlu0 %v312, 30
        %v2198 = vpop.permute.xlu0 %2197
        %vm2199 = vcmp.lt.s32.totalorder %v318, 30
        %v2200 = vsel %vm2199, %v2184, %v2192
        %v2201 = vsel %vm2199, %v2186, %v2194
        %v2202 = vsel %vm2199, %v2188, %v2196
        %v2203 = vsel %vm2199, %v2190, %v2198
        %2204 = vset.pattern.permute.xlu0 47
        %2205 = vperm.xlu0 %2204, %v313
        %v2206 = vpop.permute.xlu0 %2205
        %2208 = vset.pattern.permute.xlu0 47
        %2209 = vperm.xlu0 %2208, %v314
        %v2210 = vpop.permute.xlu0 %2209
        %2212 = vset.pattern.permute.xlu0 47
        %2213 = vperm.xlu0 %2212, %v315
        %v2214 = vpop.permute.xlu0 %2213
        %2216 = vset.pattern.permute.xlu0 47
        %2217 = vperm.xlu0 %2216, %v316
        %v2218 = vpop.permute.xlu0 %2217
        %v2220 = vmul.f32 %v2206, %v2200
        %v2221 = vmul.f32 %v2210, %v2201
        %v2222 = vmul.f32 %v2214, %v2202
        %v2223 = vmul.f32 %v2218, %v2203
        %v2224 = vadd.f32 %v2179, %v2220
        %v2225 = vadd.f32 %v2180, %v2221
        %v2226 = vadd.f32 %v2181, %v2222
        %v2227 = vadd.f32 %v2182, %v2223
        %v2228 = vsel %vm350, 1, 0
        %vm2229 = vcmp.eq.s32.totalorder %v2228, 1
        %v2230 = vsel %vm2229, %v2224, 0.0
        %v2231 = vsel %vm2229, %v2225, 0.0
        %v2232 = vsel %vm2229, %v2226, 0.0
        %v2233 = vsel %vm2229, %v2227, 0.0
        %2234 = vrot.lane.b32.xlu0 %v305, 125
        %v2235 = vpop.permute.xlu0 %2234
        %2236 = vrot.lane.b32.xlu0 %v307, 125
        %v2237 = vpop.permute.xlu0 %2236
        %2238 = vrot.lane.b32.xlu0 %v309, 125
        %v2239 = vpop.permute.xlu0 %2238
        %2240 = vrot.lane.b32.xlu0 %v311, 125
        %v2241 = vpop.permute.xlu0 %2240
        %2242 = vrot.lane.b32.xlu0 %v306, 125
        %v2243 = vpop.permute.xlu0 %2242
        %2244 = vrot.lane.b32.xlu0 %v308, 125
        %v2245 = vpop.permute.xlu0 %2244
        %2246 = vrot.lane.b32.xlu0 %v310, 125
        %v2247 = vpop.permute.xlu0 %2246
        %2248 = vrot.lane.b32.xlu0 %v312, 125
        %v2249 = vpop.permute.xlu0 %2248
        %vm2250 = vcmp.lt.s32.totalorder %v318, 125
        %v2251 = vsel %vm2250, %v2235, %v2243
        %v2252 = vsel %vm2250, %v2237, %v2245
        %v2253 = vsel %vm2250, %v2239, %v2247
        %v2254 = vsel %vm2250, %v2241, %v2249
        %2255 = vset.pattern.permute.xlu0 6
        %2256 = vperm.xlu0 %2255, %v313
        %v2257 = vpop.permute.xlu0 %2256
        %2259 = vset.pattern.permute.xlu0 6
        %2260 = vperm.xlu0 %2259, %v314
        %v2261 = vpop.permute.xlu0 %2260
        %2263 = vset.pattern.permute.xlu0 6
        %2264 = vperm.xlu0 %2263, %v315
        %v2265 = vpop.permute.xlu0 %2264
        %2267 = vset.pattern.permute.xlu0 6
        %2268 = vperm.xlu0 %2267, %v316
        %v2269 = vpop.permute.xlu0 %2268
        %v2271 = vmul.f32 %v2257, %v2251
        %v2272 = vmul.f32 %v2261, %v2252
        %v2273 = vmul.f32 %v2265, %v2253
        %v2274 = vmul.f32 %v2269, %v2254
        %2275 = vrot.lane.b32.xlu0 %v305, 109
        %v2276 = vpop.permute.xlu0 %2275
        %2277 = vrot.lane.b32.xlu0 %v307, 109
        %v2278 = vpop.permute.xlu0 %2277
        %2279 = vrot.lane.b32.xlu0 %v309, 109
        %v2280 = vpop.permute.xlu0 %2279
        %2281 = vrot.lane.b32.xlu0 %v311, 109
        %v2282 = vpop.permute.xlu0 %2281
        %2283 = vrot.lane.b32.xlu0 %v306, 109
        %v2284 = vpop.permute.xlu0 %2283
        %2285 = vrot.lane.b32.xlu0 %v308, 109
        %v2286 = vpop.permute.xlu0 %2285
        %2287 = vrot.lane.b32.xlu0 %v310, 109
        %v2288 = vpop.permute.xlu0 %2287
        %2289 = vrot.lane.b32.xlu0 %v312, 109
        %v2290 = vpop.permute.xlu0 %2289
        %vm2291 = vcmp.lt.s32.totalorder %v318, 109
        %v2292 = vsel %vm2291, %v2276, %v2284
        %v2293 = vsel %vm2291, %v2278, %v2286
        %v2294 = vsel %vm2291, %v2280, %v2288
        %v2295 = vsel %vm2291, %v2282, %v2290
        %2296 = vset.pattern.permute.xlu0 13
        %2297 = vperm.xlu0 %2296, %v313
        %v2298 = vpop.permute.xlu0 %2297
        %2300 = vset.pattern.permute.xlu0 13
        %2301 = vperm.xlu0 %2300, %v314
        %v2302 = vpop.permute.xlu0 %2301
        %2304 = vset.pattern.permute.xlu0 13
        %2305 = vperm.xlu0 %2304, %v315
        %v2306 = vpop.permute.xlu0 %2305
        %2308 = vset.pattern.permute.xlu0 13
        %2309 = vperm.xlu0 %2308, %v316
        %v2310 = vpop.permute.xlu0 %2309
        %v2312 = vmul.f32 %v2298, %v2292
        %v2313 = vmul.f32 %v2302, %v2293
        %v2314 = vmul.f32 %v2306, %v2294
        %v2315 = vmul.f32 %v2310, %v2295
        %v2316 = vadd.f32 %v2271, %v2312
        %v2317 = vadd.f32 %v2272, %v2313
        %v2318 = vadd.f32 %v2273, %v2314
        %v2319 = vadd.f32 %v2274, %v2315
        %2320 = vrot.lane.b32.xlu0 %v305, 93
        %v2321 = vpop.permute.xlu0 %2320
        %2322 = vrot.lane.b32.xlu0 %v307, 93
        %v2323 = vpop.permute.xlu0 %2322
        %2324 = vrot.lane.b32.xlu0 %v309, 93
        %v2325 = vpop.permute.xlu0 %2324
        %2326 = vrot.lane.b32.xlu0 %v311, 93
        %v2327 = vpop.permute.xlu0 %2326
        %2328 = vrot.lane.b32.xlu0 %v306, 93
        %v2329 = vpop.permute.xlu0 %2328
        %2330 = vrot.lane.b32.xlu0 %v308, 93
        %v2331 = vpop.permute.xlu0 %2330
        %2332 = vrot.lane.b32.xlu0 %v310, 93
        %v2333 = vpop.permute.xlu0 %2332
        %2334 = vrot.lane.b32.xlu0 %v312, 93
        %v2335 = vpop.permute.xlu0 %2334
        %vm2336 = vcmp.lt.s32.totalorder %v318, 93
        %v2337 = vsel %vm2336, %v2321, %v2329
        %v2338 = vsel %vm2336, %v2323, %v2331
        %v2339 = vsel %vm2336, %v2325, %v2333
        %v2340 = vsel %vm2336, %v2327, %v2335
        %2341 = vset.pattern.permute.xlu0 20
        %2342 = vperm.xlu0 %2341, %v313
        %v2343 = vpop.permute.xlu0 %2342
        %2345 = vset.pattern.permute.xlu0 20
        %2346 = vperm.xlu0 %2345, %v314
        %v2347 = vpop.permute.xlu0 %2346
        %2349 = vset.pattern.permute.xlu0 20
        %2350 = vperm.xlu0 %2349, %v315
        %v2351 = vpop.permute.xlu0 %2350
        %2353 = vset.pattern.permute.xlu0 20
        %2354 = vperm.xlu0 %2353, %v316
        %v2355 = vpop.permute.xlu0 %2354
        %v2357 = vmul.f32 %v2343, %v2337
        %v2358 = vmul.f32 %v2347, %v2338
        %v2359 = vmul.f32 %v2351, %v2339
        %v2360 = vmul.f32 %v2355, %v2340
        %v2361 = vadd.f32 %v2316, %v2357
        %v2362 = vadd.f32 %v2317, %v2358
        %v2363 = vadd.f32 %v2318, %v2359
        %v2364 = vadd.f32 %v2319, %v2360
        %2365 = vrot.lane.b32.xlu0 %v305, 77
        %v2366 = vpop.permute.xlu0 %2365
        %2367 = vrot.lane.b32.xlu0 %v307, 77
        %v2368 = vpop.permute.xlu0 %2367
        %2369 = vrot.lane.b32.xlu0 %v309, 77
        %v2370 = vpop.permute.xlu0 %2369
        %2371 = vrot.lane.b32.xlu0 %v311, 77
        %v2372 = vpop.permute.xlu0 %2371
        %2373 = vrot.lane.b32.xlu0 %v306, 77
        %v2374 = vpop.permute.xlu0 %2373
        %2375 = vrot.lane.b32.xlu0 %v308, 77
        %v2376 = vpop.permute.xlu0 %2375
        %2377 = vrot.lane.b32.xlu0 %v310, 77
        %v2378 = vpop.permute.xlu0 %2377
        %2379 = vrot.lane.b32.xlu0 %v312, 77
        %v2380 = vpop.permute.xlu0 %2379
        %vm2381 = vcmp.lt.s32.totalorder %v318, 77
        %v2382 = vsel %vm2381, %v2366, %v2374
        %v2383 = vsel %vm2381, %v2368, %v2376
        %v2384 = vsel %vm2381, %v2370, %v2378
        %v2385 = vsel %vm2381, %v2372, %v2380
        %2386 = vset.pattern.permute.xlu0 27
        %2387 = vperm.xlu0 %2386, %v313
        %v2388 = vpop.permute.xlu0 %2387
        %2390 = vset.pattern.permute.xlu0 27
        %2391 = vperm.xlu0 %2390, %v314
        %v2392 = vpop.permute.xlu0 %2391
        %2394 = vset.pattern.permute.xlu0 27
        %2395 = vperm.xlu0 %2394, %v315
        %v2396 = vpop.permute.xlu0 %2395
        %2398 = vset.pattern.permute.xlu0 27
        %2399 = vperm.xlu0 %2398, %v316
        %v2400 = vpop.permute.xlu0 %2399
        %v2402 = vmul.f32 %v2388, %v2382
        %v2403 = vmul.f32 %v2392, %v2383
        %v2404 = vmul.f32 %v2396, %v2384
        %v2405 = vmul.f32 %v2400, %v2385
        %v2406 = vadd.f32 %v2361, %v2402
        %v2407 = vadd.f32 %v2362, %v2403
        %v2408 = vadd.f32 %v2363, %v2404
        %v2409 = vadd.f32 %v2364, %v2405
        %2410 = vrot.lane.b32.xlu0 %v305, 61
        %v2411 = vpop.permute.xlu0 %2410
        %2412 = vrot.lane.b32.xlu0 %v307, 61
        %v2413 = vpop.permute.xlu0 %2412
        %2414 = vrot.lane.b32.xlu0 %v309, 61
        %v2415 = vpop.permute.xlu0 %2414
        %2416 = vrot.lane.b32.xlu0 %v311, 61
        %v2417 = vpop.permute.xlu0 %2416
        %2418 = vrot.lane.b32.xlu0 %v306, 61
        %v2419 = vpop.permute.xlu0 %2418
        %2420 = vrot.lane.b32.xlu0 %v308, 61
        %v2421 = vpop.permute.xlu0 %2420
        %2422 = vrot.lane.b32.xlu0 %v310, 61
        %v2423 = vpop.permute.xlu0 %2422
        %2424 = vrot.lane.b32.xlu0 %v312, 61
        %v2425 = vpop.permute.xlu0 %2424
        %vm2426 = vcmp.lt.s32.totalorder %v318, 61
        %v2427 = vsel %vm2426, %v2411, %v2419
        %v2428 = vsel %vm2426, %v2413, %v2421
        %v2429 = vsel %vm2426, %v2415, %v2423
        %v2430 = vsel %vm2426, %v2417, %v2425
        %2431 = vset.pattern.permute.xlu0 34
        %2432 = vperm.xlu0 %2431, %v313
        %v2433 = vpop.permute.xlu0 %2432
        %2435 = vset.pattern.permute.xlu0 34
        %2436 = vperm.xlu0 %2435, %v314
        %v2437 = vpop.permute.xlu0 %2436
        %2439 = vset.pattern.permute.xlu0 34
        %2440 = vperm.xlu0 %2439, %v315
        %v2441 = vpop.permute.xlu0 %2440
        %2443 = vset.pattern.permute.xlu0 34
        %2444 = vperm.xlu0 %2443, %v316
        %v2445 = vpop.permute.xlu0 %2444
        %v2447 = vmul.f32 %v2433, %v2427
        %v2448 = vmul.f32 %v2437, %v2428
        %v2449 = vmul.f32 %v2441, %v2429
        %v2450 = vmul.f32 %v2445, %v2430
        %v2451 = vadd.f32 %v2406, %v2447
        %v2452 = vadd.f32 %v2407, %v2448
        %v2453 = vadd.f32 %v2408, %v2449
        %v2454 = vadd.f32 %v2409, %v2450
        %2455 = vrot.lane.b32.xlu0 %v305, 45
        %v2456 = vpop.permute.xlu0 %2455
        %2457 = vrot.lane.b32.xlu0 %v307, 45
        %v2458 = vpop.permute.xlu0 %2457
        %2459 = vrot.lane.b32.xlu0 %v309, 45
        %v2460 = vpop.permute.xlu0 %2459
        %2461 = vrot.lane.b32.xlu0 %v311, 45
        %v2462 = vpop.permute.xlu0 %2461
        %2463 = vrot.lane.b32.xlu0 %v306, 45
        %v2464 = vpop.permute.xlu0 %2463
        %2465 = vrot.lane.b32.xlu0 %v308, 45
        %v2466 = vpop.permute.xlu0 %2465
        %2467 = vrot.lane.b32.xlu0 %v310, 45
        %v2468 = vpop.permute.xlu0 %2467
        %2469 = vrot.lane.b32.xlu0 %v312, 45
        %v2470 = vpop.permute.xlu0 %2469
        %vm2471 = vcmp.lt.s32.totalorder %v318, 45
        %v2472 = vsel %vm2471, %v2456, %v2464
        %v2473 = vsel %vm2471, %v2458, %v2466
        %v2474 = vsel %vm2471, %v2460, %v2468
        %v2475 = vsel %vm2471, %v2462, %v2470
        %2476 = vset.pattern.permute.xlu0 41
        %2477 = vperm.xlu0 %2476, %v313
        %v2478 = vpop.permute.xlu0 %2477
        %2480 = vset.pattern.permute.xlu0 41
        %2481 = vperm.xlu0 %2480, %v314
        %v2482 = vpop.permute.xlu0 %2481
        %2484 = vset.pattern.permute.xlu0 41
        %2485 = vperm.xlu0 %2484, %v315
        %v2486 = vpop.permute.xlu0 %2485
        %2488 = vset.pattern.permute.xlu0 41
        %2489 = vperm.xlu0 %2488, %v316
        %v2490 = vpop.permute.xlu0 %2489
        %v2492 = vmul.f32 %v2478, %v2472
        %v2493 = vmul.f32 %v2482, %v2473
        %v2494 = vmul.f32 %v2486, %v2474
        %v2495 = vmul.f32 %v2490, %v2475
        %v2496 = vadd.f32 %v2451, %v2492
        %v2497 = vadd.f32 %v2452, %v2493
        %v2498 = vadd.f32 %v2453, %v2494
        %v2499 = vadd.f32 %v2454, %v2495
        %2500 = vrot.lane.b32.xlu0 %v305, 29
        %v2501 = vpop.permute.xlu0 %2500
        %2502 = vrot.lane.b32.xlu0 %v307, 29
        %v2503 = vpop.permute.xlu0 %2502
        %2504 = vrot.lane.b32.xlu0 %v309, 29
        %v2505 = vpop.permute.xlu0 %2504
        %2506 = vrot.lane.b32.xlu0 %v311, 29
        %v2507 = vpop.permute.xlu0 %2506
        %2508 = vrot.lane.b32.xlu0 %v306, 29
        %v2509 = vpop.permute.xlu0 %2508
        %2510 = vrot.lane.b32.xlu0 %v308, 29
        %v2511 = vpop.permute.xlu0 %2510
        %2512 = vrot.lane.b32.xlu0 %v310, 29
        %v2513 = vpop.permute.xlu0 %2512
        %2514 = vrot.lane.b32.xlu0 %v312, 29
        %v2515 = vpop.permute.xlu0 %2514
        %vm2516 = vcmp.lt.s32.totalorder %v318, 29
        %v2517 = vsel %vm2516, %v2501, %v2509
        %v2518 = vsel %vm2516, %v2503, %v2511
        %v2519 = vsel %vm2516, %v2505, %v2513
        %v2520 = vsel %vm2516, %v2507, %v2515
        %2521 = vset.pattern.permute.xlu0 48
        %2522 = vperm.xlu0 %2521, %v313
        %v2523 = vpop.permute.xlu0 %2522
        %2525 = vset.pattern.permute.xlu0 48
        %2526 = vperm.xlu0 %2525, %v314
        %v2527 = vpop.permute.xlu0 %2526
        %2529 = vset.pattern.permute.xlu0 48
        %2530 = vperm.xlu0 %2529, %v315
        %v2531 = vpop.permute.xlu0 %2530
        %2533 = vset.pattern.permute.xlu0 48
        %2534 = vperm.xlu0 %2533, %v316
        %v2535 = vpop.permute.xlu0 %2534
        %v2537 = vmul.f32 %v2523, %v2517
        %v2538 = vmul.f32 %v2527, %v2518
        %v2539 = vmul.f32 %v2531, %v2519
        %v2540 = vmul.f32 %v2535, %v2520
        %v2541 = vadd.f32 %v2496, %v2537
        %v2542 = vadd.f32 %v2497, %v2538
        %v2543 = vadd.f32 %v2498, %v2539
        %v2544 = vadd.f32 %v2499, %v2540
        %v2545 = vsel %vm354, 1, 0
        %vm2546 = vcmp.eq.s32.totalorder %v2545, 1
        %v2547 = vsel %vm2546, %v2541, 0.0
        %v2548 = vsel %vm2546, %v2542, 0.0
        %v2549 = vsel %vm2546, %v2543, 0.0
        %v2550 = vsel %vm2546, %v2544, 0.0
        %v2551 = vadd.f32 %v672, %v989
        %v2552 = vadd.f32 %v673, %v990
        %v2553 = vadd.f32 %v674, %v991
        %v2554 = vadd.f32 %v675, %v992
        %v2555 = vadd.f32 %v1306, %v1596
        %v2556 = vadd.f32 %v1307, %v1597
        %v2557 = vadd.f32 %v1308, %v1598
        %v2558 = vadd.f32 %v1309, %v1599
        %v2559 = vadd.f32 %v2551, %v2555
        %v2560 = vadd.f32 %v2552, %v2556
        %v2561 = vadd.f32 %v2553, %v2557
        %v2562 = vadd.f32 %v2554, %v2558
        %v2563 = vadd.f32 %v1913, %v2230
        %v2564 = vadd.f32 %v1914, %v2231
        %v2565 = vadd.f32 %v1915, %v2232
        %v2566 = vadd.f32 %v1916, %v2233
        %v2567 = vadd.f32 %v2563, %v2547
        %v2568 = vadd.f32 %v2564, %v2548
        %v2569 = vadd.f32 %v2565, %v2549
        %v2570 = vadd.f32 %v2566, %v2550
        %v2571 = vadd.f32 %v2559, %v2567
        %v2572 = vadd.f32 %v2560, %v2568
        %v2573 = vadd.f32 %v2561, %v2569
        %v2574 = vadd.f32 %v2562, %v2570
        %v2575 = vld [vmem:[%s2] sm:$0xff]
        %v2576 = vld [vmem:[%s2 + $0x8] sm:$0xff]
        %v2577 = vld [vmem:[%s2 + $0x10] sm:$0xff]
        %v2578 = vld [vmem:[%s2 + $0x18] sm:$0xff]
        %2580 = vset.pattern.permute.xlu0 0
        %2581 = vperm.xlu0 %2580, %v2575
        %v2582 = vpop.permute.xlu0 %2581
        %2585 = vset.pattern.permute.xlu0 0
        %2586 = vperm.xlu0 %2585, %v2576
        %v2587 = vpop.permute.xlu0 %2586
        %2590 = vset.pattern.permute.xlu0 0
        %2591 = vperm.xlu0 %2590, %v2577
        %v2592 = vpop.permute.xlu0 %2591
        %2595 = vset.pattern.permute.xlu0 0
        %2596 = vperm.xlu0 %2595, %v2578
        %v2597 = vpop.permute.xlu0 %2596
        %v2599 = vadd.f32 %v2571, %v2582
        %v2600 = vadd.f32 %v2572, %v2587
        %v2601 = vadd.f32 %v2573, %v2592
        %v2602 = vadd.f32 %v2574, %v2597
        %v2603 = vadd.f32 %v2599, %v2600
        %v2604 = vadd.f32 %v2603, %v2601
        %v2605 = vadd.f32 %v2604, %v2602
        %v2606 = vrot.slane %v2605, 4
        %v2607 = vadd.f32 %v2605, %v2606
        %v2608 = vrot.slane %v2607, 2
        %v2609 = vadd.f32 %v2607, %v2608
        %v2610 = vrot.slane %v2609, 1
        %v2611 = vadd.f32 %v2609, %v2610
        %v2612 = vrcp.pop 32.0
        %v2613 = vmul.f32 32.0, %v2612
        %v2614 = vsub.f32 1.0, %v2613
        %v2615 = vmul.f32 %v2612, %v2614
        %v2616 = vadd.f32 %v2612, %v2615
        %vm2617 = vweird.f32 %v2612
        %v2618 = vsel %vm2617, %v2612, %v2616
        %v2619 = vmul.f32 %v2611, %v2618
        %v2620 = vmul.f32 %v2599, %v2599
        %v2621 = vmul.f32 %v2600, %v2600
        %v2622 = vmul.f32 %v2601, %v2601
        %v2623 = vmul.f32 %v2602, %v2602
        %v2624 = vadd.f32 %v2620, %v2621
        %v2625 = vadd.f32 %v2624, %v2622
        %v2626 = vadd.f32 %v2625, %v2623
        %v2627 = vrot.slane %v2626, 4
        %v2628 = vadd.f32 %v2626, %v2627
        %v2629 = vrot.slane %v2628, 2
        %v2630 = vadd.f32 %v2628, %v2629
        %v2631 = vrot.slane %v2630, 1
        %v2632 = vadd.f32 %v2630, %v2631
        %v2633 = vmul.f32 %v2632, %v2618
        %v2634 = vmul.f32 %v2619, %v2619
        %v2635 = vsub.f32 %v2633, %v2634
        %v2636 = vmax.f32 %v2635, 0.0
        %v2637 = vsub.f32 %v2599, %v2619
        %v2638 = vsub.f32 %v2600, %v2619
        %v2639 = vsub.f32 %v2601, %v2619
        %v2640 = vsub.f32 %v2602, %v2619
        %v2641 = vadd.f32 %v2636, 1e-06
        %v2642 = vrsqrt.pop %v2641
        %v2643 = vmul.f32 %v2642, %v2641
        %v2644 = vmul.f32 %v2643, %v2642
        %v2645 = vmul.f32 0.5, %v2644
        %v2646 = vsub.f32 1.5, %v2645
        %v2647 = vmul.f32 %v2642, %v2646
        %vm2648 = vweird.f32 %v2641
        %vm2649 = vweird.f32 %v2642
        %vm2650 = vmor %vm2648, %vm2649
        %v2651 = vsel %vm2650, %v2642, %v2647
        %v2652 = vmul.f32 %v2637, %v2651
        %v2653 = vmul.f32 %v2638, %v2651
        %v2654 = vmul.f32 %v2639, %v2651
        %v2655 = vmul.f32 %v2640, %v2651
        %v2656 = vld [vmem:[%s3] sm:$0xff]
        %v2657 = vld [vmem:[%s3 + $0x8] sm:$0xff]
        %v2658 = vld [vmem:[%s3 + $0x10] sm:$0xff]
        %v2659 = vld [vmem:[%s3 + $0x18] sm:$0xff]
        %v2660 = vld [vmem:[%s3 + $0x20] sm:$0xff]
        %v2661 = vld [vmem:[%s3 + $0x28] sm:$0xff]
        %v2662 = vld [vmem:[%s3 + $0x30] sm:$0xff]
        %v2663 = vld [vmem:[%s3 + $0x38] sm:$0xff]
        %v2664 = vld [vmem:[%s3 + $0x40] sm:$0xff]
        %v2665 = vld [vmem:[%s3 + $0x48] sm:$0xff]
        %v2666 = vld [vmem:[%s3 + $0x50] sm:$0xff]
        %v2667 = vld [vmem:[%s3 + $0x58] sm:$0xff]
        %v2668 = vld [vmem:[%s3 + $0x60] sm:$0xff]
        %v2669 = vld [vmem:[%s3 + $0x68] sm:$0xff]
        %v2670 = vld [vmem:[%s3 + $0x70] sm:$0xff]
        %v2671 = vld [vmem:[%s3 + $0x78] sm:$0xff]
        %v2672 = vld [vmem:[%s4] sm:$0xff]
        %v2673 = vld [vmem:[%s4 + $0x8] sm:$0xff]
        %v2674 = vld [vmem:[%s4 + $0x10] sm:$0xff]
        %v2675 = vld [vmem:[%s4 + $0x18] sm:$0xff]
        %v2676 = vld [vmem:[%s4 + $0x20] sm:$0xff]
        %v2677 = vld [vmem:[%s4 + $0x28] sm:$0xff]
        %v2678 = vld [vmem:[%s4 + $0x30] sm:$0xff]
        %v2679 = vld [vmem:[%s4 + $0x38] sm:$0xff]
        %v2680 = vld [vmem:[%s4 + $0x40] sm:$0xff]
        %v2681 = vld [vmem:[%s4 + $0x48] sm:$0xff]
        %v2682 = vld [vmem:[%s4 + $0x50] sm:$0xff]
        %v2683 = vld [vmem:[%s4 + $0x58] sm:$0xff]
        %v2684 = vld [vmem:[%s4 + $0x60] sm:$0xff]
        %v2685 = vld [vmem:[%s4 + $0x68] sm:$0xff]
        %v2686 = vld [vmem:[%s4 + $0x70] sm:$0xff]
        %v2687 = vld [vmem:[%s4 + $0x78] sm:$0xff]
        %2689 = vset.pattern.permute.xlu0 0
        %2690 = vperm.xlu0 %2689, %v2672
        %v2691 = vpop.permute.xlu0 %2690
        %2694 = vset.pattern.permute.xlu0 0
        %2695 = vperm.xlu0 %2694, %v2673
        %v2696 = vpop.permute.xlu0 %2695
        %2699 = vset.pattern.permute.xlu0 0
        %2700 = vperm.xlu0 %2699, %v2674
        %v2701 = vpop.permute.xlu0 %2700
        %2704 = vset.pattern.permute.xlu0 0
        %2705 = vperm.xlu0 %2704, %v2675
        %v2706 = vpop.permute.xlu0 %2705
        %2709 = vset.pattern.permute.xlu0 0
        %2710 = vperm.xlu0 %2709, %v2676
        %v2711 = vpop.permute.xlu0 %2710
        %2714 = vset.pattern.permute.xlu0 0
        %2715 = vperm.xlu0 %2714, %v2677
        %v2716 = vpop.permute.xlu0 %2715
        %2719 = vset.pattern.permute.xlu0 0
        %2720 = vperm.xlu0 %2719, %v2678
        %v2721 = vpop.permute.xlu0 %2720
        %2724 = vset.pattern.permute.xlu0 0
        %2725 = vperm.xlu0 %2724, %v2679
        %v2726 = vpop.permute.xlu0 %2725
        %2729 = vset.pattern.permute.xlu0 0
        %2730 = vperm.xlu0 %2729, %v2680
        %v2731 = vpop.permute.xlu0 %2730
        %2734 = vset.pattern.permute.xlu0 0
        %2735 = vperm.xlu0 %2734, %v2681
        %v2736 = vpop.permute.xlu0 %2735
        %2739 = vset.pattern.permute.xlu0 0
        %2740 = vperm.xlu0 %2739, %v2682
        %v2741 = vpop.permute.xlu0 %2740
        %2744 = vset.pattern.permute.xlu0 0
        %2745 = vperm.xlu0 %2744, %v2683
        %v2746 = vpop.permute.xlu0 %2745
        %2749 = vset.pattern.permute.xlu0 0
        %2750 = vperm.xlu0 %2749, %v2684
        %v2751 = vpop.permute.xlu0 %2750
        %2754 = vset.pattern.permute.xlu0 0
        %2755 = vperm.xlu0 %2754, %v2685
        %v2756 = vpop.permute.xlu0 %2755
        %2759 = vset.pattern.permute.xlu0 0
        %2760 = vperm.xlu0 %2759, %v2686
        %v2761 = vpop.permute.xlu0 %2760
        %2764 = vset.pattern.permute.xlu0 0
        %2765 = vperm.xlu0 %2764, %v2687
        %v2766 = vpop.permute.xlu0 %2765
        %vm2768 = vcmask 261120
        %v2770 = vsel %vm2768, %v2656, 0
        %v2773 = vsel %vm2768, %v2657, 0
        %v2776 = vsel %vm2768, %v2658, 0
        %v2779 = vsel %vm2768, %v2659, 0
        %v2782 = vsel %vm2768, %v2660, 0
        %v2785 = vsel %vm2768, %v2661, 0
        %v2788 = vsel %vm2768, %v2662, 0
        %v2791 = vsel %vm2768, %v2663, 0
        %v2794 = vsel %vm2768, %v2664, 0
        %v2797 = vsel %vm2768, %v2665, 0
        %v2800 = vsel %vm2768, %v2666, 0
        %v2803 = vsel %vm2768, %v2667, 0
        %v2806 = vsel %vm2768, %v2668, 0
        %v2809 = vsel %vm2768, %v2669, 0
        %v2812 = vsel %vm2768, %v2670, 0
        %v2815 = vsel %vm2768, %v2671, 0
        %2817 = vmatpush.msra.mxu0 0.0
        %2818 = vmatpush.msra.mxu0 0.0
        %2819 = vmatpush.msra.mxu0 0.0
        %2820 = vmatpush.msra.mxu0 0.0
        %2821 = vmatpush.msra.mxu0 0.0
        %2822 = vmatpush.msra.mxu0 0.0
        %2823 = vmatpush.msra.mxu0 0.0
        %2824 = vmatpush.msra.mxu0 0.0
        %2825 = vmatpush.msra.mxu0 0.0
        %2826 = vmatpush.msra.mxu0 0.0
        %2827 = vmatpush.msra.mxu0 0.0
        %2828 = vmatpush.msra.mxu0 0.0
        %2829 = vmatpush.msra.mxu0 %v2655
        %2830 = vmatpush.msra.mxu0 %v2654
        %2831 = vmatpush.msra.mxu0 %v2653
        %2832 = vmatpush.msra.mxu0 %v2652
        %2833 = vmatmul.f32.gmra.mxu0 %v2770
        %v2834 = vpop.f32.mrf.mxu0
        %v2835 = vadd.f32 %v2691, %v2834
        %2836 = vmatmul.f32.gmra.mxu0 %v2773
        %v2837 = vpop.f32.mrf.mxu0
        %v2838 = vadd.f32 %v2696, %v2837
        %2839 = vmatmul.f32.gmra.mxu0 %v2776
        %v2840 = vpop.f32.mrf.mxu0
        %v2841 = vadd.f32 %v2701, %v2840
        %2842 = vmatmul.f32.gmra.mxu0 %v2779
        %v2843 = vpop.f32.mrf.mxu0
        %v2844 = vadd.f32 %v2706, %v2843
        %2845 = vmatmul.f32.gmra.mxu0 %v2782
        %v2846 = vpop.f32.mrf.mxu0
        %v2847 = vadd.f32 %v2711, %v2846
        %2848 = vmatmul.f32.gmra.mxu0 %v2785
        %v2849 = vpop.f32.mrf.mxu0
        %v2850 = vadd.f32 %v2716, %v2849
        %2851 = vmatmul.f32.gmra.mxu0 %v2788
        %v2852 = vpop.f32.mrf.mxu0
        %v2853 = vadd.f32 %v2721, %v2852
        %2854 = vmatmul.f32.gmra.mxu0 %v2791
        %v2855 = vpop.f32.mrf.mxu0
        %v2856 = vadd.f32 %v2726, %v2855
        %2857 = vmatmul.f32.gmra.mxu0 %v2794
        %v2858 = vpop.f32.mrf.mxu0
        %v2859 = vadd.f32 %v2731, %v2858
        %2860 = vmatmul.f32.gmra.mxu0 %v2797
        %v2861 = vpop.f32.mrf.mxu0
        %v2862 = vadd.f32 %v2736, %v2861
        %2863 = vmatmul.f32.gmra.mxu0 %v2800
        %v2864 = vpop.f32.mrf.mxu0
        %v2865 = vadd.f32 %v2741, %v2864
        %2866 = vmatmul.f32.gmra.mxu0 %v2803
        %v2867 = vpop.f32.mrf.mxu0
        %v2868 = vadd.f32 %v2746, %v2867
        %2869 = vmatmul.f32.gmra.mxu0 %v2806
        %v2870 = vpop.f32.mrf.mxu0
        %v2871 = vadd.f32 %v2751, %v2870
        %2872 = vmatmul.f32.gmra.mxu0 %v2809
        %v2873 = vpop.f32.mrf.mxu0
        %v2874 = vadd.f32 %v2756, %v2873
        %2875 = vmatmul.f32.gmra.mxu0 %v2812
        %v2876 = vpop.f32.mrf.mxu0
        %v2877 = vadd.f32 %v2761, %v2876
        %2878 = vmatmul.f32.gmra.mxu0 %v2815
        %v2879 = vpop.f32.mrf.mxu0
        %v2880 = vadd.f32 %v2766, %v2879
        %2881 = vdwg.mxu0
        %v2882 = vmul.f32 %v2835, 0.5
        %v2883 = vmul.f32 %v2838, 0.5
        %v2884 = vmul.f32 %v2841, 0.5
        %v2885 = vmul.f32 %v2844, 0.5
        %v2886 = vmul.f32 %v2847, 0.5
        %v2887 = vmul.f32 %v2850, 0.5
        %v2888 = vmul.f32 %v2853, 0.5
        %v2889 = vmul.f32 %v2856, 0.5
        %v2890 = vmul.f32 %v2859, 0.5
        %v2891 = vmul.f32 %v2862, 0.5
        %v2892 = vmul.f32 %v2865, 0.5
        %v2893 = vmul.f32 %v2868, 0.5
        %v2894 = vmul.f32 %v2871, 0.5
        %v2895 = vmul.f32 %v2874, 0.5
        %v2896 = vmul.f32 %v2877, 0.5
        %v2897 = vmul.f32 %v2880, 0.5
        %v2898 = vmul.f32 %v2835, %v2835
        %v2899 = vmul.f32 %v2838, %v2838
        %v2900 = vmul.f32 %v2841, %v2841
        %v2901 = vmul.f32 %v2844, %v2844
        %v2902 = vmul.f32 %v2847, %v2847
        %v2903 = vmul.f32 %v2850, %v2850
        %v2904 = vmul.f32 %v2853, %v2853
        %v2905 = vmul.f32 %v2856, %v2856
        %v2906 = vmul.f32 %v2859, %v2859
        %v2907 = vmul.f32 %v2862, %v2862
        %v2908 = vmul.f32 %v2865, %v2865
        %v2909 = vmul.f32 %v2868, %v2868
        %v2910 = vmul.f32 %v2871, %v2871
        %v2911 = vmul.f32 %v2874, %v2874
        %v2912 = vmul.f32 %v2877, %v2877
        %v2913 = vmul.f32 %v2880, %v2880
        %v2914 = vmul.f32 %v2898, %v2835
        %v2915 = vmul.f32 %v2899, %v2838
        %v2916 = vmul.f32 %v2900, %v2841
        %v2917 = vmul.f32 %v2901, %v2844
        %v2918 = vmul.f32 %v2902, %v2847
        %v2919 = vmul.f32 %v2903, %v2850
        %v2920 = vmul.f32 %v2904, %v2853
        %v2921 = vmul.f32 %v2905, %v2856
        %v2922 = vmul.f32 %v2906, %v2859
        %v2923 = vmul.f32 %v2907, %v2862
        %v2924 = vmul.f32 %v2908, %v2865
        %v2925 = vmul.f32 %v2909, %v2868
        %v2926 = vmul.f32 %v2910, %v2871
        %v2927 = vmul.f32 %v2911, %v2874
        %v2928 = vmul.f32 %v2912, %v2877
        %v2929 = vmul.f32 %v2913, %v2880
        %v2930 = vmul.f32 %v2914, 0.044715
        %v2931 = vmul.f32 %v2915, 0.044715
        %v2932 = vmul.f32 %v2916, 0.044715
        %v2933 = vmul.f32 %v2917, 0.044715
        %v2934 = vmul.f32 %v2918, 0.044715
        %v2935 = vmul.f32 %v2919, 0.044715
        %v2936 = vmul.f32 %v2920, 0.044715
        %v2937 = vmul.f32 %v2921, 0.044715
        %v2938 = vmul.f32 %v2922, 0.044715
        %v2939 = vmul.f32 %v2923, 0.044715
        %v2940 = vmul.f32 %v2924, 0.044715
        %v2941 = vmul.f32 %v2925, 0.044715
        %v2942 = vmul.f32 %v2926, 0.044715
        %v2943 = vmul.f32 %v2927, 0.044715
        %v2944 = vmul.f32 %v2928, 0.044715
        %v2945 = vmul.f32 %v2929, 0.044715
        %v2946 = vadd.f32 %v2835, %v2930
        %v2947 = vadd.f32 %v2838, %v2931
        %v2948 = vadd.f32 %v2841, %v2932
        %v2949 = vadd.f32 %v2844, %v2933
        %v2950 = vadd.f32 %v2847, %v2934
        %v2951 = vadd.f32 %v2850, %v2935
        %v2952 = vadd.f32 %v2853, %v2936
        %v2953 = vadd.f32 %v2856, %v2937
        %v2954 = vadd.f32 %v2859, %v2938
        %v2955 = vadd.f32 %v2862, %v2939
        %v2956 = vadd.f32 %v2865, %v2940
        %v2957 = vadd.f32 %v2868, %v2941
        %v2958 = vadd.f32 %v2871, %v2942
        %v2959 = vadd.f32 %v2874, %v2943
        %v2960 = vadd.f32 %v2877, %v2944
        %v2961 = vadd.f32 %v2880, %v2945
        %v2962 = vmul.f32 %v2946, 0.7978846
        %v2963 = vmul.f32 %v2947, 0.7978846
        %v2964 = vmul.f32 %v2948, 0.7978846
        %v2965 = vmul.f32 %v2949, 0.7978846
        %v2966 = vmul.f32 %v2950, 0.7978846
        %v2967 = vmul.f32 %v2951, 0.7978846
        %v2968 = vmul.f32 %v2952, 0.7978846
        %v2969 = vmul.f32 %v2953, 0.7978846
        %v2970 = vmul.f32 %v2954, 0.7978846
        %v2971 = vmul.f32 %v2955, 0.7978846
        %v2972 = vmul.f32 %v2956, 0.7978846
        %v2973 = vmul.f32 %v2957, 0.7978846
        %v2974 = vmul.f32 %v2958, 0.7978846
        %v2975 = vmul.f32 %v2959, 0.7978846
        %v2976 = vmul.f32 %v2960, 0.7978846
        %v2977 = vmul.f32 %v2961, 0.7978846
        %v2978 = vtanh.pop %v2962
        %v2979 = vtanh.pop %v2963
        %v2980 = vtanh.pop %v2964
        %v2981 = vtanh.pop %v2965
        %v2982 = vtanh.pop %v2966
        %v2983 = vtanh.pop %v2967
        %v2984 = vtanh.pop %v2968
        %v2985 = vtanh.pop %v2969
        %v2986 = vtanh.pop %v2970
        %v2987 = vtanh.pop %v2971
        %v2988 = vtanh.pop %v2972
        %v2989 = vtanh.pop %v2973
        %v2990 = vtanh.pop %v2974
        %v2991 = vtanh.pop %v2975
        %v2992 = vtanh.pop %v2976
        %v2993 = vtanh.pop %v2977
        %v2994 = vadd.f32 %v2978, 1.0
        %v2995 = vadd.f32 %v2979, 1.0
        %v2996 = vadd.f32 %v2980, 1.0
        %v2997 = vadd.f32 %v2981, 1.0
        %v2998 = vadd.f32 %v2982, 1.0
        %v2999 = vadd.f32 %v2983, 1.0
        %v3000 = vadd.f32 %v2984, 1.0
        %v3001 = vadd.f32 %v2985, 1.0
        %v3002 = vadd.f32 %v2986, 1.0
        %v3003 = vadd.f32 %v2987, 1.0
        %v3004 = vadd.f32 %v2988, 1.0
        %v3005 = vadd.f32 %v2989, 1.0
        %v3006 = vadd.f32 %v2990, 1.0
        %v3007 = vadd.f32 %v2991, 1.0
        %v3008 = vadd.f32 %v2992, 1.0
        %v3009 = vadd.f32 %v2993, 1.0
        %v3010 = vmul.f32 %v2882, %v2994
        %v3011 = vmul.f32 %v2883, %v2995
        %v3012 = vmul.f32 %v2884, %v2996
        %v3013 = vmul.f32 %v2885, %v2997
        %v3014 = vmul.f32 %v2886, %v2998
        %v3015 = vmul.f32 %v2887, %v2999
        %v3016 = vmul.f32 %v2888, %v3000
        %v3017 = vmul.f32 %v2889, %v3001
        %v3018 = vmul.f32 %v2890, %v3002
        %v3019 = vmul.f32 %v2891, %v3003
        %v3020 = vmul.f32 %v2892, %v3004
        %v3021 = vmul.f32 %v2893, %v3005
        %v3022 = vmul.f32 %v2894, %v3006
        %v3023 = vmul.f32 %v2895, %v3007
        %v3024 = vmul.f32 %v2896, %v3008
        %v3025 = vmul.f32 %v2897, %v3009
        %v3026 = vld [vmem:[%s5] sm:$0xff]
        %v3027 = vld [vmem:[%s5 + $0x8] sm:$0xff]
        %v3028 = vld [vmem:[%s5 + $0x10] sm:$0xff]
        %v3029 = vld [vmem:[%s5 + $0x18] sm:$0xff]
        %v3030 = vld [vmem:[%s6] sm:$0xff]
        %v3031 = vld [vmem:[%s6 + $0x8] sm:$0xff]
        %v3032 = vld [vmem:[%s6 + $0x10] sm:$0xff]
        %v3033 = vld [vmem:[%s6 + $0x18] sm:$0xff]
        %3035 = vset.pattern.permute.xlu0 0
        %3036 = vperm.xlu0 %3035, %v3030
        %v3037 = vpop.permute.xlu0 %3036
        %3040 = vset.pattern.permute.xlu0 0
        %3041 = vperm.xlu0 %3040, %v3031
        %v3042 = vpop.permute.xlu0 %3041
        %3045 = vset.pattern.permute.xlu0 0
        %3046 = vperm.xlu0 %3045, %v3032
        %v3047 = vpop.permute.xlu0 %3046
        %3050 = vset.pattern.permute.xlu0 0
        %3051 = vperm.xlu0 %3050, %v3033
        %v3052 = vpop.permute.xlu0 %3051
        %3054 = vmatpush.msra.mxu0 %v3025
        %3055 = vmatpush.msra.mxu0 %v3024
        %3056 = vmatpush.msra.mxu0 %v3023
        %3057 = vmatpush.msra.mxu0 %v3022
        %3058 = vmatpush.msra.mxu0 %v3021
        %3059 = vmatpush.msra.mxu0 %v3020
        %3060 = vmatpush.msra.mxu0 %v3019
        %3061 = vmatpush.msra.mxu0 %v3018
        %3062 = vmatpush.msra.mxu0 %v3017
        %3063 = vmatpush.msra.mxu0 %v3016
        %3064 = vmatpush.msra.mxu0 %v3015
        %3065 = vmatpush.msra.mxu0 %v3014
        %3066 = vmatpush.msra.mxu0 %v3013
        %3067 = vmatpush.msra.mxu0 %v3012
        %3068 = vmatpush.msra.mxu0 %v3011
        %3069 = vmatpush.msra.mxu0 %v3010
        %3070 = vmatmul.f32.gmra.mxu0 %v3026
        %v3071 = vpop.f32.mrf.mxu0
        %v3072 = vadd.f32 %v3037, %v3071
        %3073 = vmatmul.f32.gmra.mxu0 %v3027
        %v3074 = vpop.f32.mrf.mxu0
        %v3075 = vadd.f32 %v3042, %v3074
        %3076 = vmatmul.f32.gmra.mxu0 %v3028
        %v3077 = vpop.f32.mrf.mxu0
        %v3078 = vadd.f32 %v3047, %v3077
        %3079 = vmatmul.f32.gmra.mxu0 %v3029
        %v3080 = vpop.f32.mrf.mxu0
        %v3081 = vadd.f32 %v3052, %v3080
        %3082 = vdwg.mxu0
        %v3083 = vadd.f32 %v1437, %v3072
        %v3084 = vadd.f32 %v1438, %v3075
        %v3085 = vadd.f32 %v1439, %v3078
        %v3086 = vadd.f32 %v1440, %v3081
        %3087 = vst [vmem:[%s295] sm:$0xff] %v3083
        %3088 = vst [vmem:[%s295 + $0x8] sm:$0xff] %v3084
        %3089 = vst [vmem:[%s295 + $0x10] sm:$0xff] %v3085
        %3090 = vst [vmem:[%s295 + $0x18] sm:$0xff] %v3086
        %s3091 = sand.u32 %s197, 1
        %s3092 = scalar_lea.sflag [#allocation3], %s3091
        %s3093 = sand.u32 %s197, 1
        %s3094 = smul.addr %s3093, 32
        %s3095 = scalar_lea.vmem [#allocation2], %s3094
        // Predicated region
        $region49: #{tpu_custom_call.1} parent=47 // pred_check
          %p3096 = pneg %p207
        $region50: #{tpu_custom_call.1} parent=47 // pred_check_branch
          %3098 = sbr.rel (%p3096) target = $region52
        $region51: #{tpu_custom_call.1} parent=47 // pred_region
          %3100 = vsyncadd %s3092, 0
          %s3101 = smul.addr %s25, 8
          %s3102 = sadd.s32 %s26, %s3101
          %s3103 = smul.addr %s3102, 8
          %s3104 = scalar_lea.hbm %s7, %s3103
          %s3105 = sshll.u32 %s3095, 4
          %s3106 = int_to_ptr.vmem [resolvable:$true] %s3105
          %s3107 = sshll.u32 %s3104, 4
          %s3108 = int_to_ptr.hbm [resolvable:$true] %s3107
          %3113 = dma.vmem_to_hbm [thread:$0]  %s3106, 512, %s3108, %s3092, 128, 256, 8
        $region52: #{tpu_custom_call.1} parent=47 // pred_fallthru
          _
      $region48: #{tpu_custom_call.1} parent=5 // pred_fallthru
        _
      %p3114 = scmp.le.s32.totalorder 2, %s16
      // Predicated region
      $region53: #{tpu_custom_call.1} parent=5 // pred_check
        %p3115 = pneg %p3114
      $region54: #{tpu_custom_call.1} parent=5 // pred_check_branch
        %3117 = sbr.rel (%p3115) target = $region56
      $region55: #{tpu_custom_call.1} parent=5 // pred_region
        %s3118 = ssub.s32 %s16, 2
        // Predicated region
        $region57: #{tpu_custom_call.1} parent=55 // pred_check
          %p3119 = pneg %p213
        $region58: #{tpu_custom_call.1} parent=55 // pred_check_branch
          %3121 = sbr.rel (%p3119) target = $region60
        $region59: #{tpu_custom_call.1} parent=55 // pred_region
          %s3122 = sand.u32 %s198, 1
          %s3123 = scalar_lea.sflag [#allocation3], %s3122
          %s3124 = sand.u32 %s198, 1
          %s3125 = smul.addr %s3124, 32
          %s3126 = scalar_lea.vmem [#allocation2], %s3125
          %3128 = dma.done %s3123, 512
        $region60: #{tpu_custom_call.1} parent=55 // pred_fallthru
          _
      $region56: #{tpu_custom_call.1} parent=5 // pred_fallthru
        _
    $region6: #{tpu_custom_call.1} parent=1 // loop_footer
      %s20 = sadd.s32 1, %s16
    $region7: #{tpu_custom_call.1} parent=1 // loop_footer_branch
      %15 = sbr.rel target = $region3
    $region8: #{tpu_custom_call.1} parent=1 // loop_exit
      _
    %3129 = vsyncpa [#allocation3], 1
    %s3130 = scalar_lea.sflag [#allocation3], 1
    %3131 = vsyncpa %s3130, 1

</llo_original>
